<compile_context>
chip_gen: v7x
topology: tpu7x:2x2x1
jax: 0.10.0
libtpu: 0.0.40
codegen_flags: <defaults>
</compile_context>

<pallas_src>
import functools

import jax
import jax.numpy as jnp
from jax import lax
from jax.experimental import pallas as pl
from jax.experimental.pallas import tpu as pltpu


# ----------------------------------------------------------------------------
# Helpers
# ----------------------------------------------------------------------------
def _round_up(x, m):
    return ((x + m - 1) // m) * m


def _pick_time_block(seq_len, max_block=16):
    """Largest divisor of seq_len that is <= max_block (timesteps per grid step)."""
    t = min(seq_len, max_block)
    while seq_len % t:
        t -= 1
    return t


def _pad_gate_cols(w_t, h, h_pad):
    """Pad the 4H gate axis of a (rows, 4H) matrix per-gate to (rows, 4*h_pad)."""
    rows = w_t.shape[0]
    w4 = w_t.reshape(rows, 4, h)
    w4 = jnp.pad(w4, ((0, 0), (0, 0), (0, h_pad - h)))
    return w4.reshape(rows, 4 * h_pad)


_VMEM_LIMIT = 32 * 1024 * 1024  # explicit scoped-VMEM budget (safe on v5e/v6e/v7x)


# ----------------------------------------------------------------------------
# Pallas kernels
# ----------------------------------------------------------------------------
def _input_proj_kernel(x_ref, w_ref, b_ref, out_ref):
    """Hoisted input projection: gates_in = x @ W_ih^T + (b_ih + b_hh).

    x_ref  : (T, B, I)   bf16 layer input block (time-major)
    w_ref  : (I, 4H)     bf16 pre-transposed input->gate weights
    b_ref  : (1, 4H)     f32 combined bias
    out_ref: (T, B, 4H)  f32 pre-activations
    """
    t, b, i = x_ref.shape
    x2 = x_ref[...].reshape(t * b, i)                       # no-op reshape (B % 16 == 0)
    g = jnp.dot(x2, w_ref[...], preferred_element_type=jnp.float32) + b_ref[...]
    out_ref[...] = g.reshape(t, b, -1)


def _lstm_steps(g_ref, w_hh_ref, h_scr, c_scr, num_steps, out_ref=None):
    """Run `num_steps` recurrence steps on the current (T, B, 4H) gate block.

    Gate order matches PyTorch: [i, f, g, o]. Cell state / nonlinearities in f32;
    the recurrent matmul runs bf16 x bf16 -> f32.
    """
    h_dim = h_scr.shape[-1]

    def step(tt, carry):
        h_prev, c_prev = carry
        gates = g_ref[tt] + jnp.dot(
            h_prev.astype(jnp.bfloat16), w_hh_ref[...],
            preferred_element_type=jnp.float32)             # (B, 4H) f32
        i_g = jax.nn.sigmoid(gates[:, 0 * h_dim:1 * h_dim])
        f_g = jax.nn.sigmoid(gates[:, 1 * h_dim:2 * h_dim])
        g_g = jnp.tanh(gates[:, 2 * h_dim:3 * h_dim])
        o_g = jax.nn.sigmoid(gates[:, 3 * h_dim:4 * h_dim])
        c_new = f_g * c_prev + i_g * g_g
        h_new = o_g * jnp.tanh(c_new)
        if out_ref is not None:
            out_ref[tt] = h_new.astype(out_ref.dtype)
        return h_new, c_new

    h_fin, c_fin = lax.fori_loop(
        0, num_steps, step, (h_scr[...], c_scr[...]), unroll=True)
    h_scr[...] = h_fin
    c_scr[...] = c_fin
    return h_fin


def _lstm_seq_kernel(g_ref, w_hh_ref, out_ref, h_scr, c_scr, *, num_steps):
    """Intermediate LSTM layer: emits the full hidden sequence (bf16)."""
    @pl.when(pl.program_id(0) == 0)
    def _():
        h_scr[...] = jnp.zeros_like(h_scr)
        c_scr[...] = jnp.zeros_like(c_scr)

    _lstm_steps(g_ref, w_hh_ref, h_scr, c_scr, num_steps, out_ref=out_ref)


def _lstm_last_fc_kernel(g_ref, w_hh_ref, fc_w_ref, fc_b_ref, out_ref,
                         h_scr, c_scr, *, num_steps):
    """Last LSTM layer fused with the FC head: only h at t == S-1 is consumed."""
    @pl.when(pl.program_id(0) == 0)
    def _():
        h_scr[...] = jnp.zeros_like(h_scr)
        c_scr[...] = jnp.zeros_like(c_scr)

    h_fin = _lstm_steps(g_ref, w_hh_ref, h_scr, c_scr, num_steps, out_ref=None)

    @pl.when(pl.program_id(0) == pl.num_programs(0) - 1)
    def _():
        # dropout(out[:, -1, :]) is identity in eval mode; fuse fc directly.
        out_ref[...] = (
            jnp.dot(h_fin.astype(jnp.bfloat16), fc_w_ref[...],
                    preferred_element_type=jnp.float32)
            + fc_b_ref[...]
        )


# ----------------------------------------------------------------------------
# pallas_call wrappers
# ----------------------------------------------------------------------------
def _run_input_proj(x_tm, w_ih_t, b):
    """x_tm: (S, B, I) bf16; w_ih_t: (I, 4H) bf16; b: (1, 4H) f32 -> (S, B, 4H) f32."""
    s, bsz, i = x_tm.shape
    g = w_ih_t.shape[1]
    t = _pick_time_block(s)
    return pl.pallas_call(
        _input_proj_kernel,
        out_shape=jax.ShapeDtypeStruct((s, bsz, g), jnp.float32),
        grid_spec=pltpu.PrefetchScalarGridSpec(
            num_scalar_prefetch=0,
            grid=(s // t,),
            in_specs=[
                pl.BlockSpec((t, bsz, i), lambda n: (n, 0, 0)),
                # Grid-invariant weight/bias blocks (constant index map -> no re-DMA).
                pl.BlockSpec((i, g), lambda n: (0, 0)),
                pl.BlockSpec((1, g), lambda n: (0, 0)),
            ],
            out_specs=pl.BlockSpec((t, bsz, g), lambda n: (n, 0, 0)),
        ),
        compiler_params=pltpu.CompilerParams(
            dimension_semantics=("parallel",),
            vmem_limit_bytes=_VMEM_LIMIT,
        ),
    )(x_tm, w_ih_t, b)


def _run_lstm_seq(gates_in, w_hh_t):
    """gates_in: (S, B, 4H) f32; w_hh_t: (H, 4H) bf16 -> (S, B, H) bf16 hidden seq."""
    s, bsz, g = gates_in.shape
    h = g // 4
    t = _pick_time_block(s)
    return pl.pallas_call(
        functools.partial(_lstm_seq_kernel, num_steps=t),
        out_shape=jax.ShapeDtypeStruct((s, bsz, h), jnp.bfloat16),
        grid_spec=pltpu.PrefetchScalarGridSpec(
            num_scalar_prefetch=0,
            grid=(s // t,),
            in_specs=[
                pl.BlockSpec((t, bsz, g), lambda n: (n, 0, 0)),
                # W_hh is grid-invariant; for very large H on v7x it could additionally
                # be single-buffered (pipeline_mode=pl.Buffered(1)) to halve its VMEM.
                pl.BlockSpec((h, g), lambda n: (0, 0)),
            ],
            out_specs=pl.BlockSpec((t, bsz, h), lambda n: (n, 0, 0)),
            scratch_shapes=[
                pltpu.VMEM((bsz, h), jnp.float32),   # h carry
                pltpu.VMEM((bsz, h), jnp.float32),   # c carry
            ],
        ),
        compiler_params=pltpu.CompilerParams(
            dimension_semantics=("arbitrary",),      # time is a carried recurrence
            vmem_limit_bytes=_VMEM_LIMIT,
        ),
    )(gates_in, w_hh_t)


def _run_lstm_last_fc(gates_in, w_hh_t, fc_w_t, fc_b):
    """Last layer + fused FC. Returns (B, O) f32."""
    s, bsz, g = gates_in.shape
    h = g // 4
    o = fc_w_t.shape[1]
    t = _pick_time_block(s)
    return pl.pallas_call(
        functools.partial(_lstm_last_fc_kernel, num_steps=t),
        out_shape=jax.ShapeDtypeStruct((bsz, o), jnp.float32),
        grid_spec=pltpu.PrefetchScalarGridSpec(
            num_scalar_prefetch=0,
            grid=(s // t,),
            in_specs=[
                pl.BlockSpec((t, bsz, g), lambda n: (n, 0, 0)),
                pl.BlockSpec((h, g), lambda n: (0, 0)),
                pl.BlockSpec((h, o), lambda n: (0, 0)),
                pl.BlockSpec((1, o), lambda n: (0, 0)),
            ],
            # Output block index never changes; it is written only on the last step.
            out_specs=pl.BlockSpec((bsz, o), lambda n: (0, 0)),
            scratch_shapes=[
                pltpu.VMEM((bsz, h), jnp.float32),
                pltpu.VMEM((bsz, h), jnp.float32),
            ],
        ),
        compiler_params=pltpu.CompilerParams(
            dimension_semantics=("arbitrary",),
            vmem_limit_bytes=_VMEM_LIMIT,
        ),
    )(gates_in, w_hh_t, fc_w_t, fc_b)


# ----------------------------------------------------------------------------
# Parameters (PyTorch-shaped) and forward wrapper
# ----------------------------------------------------------------------------
def init_deep_lstm_params(key, input_size, hidden_size, num_layers, output_size):
    """Mirror PyTorch shapes + default U(-1/sqrt(H), 1/sqrt(H)) init."""
    bound = 1.0 / jnp.sqrt(jnp.float32(hidden_size))
    params = {"lstm": []}
    for layer in range(num_layers):
        in_k = input_size if layer == 0 else hidden_size
        key, k1, k2, k3, k4 = jax.random.split(key, 5)
        w_ih = jax.random.uniform(k1, (4 * hidden_size, in_k), jnp.float32, -bound, bound)
        w_hh = jax.random.uniform(k2, (4 * hidden_size, hidden_size), jnp.float32, -bound, bound)
        b_ih = jax.random.uniform(k3, (4 * hidden_size,), jnp.float32, -bound, bound)
        b_hh = jax.random.uniform(k4, (4 * hidden_size,), jnp.float32, -bound, bound)
        params["lstm"].append((w_ih, w_hh, b_ih, b_hh))
    key, k5, k6 = jax.random.split(key, 3)
    params["fc_w"] = jax.random.uniform(k5, (output_size, hidden_size), jnp.float32, -bound, bound)
    params["fc_b"] = jax.random.uniform(k6, (output_size,), jnp.float32, -bound, bound)
    return params


@jax.jit
def deep_lstm_forward(x, params):
    """x: (batch, seq, input_size) f32, batch_first like the PyTorch module.

    h0/c0 are zeros. Dropout (both the inter-layer nn.LSTM dropout and self.dropout)
    is eval-mode identity.
    """
    bsz, _, _ = x.shape
    hidden = params["fc_w"].shape[1]
    h_pad = _round_up(hidden, 128)        # lane-align gate slices / hidden stores
    b_pad = _round_up(bsz, 16)            # bf16 sublane-align batch rows
    num_layers = len(params["lstm"])

    # Glue: batch-first -> time-major, zero-pad batch (padded rows discarded at end).
    x_tm = jnp.transpose(x, (1, 0, 2)).astype(jnp.float32)          # (S, B, I)
    x_tm = jnp.pad(x_tm, ((0, 0), (0, b_pad - bsz), (0, 0)))

    seq = x_tm.astype(jnp.bfloat16)                                 # layer input
    out = None
    for li, (w_ih, w_hh, b_ih, b_hh) in enumerate(params["lstm"]):
        in_l = w_ih.shape[1]
        # PyTorch computes x @ W_ih^T; pre-transpose and pad gate columns per-gate.
        w_ih_t = _pad_gate_cols(jnp.transpose(w_ih), hidden, h_pad)   # (in_l, 4*H_pad)
        if li > 0:  # input is the previous (padded) hidden state -> pad contraction rows
            w_ih_t = jnp.pad(w_ih_t, ((0, h_pad - in_l), (0, 0)))
        w_hh_t = _pad_gate_cols(jnp.transpose(w_hh), hidden, h_pad)   # (H, 4*H_pad)
        w_hh_t = jnp.pad(w_hh_t, ((0, h_pad - hidden), (0, 0)))       # (H_pad, 4*H_pad)
        bias = _pad_gate_cols((b_ih + b_hh).reshape(1, -1), hidden, h_pad)  # (1, 4*H_pad)

        # Hoisted input projection: one big GEMM over all S*B rows.
        gates_in = _run_input_proj(seq, w_ih_t.astype(jnp.bfloat16),
                                   bias.astype(jnp.float32))          # (S, B_pad, 4*H_pad) f32
        w_hh_bf = w_hh_t.astype(jnp.bfloat16)

        if li < num_layers - 1:
            seq = _run_lstm_seq(gates_in, w_hh_bf)                    # (S, B_pad, H_pad) bf16
            # TODO(synk): inter-layer nn.LSTM dropout is train-only; identity in eval.
        else:
            fc_w_t = jnp.pad(jnp.transpose(params["fc_w"]),
                             ((0, h_pad - hidden), (0, 0))).astype(jnp.bfloat16)  # (H_pad, O)
            fc_b = params["fc_b"].reshape(1, -1).astype(jnp.float32)              # (1, O)
            out = _run_lstm_last_fc(gates_in, w_hh_bf, fc_w_t, fc_b)              # (B_pad, O)

    return out[:bsz]


# ----------------------------------------------------------------------------
# Pure-JAX reference (f32) for a correctness check
# ----------------------------------------------------------------------------
def _reference_forward(x, params):
    bsz, seq_len, _ = x.shape
    hidden = params["fc_w"].shape[1]
    seq = x.astype(jnp.float32)
    for (w_ih, w_hh, b_ih, b_hh) in params["lstm"]:
        h = jnp.zeros((bsz, hidden), jnp.float32)
        c = jnp.zeros((bsz, hidden), jnp.float32)
        outs = []
        for t in range(seq_len):
            g = seq[:, t, :] @ w_ih.T + b_ih + h @ w_hh.T + b_hh
            i_g = jax.nn.sigmoid(g[:, 0 * hidden:1 * hidden])
            f_g = jax.nn.sigmoid(g[:, 1 * hidden:2 * hidden])
            g_g = jnp.tanh(g[:, 2 * hidden:3 * hidden])
            o_g = jax.nn.sigmoid(g[:, 3 * hidden:4 * hidden])
            c = f_g * c + i_g * g_g
            h = o_g * jnp.tanh(c)
            outs.append(h)
        seq = jnp.stack(outs, axis=1)
    return seq[:, -1, :] @ params["fc_w"].T + params["fc_b"]


# ----------------------------------------------------------------------------
# Demo
# ----------------------------------------------------------------------------
if __name__ == "__main__":
    INPUT_SIZE = 8
    HIDDEN_SIZE = 32
    NUM_LAYERS = 2
    OUTPUT_SIZE = 4
    BATCH = 2
    SEQ = 8

    key = jax.random.PRNGKey(0)
    key, xkey = jax.random.split(key)
    x = jax.random.normal(xkey, (BATCH, SEQ, INPUT_SIZE), dtype=jnp.float32)
    params = init_deep_lstm_params(key, INPUT_SIZE, HIDDEN_SIZE, NUM_LAYERS, OUTPUT_SIZE)

    out = deep_lstm_forward(x, params)
    jax.block_until_ready(out)
    assert out.shape == (BATCH, OUTPUT_SIZE)

    ref = _reference_forward(x, params)
    max_err = float(jnp.max(jnp.abs(out - ref)))
    assert max_err < 5e-2, f"max abs error vs reference too large: {max_err}"

    print("KERNEL_OK")
</pallas_src>

<mosaic_0001>
module attributes {stable_mosaic.version = 11 : i64} {
  func.func @_input_proj_kernel(%arg0: i32, %arg1: memref<8x16x8xbf16, #tpu.memory_space<vmem>>, %arg2: memref<8x512xbf16, #tpu.memory_space<vmem>>, %arg3: memref<1x512xf32, #tpu.memory_space<vmem>>, %arg4: memref<8x16x512xf32, #tpu.memory_space<vmem>>) attributes {dimension_semantics = [#tpu.dimension_semantics<parallel>], iteration_bounds = array<i64: 1>, scalar_prefetch = 0 : i64, scratch_operands = 0 : i64, tpu.core_type = #tpu.core_type<tc>, window_params = [{transform_indices = @transform_0, window_bounds = array<i64: 8, 16, 8>}, {pipeline_mode = #tpu.pipeline_mode<synchronous>, transform_indices = @transform_1, window_bounds = array<i64: 8, 512>}, {pipeline_mode = #tpu.pipeline_mode<synchronous>, transform_indices = @transform_2, window_bounds = array<i64: 1, 512>}, {transform_indices = @transform_3, window_bounds = array<i64: 8, 16, 512>}]} {
    %c0 = arith.constant 0 : index
    %c0_0 = arith.constant 0 : index
    %c0_1 = arith.constant 0 : index
    %0 = vector.load %arg1[%c0, %c0_0, %c0_1] : memref<8x16x8xbf16, #tpu.memory_space<vmem>>, vector<8x16x8xbf16>
    %1 = vector.shape_cast %0 : vector<8x16x8xbf16> to vector<128x8xbf16>
    %c0_2 = arith.constant 0 : index
    %c0_3 = arith.constant 0 : index
    %2 = vector.load %arg2[%c0_2, %c0_3] : memref<8x512xbf16, #tpu.memory_space<vmem>>, vector<8x512xbf16>
    %cst = arith.constant dense<0.000000e+00> : vector<128x512xf32>
    %3 = tpu.matmul %1, %2, %cst {dimension_numbers = #tpu.dot_dimension_numbers<[1], [0], [0], [1], [0, 0, 1, 1], [], []>} : vector<128x8xbf16>, vector<8x512xbf16>, vector<128x512xf32> -> vector<128x512xf32>
    %c0_4 = arith.constant 0 : index
    %c0_5 = arith.constant 0 : index
    %4 = vector.load %arg3[%c0_4, %c0_5] : memref<1x512xf32, #tpu.memory_space<vmem>>, vector<1x512xf32>
    %5 = vector.broadcast %4 : vector<1x512xf32> to vector<128x512xf32>
    %6 = arith.addf %3, %5 : vector<128x512xf32>
    %7 = vector.shape_cast %6 : vector<128x512xf32> to vector<8x16x512xf32>
    %c0_6 = arith.constant 0 : index
    %c0_7 = arith.constant 0 : index
    %c0_8 = arith.constant 0 : index
    %8 = vector.load %arg4[%c0_6, %c0_7, %c0_8] : memref<8x16x512xf32, #tpu.memory_space<vmem>>, vector<8x16x512xf32>
    tpu.vector_store %arg4[%c0_6, %c0_7, %c0_8], %7 {strides = array<i32>} : memref<8x16x512xf32, #tpu.memory_space<vmem>>, vector<8x16x512xf32>,
    return
  }
  func.func @transform_0(%arg0: i32) -> (i32, i32, i32) {
    %c0_i32 = arith.constant 0 : i32
    %c0_i32_0 = arith.constant 0 : i32
    %c0_i32_1 = arith.constant 0 : i32
    return %arg0, %c0_i32, %c0_i32_0 : i32, i32, i32
  }
  func.func @transform_1(%arg0: i32) -> (i32, i32) {
    %c0_i32 = arith.constant 0 : i32
    %c0_i32_0 = arith.constant 0 : i32
    %c0_i32_1 = arith.constant 0 : i32
    return %c0_i32, %c0_i32_0 : i32, i32
  }
  func.func @transform_2(%arg0: i32) -> (i32, i32) {
    %c0_i32 = arith.constant 0 : i32
    %c0_i32_0 = arith.constant 0 : i32
    %c0_i32_1 = arith.constant 0 : i32
    return %c0_i32, %c0_i32_0 : i32, i32
  }
  func.func @transform_3(%arg0: i32) -> (i32, i32, i32) {
    %c0_i32 = arith.constant 0 : i32
    %c0_i32_0 = arith.constant 0 : i32
    %c0_i32_1 = arith.constant 0 : i32
    return %arg0, %c0_i32, %c0_i32_0 : i32, i32, i32
  }
}

module attributes {stable_mosaic.version = 11 : i64} {
  func.func @_lstm_seq_kernel(%arg0: i32, %arg1: memref<8x16x512xf32, #tpu.memory_space<vmem>>, %arg2: memref<128x512xbf16, #tpu.memory_space<vmem>>, %arg3: memref<8x16x128xbf16, #tpu.memory_space<vmem>>, %arg4: memref<16x128xf32, #tpu.memory_space<vmem>>, %arg5: memref<16x128xf32, #tpu.memory_space<vmem>>) attributes {dimension_semantics = [#tpu.dimension_semantics<arbitrary>], iteration_bounds = array<i64: 1>, scalar_prefetch = 0 : i64, scratch_operands = 2 : i64, tpu.core_type = #tpu.core_type<tc>, window_params = [{transform_indices = @transform_0, window_bounds = array<i64: 8, 16, 512>}, {pipeline_mode = #tpu.pipeline_mode<synchronous>, transform_indices = @transform_1, window_bounds = array<i64: 128, 512>}, {transform_indices = @transform_2, window_bounds = array<i64: 8, 16, 128>}]} {
    %c0_i32 = arith.constant 0 : i32
    %0 = arith.cmpi eq, %arg0, %c0_i32 : i32
    %1 = arith.extui %0 : i1 to i32
    %c0_i32_0 = arith.constant 0 : i32
    %2 = arith.cmpi ne, %1, %c0_i32_0 : i32
    scf.if %2 {
      %cst_88 = arith.constant 0.000000e+00 : f32
      %303 = vector.broadcast %cst_88 : f32 to vector<16x128xf32>
      %c0_89 = arith.constant 0 : index
      %c0_90 = arith.constant 0 : index
      %304 = vector.load %arg4[%c0_89, %c0_90] : memref<16x128xf32, #tpu.memory_space<vmem>>, vector<16x128xf32>
      tpu.vector_store %arg4[%c0_89, %c0_90], %303 {strides = array<i32>} : memref<16x128xf32, #tpu.memory_space<vmem>>, vector<16x128xf32>,
      %cst_91 = arith.constant 0.000000e+00 : f32
      %305 = vector.broadcast %cst_91 : f32 to vector<16x128xf32>
      %c0_92 = arith.constant 0 : index
      %c0_93 = arith.constant 0 : index
      %306 = vector.load %arg5[%c0_92, %c0_93] : memref<16x128xf32, #tpu.memory_space<vmem>>, vector<16x128xf32>
      tpu.vector_store %arg5[%c0_92, %c0_93], %305 {strides = array<i32>} : memref<16x128xf32, #tpu.memory_space<vmem>>, vector<16x128xf32>,
    } else {
    }
    %c0 = arith.constant 0 : index
    %c0_1 = arith.constant 0 : index
    %3 = vector.load %arg4[%c0, %c0_1] : memref<16x128xf32, #tpu.memory_space<vmem>>, vector<16x128xf32>
    %c0_2 = arith.constant 0 : index
    %c0_3 = arith.constant 0 : index
    %4 = vector.load %arg5[%c0_2, %c0_3] : memref<16x128xf32, #tpu.memory_space<vmem>>, vector<16x128xf32>
    %c0_i32_4 = arith.constant 0 : i32
    %5 = arith.index_cast %c0_i32_4 : i32 to index
    %c0_5 = arith.constant 0 : index
    %c0_6 = arith.constant 0 : index
    %6 = vector.load %arg1[%5, %c0_5, %c0_6] : memref<8x16x512xf32, #tpu.memory_space<vmem>>, vector<1x16x512xf32>
    %7 = vector.shape_cast %6 : vector<1x16x512xf32> to vector<16x512xf32>
    %8 = arith.truncf %3 : vector<16x128xf32> to vector<16x128xbf16>
    %c0_7 = arith.constant 0 : index
    %c0_8 = arith.constant 0 : index
    %9 = vector.load %arg2[%c0_7, %c0_8] : memref<128x512xbf16, #tpu.memory_space<vmem>>, vector<128x512xbf16>
    %cst = arith.constant dense<0.000000e+00> : vector<16x512xf32>
    %10 = tpu.matmul %8, %9, %cst {dimension_numbers = #tpu.dot_dimension_numbers<[1], [0], [0], [1], [0, 0, 1, 1], [], []>} : vector<16x128xbf16>, vector<128x512xbf16>, vector<16x512xf32> -> vector<16x512xf32>
    %11 = arith.addf %7, %10 : vector<16x512xf32>
    %12 = vector.extract_strided_slice %11 {offsets = [0, 0], sizes = [16, 128], strides = [1, 1]} : vector<16x512xf32> to vector<16x128xf32>
    %13 = arith.negf %12 : vector<16x128xf32>
    %14 = math.exp %13 : vector<16x128xf32>
    %cst_9 = arith.constant 1.000000e+00 : f32
    %15 = vector.broadcast %cst_9 : f32 to vector<16x128xf32>
    %16 = arith.addf %15, %14 : vector<16x128xf32>
    %17 = arith.divf %15, %16 : vector<16x128xf32>
    %18 = vector.extract_strided_slice %11 {offsets = [0, 128], sizes = [16, 128], strides = [1, 1]} : vector<16x512xf32> to vector<16x128xf32>
    %19 = arith.negf %18 : vector<16x128xf32>
    %20 = math.exp %19 : vector<16x128xf32>
    %cst_10 = arith.constant 1.000000e+00 : f32
    %21 = vector.broadcast %cst_10 : f32 to vector<16x128xf32>
    %22 = arith.addf %21, %20 : vector<16x128xf32>
    %23 = arith.divf %21, %22 : vector<16x128xf32>
    %24 = vector.extract_strided_slice %11 {offsets = [0, 256], sizes = [16, 128], strides = [1, 1]} : vector<16x512xf32> to vector<16x128xf32>
    %25 = math.tanh %24 : vector<16x128xf32>
    %26 = vector.extract_strided_slice %11 {offsets = [0, 384], sizes = [16, 128], strides = [1, 1]} : vector<16x512xf32> to vector<16x128xf32>
    %27 = arith.negf %26 : vector<16x128xf32>
    %28 = math.exp %27 : vector<16x128xf32>
    %cst_11 = arith.constant 1.000000e+00 : f32
    %29 = vector.broadcast %cst_11 : f32 to vector<16x128xf32>
    %30 = arith.addf %29, %28 : vector<16x128xf32>
    %31 = arith.divf %29, %30 : vector<16x128xf32>
    %32 = arith.mulf %23, %4 : vector<16x128xf32>
    %33 = arith.mulf %17, %25 : vector<16x128xf32>
    %34 = arith.addf %32, %33 : vector<16x128xf32>
    %35 = math.tanh %34 : vector<16x128xf32>
    %36 = arith.mulf %31, %35 : vector<16x128xf32>
    %37 = arith.truncf %36 : vector<16x128xf32> to vector<16x128xbf16>
    %38 = arith.index_cast %c0_i32_4 : i32 to index
    %c0_12 = arith.constant 0 : index
    %c0_13 = arith.constant 0 : index
    %39 = vector.load %arg3[%38, %c0_12, %c0_13] : memref<8x16x128xbf16, #tpu.memory_space<vmem>>, vector<1x16x128xbf16>
    %40 = vector.shape_cast %39 : vector<1x16x128xbf16> to vector<16x128xbf16>
    %41 = vector.shape_cast %37 : vector<16x128xbf16> to vector<1x16x128xbf16>
    tpu.vector_store %arg3[%38, %c0_12, %c0_13], %41 {strides = array<i32>} : memref<8x16x128xbf16, #tpu.memory_space<vmem>>, vector<1x16x128xbf16>,
    %c1_i32 = arith.constant 1 : i32
    %42 = arith.index_cast %c1_i32 : i32 to index
    %c0_14 = arith.constant 0 : index
    %c0_15 = arith.constant 0 : index
    %43 = vector.load %arg1[%42, %c0_14, %c0_15] : memref<8x16x512xf32, #tpu.memory_space<vmem>>, vector<1x16x512xf32>
    %44 = vector.shape_cast %43 : vector<1x16x512xf32> to vector<16x512xf32>
    %45 = arith.truncf %36 : vector<16x128xf32> to vector<16x128xbf16>
    %c0_16 = arith.constant 0 : index
    %c0_17 = arith.constant 0 : index
    %46 = vector.load %arg2[%c0_16, %c0_17] : memref<128x512xbf16, #tpu.memory_space<vmem>>, vector<128x512xbf16>
    %cst_18 = arith.constant dense<0.000000e+00> : vector<16x512xf32>
    %47 = tpu.matmul %45, %46, %cst_18 {dimension_numbers = #tpu.dot_dimension_numbers<[1], [0], [0], [1], [0, 0, 1, 1], [], []>} : vector<16x128xbf16>, vector<128x512xbf16>, vector<16x512xf32> -> vector<16x512xf32>
    %48 = arith.addf %44, %47 : vector<16x512xf32>
    %49 = vector.extract_strided_slice %48 {offsets = [0, 0], sizes = [16, 128], strides = [1, 1]} : vector<16x512xf32> to vector<16x128xf32>
    %50 = arith.negf %49 : vector<16x128xf32>
    %51 = math.exp %50 : vector<16x128xf32>
    %cst_19 = arith.constant 1.000000e+00 : f32
    %52 = vector.broadcast %cst_19 : f32 to vector<16x128xf32>
    %53 = arith.addf %52, %51 : vector<16x128xf32>
    %54 = arith.divf %52, %53 : vector<16x128xf32>
    %55 = vector.extract_strided_slice %48 {offsets = [0, 128], sizes = [16, 128], strides = [1, 1]} : vector<16x512xf32> to vector<16x128xf32>
    %56 = arith.negf %55 : vector<16x128xf32>
    %57 = math.exp %56 : vector<16x128xf32>
    %cst_20 = arith.constant 1.000000e+00 : f32
    %58 = vector.broadcast %cst_20 : f32 to vector<16x128xf32>
    %59 = arith.addf %58, %57 : vector<16x128xf32>
    %60 = arith.divf %58, %59 : vector<16x128xf32>
    %61 = vector.extract_strided_slice %48 {offsets = [0, 256], sizes = [16, 128], strides = [1, 1]} : vector<16x512xf32> to vector<16x128xf32>
    %62 = math.tanh %61 : vector<16x128xf32>
    %63 = vector.extract_strided_slice %48 {offsets = [0, 384], sizes = [16, 128], strides = [1, 1]} : vector<16x512xf32> to vector<16x128xf32>
    %64 = arith.negf %63 : vector<16x128xf32>
    %65 = math.exp %64 : vector<16x128xf32>
    %cst_21 = arith.constant 1.000000e+00 : f32
    %66 = vector.broadcast %cst_21 : f32 to vector<16x128xf32>
    %67 = arith.addf %66, %65 : vector<16x128xf32>
    %68 = arith.divf %66, %67 : vector<16x128xf32>
    %69 = arith.mulf %60, %34 : vector<16x128xf32>
    %70 = arith.mulf %54, %62 : vector<16x128xf32>
    %71 = arith.addf %69, %70 : vector<16x128xf32>
    %72 = math.tanh %71 : vector<16x128xf32>
    %73 = arith.mulf %68, %72 : vector<16x128xf32>
    %74 = arith.truncf %73 : vector<16x128xf32> to vector<16x128xbf16>
    %75 = arith.index_cast %c1_i32 : i32 to index
    %c0_22 = arith.constant 0 : index
    %c0_23 = arith.constant 0 : index
    %76 = vector.load %arg3[%75, %c0_22, %c0_23] : memref<8x16x128xbf16, #tpu.memory_space<vmem>>, vector<1x16x128xbf16>
    %77 = vector.shape_cast %76 : vector<1x16x128xbf16> to vector<16x128xbf16>
    %78 = vector.shape_cast %74 : vector<16x128xbf16> to vector<1x16x128xbf16>
    tpu.vector_store %arg3[%75, %c0_22, %c0_23], %78 {strides = array<i32>} : memref<8x16x128xbf16, #tpu.memory_space<vmem>>, vector<1x16x128xbf16>,
    %c2_i32 = arith.constant 2 : i32
    %79 = arith.index_cast %c2_i32 : i32 to index
    %c0_24 = arith.constant 0 : index
    %c0_25 = arith.constant 0 : index
    %80 = vector.load %arg1[%79, %c0_24, %c0_25] : memref<8x16x512xf32, #tpu.memory_space<vmem>>, vector<1x16x512xf32>
    %81 = vector.shape_cast %80 : vector<1x16x512xf32> to vector<16x512xf32>
    %82 = arith.truncf %73 : vector<16x128xf32> to vector<16x128xbf16>
    %c0_26 = arith.constant 0 : index
    %c0_27 = arith.constant 0 : index
    %83 = vector.load %arg2[%c0_26, %c0_27] : memref<128x512xbf16, #tpu.memory_space<vmem>>, vector<128x512xbf16>
    %cst_28 = arith.constant dense<0.000000e+00> : vector<16x512xf32>
    %84 = tpu.matmul %82, %83, %cst_28 {dimension_numbers = #tpu.dot_dimension_numbers<[1], [0], [0], [1], [0, 0, 1, 1], [], []>} : vector<16x128xbf16>, vector<128x512xbf16>, vector<16x512xf32> -> vector<16x512xf32>
    %85 = arith.addf %81, %84 : vector<16x512xf32>
    %86 = vector.extract_strided_slice %85 {offsets = [0, 0], sizes = [16, 128], strides = [1, 1]} : vector<16x512xf32> to vector<16x128xf32>
    %87 = arith.negf %86 : vector<16x128xf32>
    %88 = math.exp %87 : vector<16x128xf32>
    %cst_29 = arith.constant 1.000000e+00 : f32
    %89 = vector.broadcast %cst_29 : f32 to vector<16x128xf32>
    %90 = arith.addf %89, %88 : vector<16x128xf32>
    %91 = arith.divf %89, %90 : vector<16x128xf32>
    %92 = vector.extract_strided_slice %85 {offsets = [0, 128], sizes = [16, 128], strides = [1, 1]} : vector<16x512xf32> to vector<16x128xf32>
    %93 = arith.negf %92 : vector<16x128xf32>
    %94 = math.exp %93 : vector<16x128xf32>
    %cst_30 = arith.constant 1.000000e+00 : f32
    %95 = vector.broadcast %cst_30 : f32 to vector<16x128xf32>
    %96 = arith.addf %95, %94 : vector<16x128xf32>
    %97 = arith.divf %95, %96 : vector<16x128xf32>
    %98 = vector.extract_strided_slice %85 {offsets = [0, 256], sizes = [16, 128], strides = [1, 1]} : vector<16x512xf32> to vector<16x128xf32>
    %99 = math.tanh %98 : vector<16x128xf32>
    %100 = vector.extract_strided_slice %85 {offsets = [0, 384], sizes = [16, 128], strides = [1, 1]} : vector<16x512xf32> to vector<16x128xf32>
    %101 = arith.negf %100 : vector<16x128xf32>
    %102 = math.exp %101 : vector<16x128xf32>
    %cst_31 = arith.constant 1.000000e+00 : f32
    %103 = vector.broadcast %cst_31 : f32 to vector<16x128xf32>
    %104 = arith.addf %103, %102 : vector<16x128xf32>
    %105 = arith.divf %103, %104 : vector<16x128xf32>
    %106 = arith.mulf %97, %71 : vector<16x128xf32>
    %107 = arith.mulf %91, %99 : vector<16x128xf32>
    %108 = arith.addf %106, %107 : vector<16x128xf32>
    %109 = math.tanh %108 : vector<16x128xf32>
    %110 = arith.mulf %105, %109 : vector<16x128xf32>
    %111 = arith.truncf %110 : vector<16x128xf32> to vector<16x128xbf16>
    %112 = arith.index_cast %c2_i32 : i32 to index
    %c0_32 = arith.constant 0 : index
    %c0_33 = arith.constant 0 : index
    %113 = vector.load %arg3[%112, %c0_32, %c0_33] : memref<8x16x128xbf16, #tpu.memory_space<vmem>>, vector<1x16x128xbf16>
    %114 = vector.shape_cast %113 : vector<1x16x128xbf16> to vector<16x128xbf16>
    %115 = vector.shape_cast %111 : vector<16x128xbf16> to vector<1x16x128xbf16>
    tpu.vector_store %arg3[%112, %c0_32, %c0_33], %115 {strides = array<i32>} : memref<8x16x128xbf16, #tpu.memory_space<vmem>>, vector<1x16x128xbf16>,
    %c3_i32 = arith.constant 3 : i32
    %116 = arith.index_cast %c3_i32 : i32 to index
    %c0_34 = arith.constant 0 : index
    %c0_35 = arith.constant 0 : index
    %117 = vector.load %arg1[%116, %c0_34, %c0_35] : memref<8x16x512xf32, #tpu.memory_space<vmem>>, vector<1x16x512xf32>
    %118 = vector.shape_cast %117 : vector<1x16x512xf32> to vector<16x512xf32>
    %119 = arith.truncf %110 : vector<16x128xf32> to vector<16x128xbf16>
    %c0_36 = arith.constant 0 : index
    %c0_37 = arith.constant 0 : index
    %120 = vector.load %arg2[%c0_36, %c0_37] : memref<128x512xbf16, #tpu.memory_space<vmem>>, vector<128x512xbf16>
    %cst_38 = arith.constant dense<0.000000e+00> : vector<16x512xf32>
    %121 = tpu.matmul %119, %120, %cst_38 {dimension_numbers = #tpu.dot_dimension_numbers<[1], [0], [0], [1], [0, 0, 1, 1], [], []>} : vector<16x128xbf16>, vector<128x512xbf16>, vector<16x512xf32> -> vector<16x512xf32>
    %122 = arith.addf %118, %121 : vector<16x512xf32>
    %123 = vector.extract_strided_slice %122 {offsets = [0, 0], sizes = [16, 128], strides = [1, 1]} : vector<16x512xf32> to vector<16x128xf32>
    %124 = arith.negf %123 : vector<16x128xf32>
    %125 = math.exp %124 : vector<16x128xf32>
    %cst_39 = arith.constant 1.000000e+00 : f32
    %126 = vector.broadcast %cst_39 : f32 to vector<16x128xf32>
    %127 = arith.addf %126, %125 : vector<16x128xf32>
    %128 = arith.divf %126, %127 : vector<16x128xf32>
    %129 = vector.extract_strided_slice %122 {offsets = [0, 128], sizes = [16, 128], strides = [1, 1]} : vector<16x512xf32> to vector<16x128xf32>
    %130 = arith.negf %129 : vector<16x128xf32>
    %131 = math.exp %130 : vector<16x128xf32>
    %cst_40 = arith.constant 1.000000e+00 : f32
    %132 = vector.broadcast %cst_40 : f32 to vector<16x128xf32>
    %133 = arith.addf %132, %131 : vector<16x128xf32>
    %134 = arith.divf %132, %133 : vector<16x128xf32>
    %135 = vector.extract_strided_slice %122 {offsets = [0, 256], sizes = [16, 128], strides = [1, 1]} : vector<16x512xf32> to vector<16x128xf32>
    %136 = math.tanh %135 : vector<16x128xf32>
    %137 = vector.extract_strided_slice %122 {offsets = [0, 384], sizes = [16, 128], strides = [1, 1]} : vector<16x512xf32> to vector<16x128xf32>
    %138 = arith.negf %137 : vector<16x128xf32>
    %139 = math.exp %138 : vector<16x128xf32>
    %cst_41 = arith.constant 1.000000e+00 : f32
    %140 = vector.broadcast %cst_41 : f32 to vector<16x128xf32>
    %141 = arith.addf %140, %139 : vector<16x128xf32>
    %142 = arith.divf %140, %141 : vector<16x128xf32>
    %143 = arith.mulf %134, %108 : vector<16x128xf32>
    %144 = arith.mulf %128, %136 : vector<16x128xf32>
    %145 = arith.addf %143, %144 : vector<16x128xf32>
    %146 = math.tanh %145 : vector<16x128xf32>
    %147 = arith.mulf %142, %146 : vector<16x128xf32>
    %148 = arith.truncf %147 : vector<16x128xf32> to vector<16x128xbf16>
    %149 = arith.index_cast %c3_i32 : i32 to index
    %c0_42 = arith.constant 0 : index
    %c0_43 = arith.constant 0 : index
    %150 = vector.load %arg3[%149, %c0_42, %c0_43] : memref<8x16x128xbf16, #tpu.memory_space<vmem>>, vector<1x16x128xbf16>
    %151 = vector.shape_cast %150 : vector<1x16x128xbf16> to vector<16x128xbf16>
    %152 = vector.shape_cast %148 : vector<16x128xbf16> to vector<1x16x128xbf16>
    tpu.vector_store %arg3[%149, %c0_42, %c0_43], %152 {strides = array<i32>} : memref<8x16x128xbf16, #tpu.memory_space<vmem>>, vector<1x16x128xbf16>,
    %c4_i32 = arith.constant 4 : i32
    %153 = arith.index_cast %c4_i32 : i32 to index
    %c0_44 = arith.constant 0 : index
    %c0_45 = arith.constant 0 : index
    %154 = vector.load %arg1[%153, %c0_44, %c0_45] : memref<8x16x512xf32, #tpu.memory_space<vmem>>, vector<1x16x512xf32>
    %155 = vector.shape_cast %154 : vector<1x16x512xf32> to vector<16x512xf32>
    %156 = arith.truncf %147 : vector<16x128xf32> to vector<16x128xbf16>
    %c0_46 = arith.constant 0 : index
    %c0_47 = arith.constant 0 : index
    %157 = vector.load %arg2[%c0_46, %c0_47] : memref<128x512xbf16, #tpu.memory_space<vmem>>, vector<128x512xbf16>
    %cst_48 = arith.constant dense<0.000000e+00> : vector<16x512xf32>
    %158 = tpu.matmul %156, %157, %cst_48 {dimension_numbers = #tpu.dot_dimension_numbers<[1], [0], [0], [1], [0, 0, 1, 1], [], []>} : vector<16x128xbf16>, vector<128x512xbf16>, vector<16x512xf32> -> vector<16x512xf32>
    %159 = arith.addf %155, %158 : vector<16x512xf32>
    %160 = vector.extract_strided_slice %159 {offsets = [0, 0], sizes = [16, 128], strides = [1, 1]} : vector<16x512xf32> to vector<16x128xf32>
    %161 = arith.negf %160 : vector<16x128xf32>
    %162 = math.exp %161 : vector<16x128xf32>
    %cst_49 = arith.constant 1.000000e+00 : f32
    %163 = vector.broadcast %cst_49 : f32 to vector<16x128xf32>
    %164 = arith.addf %163, %162 : vector<16x128xf32>
    %165 = arith.divf %163, %164 : vector<16x128xf32>
    %166 = vector.extract_strided_slice %159 {offsets = [0, 128], sizes = [16, 128], strides = [1, 1]} : vector<16x512xf32> to vector<16x128xf32>
    %167 = arith.negf %166 : vector<16x128xf32>
    %168 = math.exp %167 : vector<16x128xf32>
    %cst_50 = arith.constant 1.000000e+00 : f32
    %169 = vector.broadcast %cst_50 : f32 to vector<16x128xf32>
    %170 = arith.addf %169, %168 : vector<16x128xf32>
    %171 = arith.divf %169, %170 : vector<16x128xf32>
    %172 = vector.extract_strided_slice %159 {offsets = [0, 256], sizes = [16, 128], strides = [1, 1]} : vector<16x512xf32> to vector<16x128xf32>
    %173 = math.tanh %172 : vector<16x128xf32>
    %174 = vector.extract_strided_slice %159 {offsets = [0, 384], sizes = [16, 128], strides = [1, 1]} : vector<16x512xf32> to vector<16x128xf32>
    %175 = arith.negf %174 : vector<16x128xf32>
    %176 = math.exp %175 : vector<16x128xf32>
    %cst_51 = arith.constant 1.000000e+00 : f32
    %177 = vector.broadcast %cst_51 : f32 to vector<16x128xf32>
    %178 = arith.addf %177, %176 : vector<16x128xf32>
    %179 = arith.divf %177, %178 : vector<16x128xf32>
    %180 = arith.mulf %171, %145 : vector<16x128xf32>
    %181 = arith.mulf %165, %173 : vector<16x128xf32>
    %182 = arith.addf %180, %181 : vector<16x128xf32>
    %183 = math.tanh %182 : vector<16x128xf32>
    %184 = arith.mulf %179, %183 : vector<16x128xf32>
    %185 = arith.truncf %184 : vector<16x128xf32> to vector<16x128xbf16>
    %186 = arith.index_cast %c4_i32 : i32 to index
    %c0_52 = arith.constant 0 : index
    %c0_53 = arith.constant 0 : index
    %187 = vector.load %arg3[%186, %c0_52, %c0_53] : memref<8x16x128xbf16, #tpu.memory_space<vmem>>, vector<1x16x128xbf16>
    %188 = vector.shape_cast %187 : vector<1x16x128xbf16> to vector<16x128xbf16>
    %189 = vector.shape_cast %185 : vector<16x128xbf16> to vector<1x16x128xbf16>
    tpu.vector_store %arg3[%186, %c0_52, %c0_53], %189 {strides = array<i32>} : memref<8x16x128xbf16, #tpu.memory_space<vmem>>, vector<1x16x128xbf16>,
    %c5_i32 = arith.constant 5 : i32
    %190 = arith.index_cast %c5_i32 : i32 to index
    %c0_54 = arith.constant 0 : index
    %c0_55 = arith.constant 0 : index
    %191 = vector.load %arg1[%190, %c0_54, %c0_55] : memref<8x16x512xf32, #tpu.memory_space<vmem>>, vector<1x16x512xf32>
    %192 = vector.shape_cast %191 : vector<1x16x512xf32> to vector<16x512xf32>
    %193 = arith.truncf %184 : vector<16x128xf32> to vector<16x128xbf16>
    %c0_56 = arith.constant 0 : index
    %c0_57 = arith.constant 0 : index
    %194 = vector.load %arg2[%c0_56, %c0_57] : memref<128x512xbf16, #tpu.memory_space<vmem>>, vector<128x512xbf16>
    %cst_58 = arith.constant dense<0.000000e+00> : vector<16x512xf32>
    %195 = tpu.matmul %193, %194, %cst_58 {dimension_numbers = #tpu.dot_dimension_numbers<[1], [0], [0], [1], [0, 0, 1, 1], [], []>} : vector<16x128xbf16>, vector<128x512xbf16>, vector<16x512xf32> -> vector<16x512xf32>
    %196 = arith.addf %192, %195 : vector<16x512xf32>
    %197 = vector.extract_strided_slice %196 {offsets = [0, 0], sizes = [16, 128], strides = [1, 1]} : vector<16x512xf32> to vector<16x128xf32>
    %198 = arith.negf %197 : vector<16x128xf32>
    %199 = math.exp %198 : vector<16x128xf32>
    %cst_59 = arith.constant 1.000000e+00 : f32
    %200 = vector.broadcast %cst_59 : f32 to vector<16x128xf32>
    %201 = arith.addf %200, %199 : vector<16x128xf32>
    %202 = arith.divf %200, %201 : vector<16x128xf32>
    %203 = vector.extract_strided_slice %196 {offsets = [0, 128], sizes = [16, 128], strides = [1, 1]} : vector<16x512xf32> to vector<16x128xf32>
    %204 = arith.negf %203 : vector<16x128xf32>
    %205 = math.exp %204 : vector<16x128xf32>
    %cst_60 = arith.constant 1.000000e+00 : f32
    %206 = vector.broadcast %cst_60 : f32 to vector<16x128xf32>
    %207 = arith.addf %206, %205 : vector<16x128xf32>
    %208 = arith.divf %206, %207 : vector<16x128xf32>
    %209 = vector.extract_strided_slice %196 {offsets = [0, 256], sizes = [16, 128], strides = [1, 1]} : vector<16x512xf32> to vector<16x128xf32>
    %210 = math.tanh %209 : vector<16x128xf32>
    %211 = vector.extract_strided_slice %196 {offsets = [0, 384], sizes = [16, 128], strides = [1, 1]} : vector<16x512xf32> to vector<16x128xf32>
    %212 = arith.negf %211 : vector<16x128xf32>
    %213 = math.exp %212 : vector<16x128xf32>
    %cst_61 = arith.constant 1.000000e+00 : f32
    %214 = vector.broadcast %cst_61 : f32 to vector<16x128xf32>
    %215 = arith.addf %214, %213 : vector<16x128xf32>
    %216 = arith.divf %214, %215 : vector<16x128xf32>
    %217 = arith.mulf %208, %182 : vector<16x128xf32>
    %218 = arith.mulf %202, %210 : vector<16x128xf32>
    %219 = arith.addf %217, %218 : vector<16x128xf32>
    %220 = math.tanh %219 : vector<16x128xf32>
    %221 = arith.mulf %216, %220 : vector<16x128xf32>
    %222 = arith.truncf %221 : vector<16x128xf32> to vector<16x128xbf16>
    %223 = arith.index_cast %c5_i32 : i32 to index
    %c0_62 = arith.constant 0 : index
    %c0_63 = arith.constant 0 : index
    %224 = vector.load %arg3[%223, %c0_62, %c0_63] : memref<8x16x128xbf16, #tpu.memory_space<vmem>>, vector<1x16x128xbf16>
    %225 = vector.shape_cast %224 : vector<1x16x128xbf16> to vector<16x128xbf16>
    %226 = vector.shape_cast %222 : vector<16x128xbf16> to vector<1x16x128xbf16>
    tpu.vector_store %arg3[%223, %c0_62, %c0_63], %226 {strides = array<i32>} : memref<8x16x128xbf16, #tpu.memory_space<vmem>>, vector<1x16x128xbf16>,
    %c6_i32 = arith.constant 6 : i32
    %227 = arith.index_cast %c6_i32 : i32 to index
    %c0_64 = arith.constant 0 : index
    %c0_65 = arith.constant 0 : index
    %228 = vector.load %arg1[%227, %c0_64, %c0_65] : memref<8x16x512xf32, #tpu.memory_space<vmem>>, vector<1x16x512xf32>
    %229 = vector.shape_cast %228 : vector<1x16x512xf32> to vector<16x512xf32>
    %230 = arith.truncf %221 : vector<16x128xf32> to vector<16x128xbf16>
    %c0_66 = arith.constant 0 : index
    %c0_67 = arith.constant 0 : index
    %231 = vector.load %arg2[%c0_66, %c0_67] : memref<128x512xbf16, #tpu.memory_space<vmem>>, vector<128x512xbf16>
    %cst_68 = arith.constant dense<0.000000e+00> : vector<16x512xf32>
    %232 = tpu.matmul %230, %231, %cst_68 {dimension_numbers = #tpu.dot_dimension_numbers<[1], [0], [0], [1], [0, 0, 1, 1], [], []>} : vector<16x128xbf16>, vector<128x512xbf16>, vector<16x512xf32> -> vector<16x512xf32>
    %233 = arith.addf %229, %232 : vector<16x512xf32>
    %234 = vector.extract_strided_slice %233 {offsets = [0, 0], sizes = [16, 128], strides = [1, 1]} : vector<16x512xf32> to vector<16x128xf32>
    %235 = arith.negf %234 : vector<16x128xf32>
    %236 = math.exp %235 : vector<16x128xf32>
    %cst_69 = arith.constant 1.000000e+00 : f32
    %237 = vector.broadcast %cst_69 : f32 to vector<16x128xf32>
    %238 = arith.addf %237, %236 : vector<16x128xf32>
    %239 = arith.divf %237, %238 : vector<16x128xf32>
    %240 = vector.extract_strided_slice %233 {offsets = [0, 128], sizes = [16, 128], strides = [1, 1]} : vector<16x512xf32> to vector<16x128xf32>
    %241 = arith.negf %240 : vector<16x128xf32>
    %242 = math.exp %241 : vector<16x128xf32>
    %cst_70 = arith.constant 1.000000e+00 : f32
    %243 = vector.broadcast %cst_70 : f32 to vector<16x128xf32>
    %244 = arith.addf %243, %242 : vector<16x128xf32>
    %245 = arith.divf %243, %244 : vector<16x128xf32>
    %246 = vector.extract_strided_slice %233 {offsets = [0, 256], sizes = [16, 128], strides = [1, 1]} : vector<16x512xf32> to vector<16x128xf32>
    %247 = math.tanh %246 : vector<16x128xf32>
    %248 = vector.extract_strided_slice %233 {offsets = [0, 384], sizes = [16, 128], strides = [1, 1]} : vector<16x512xf32> to vector<16x128xf32>
    %249 = arith.negf %248 : vector<16x128xf32>
    %250 = math.exp %249 : vector<16x128xf32>
    %cst_71 = arith.constant 1.000000e+00 : f32
    %251 = vector.broadcast %cst_71 : f32 to vector<16x128xf32>
    %252 = arith.addf %251, %250 : vector<16x128xf32>
    %253 = arith.divf %251, %252 : vector<16x128xf32>
    %254 = arith.mulf %245, %219 : vector<16x128xf32>
    %255 = arith.mulf %239, %247 : vector<16x128xf32>
    %256 = arith.addf %254, %255 : vector<16x128xf32>
    %257 = math.tanh %256 : vector<16x128xf32>
    %258 = arith.mulf %253, %257 : vector<16x128xf32>
    %259 = arith.truncf %258 : vector<16x128xf32> to vector<16x128xbf16>
    %260 = arith.index_cast %c6_i32 : i32 to index
    %c0_72 = arith.constant 0 : index
    %c0_73 = arith.constant 0 : index
    %261 = vector.load %arg3[%260, %c0_72, %c0_73] : memref<8x16x128xbf16, #tpu.memory_space<vmem>>, vector<1x16x128xbf16>
    %262 = vector.shape_cast %261 : vector<1x16x128xbf16> to vector<16x128xbf16>
    %263 = vector.shape_cast %259 : vector<16x128xbf16> to vector<1x16x128xbf16>
    tpu.vector_store %arg3[%260, %c0_72, %c0_73], %263 {strides = array<i32>} : memref<8x16x128xbf16, #tpu.memory_space<vmem>>, vector<1x16x128xbf16>,
    %c7_i32 = arith.constant 7 : i32
    %264 = arith.index_cast %c7_i32 : i32 to index
    %c0_74 = arith.constant 0 : index
    %c0_75 = arith.constant 0 : index
    %265 = vector.load %arg1[%264, %c0_74, %c0_75] : memref<8x16x512xf32, #tpu.memory_space<vmem>>, vector<1x16x512xf32>
    %266 = vector.shape_cast %265 : vector<1x16x512xf32> to vector<16x512xf32>
    %267 = arith.truncf %258 : vector<16x128xf32> to vector<16x128xbf16>
    %c0_76 = arith.constant 0 : index
    %c0_77 = arith.constant 0 : index
    %268 = vector.load %arg2[%c0_76, %c0_77] : memref<128x512xbf16, #tpu.memory_space<vmem>>, vector<128x512xbf16>
    %cst_78 = arith.constant dense<0.000000e+00> : vector<16x512xf32>
    %269 = tpu.matmul %267, %268, %cst_78 {dimension_numbers = #tpu.dot_dimension_numbers<[1], [0], [0], [1], [0, 0, 1, 1], [], []>} : vector<16x128xbf16>, vector<128x512xbf16>, vector<16x512xf32> -> vector<16x512xf32>
    %270 = arith.addf %266, %269 : vector<16x512xf32>
    %271 = vector.extract_strided_slice %270 {offsets = [0, 0], sizes = [16, 128], strides = [1, 1]} : vector<16x512xf32> to vector<16x128xf32>
    %272 = arith.negf %271 : vector<16x128xf32>
    %273 = math.exp %272 : vector<16x128xf32>
    %cst_79 = arith.constant 1.000000e+00 : f32
    %274 = vector.broadcast %cst_79 : f32 to vector<16x128xf32>
    %275 = arith.addf %274, %273 : vector<16x128xf32>
    %276 = arith.divf %274, %275 : vector<16x128xf32>
    %277 = vector.extract_strided_slice %270 {offsets = [0, 128], sizes = [16, 128], strides = [1, 1]} : vector<16x512xf32> to vector<16x128xf32>
    %278 = arith.negf %277 : vector<16x128xf32>
    %279 = math.exp %278 : vector<16x128xf32>
    %cst_80 = arith.constant 1.000000e+00 : f32
    %280 = vector.broadcast %cst_80 : f32 to vector<16x128xf32>
    %281 = arith.addf %280, %279 : vector<16x128xf32>
    %282 = arith.divf %280, %281 : vector<16x128xf32>
    %283 = vector.extract_strided_slice %270 {offsets = [0, 256], sizes = [16, 128], strides = [1, 1]} : vector<16x512xf32> to vector<16x128xf32>
    %284 = math.tanh %283 : vector<16x128xf32>
    %285 = vector.extract_strided_slice %270 {offsets = [0, 384], sizes = [16, 128], strides = [1, 1]} : vector<16x512xf32> to vector<16x128xf32>
    %286 = arith.negf %285 : vector<16x128xf32>
    %287 = math.exp %286 : vector<16x128xf32>
    %cst_81 = arith.constant 1.000000e+00 : f32
    %288 = vector.broadcast %cst_81 : f32 to vector<16x128xf32>
    %289 = arith.addf %288, %287 : vector<16x128xf32>
    %290 = arith.divf %288, %289 : vector<16x128xf32>
    %291 = arith.mulf %282, %256 : vector<16x128xf32>
    %292 = arith.mulf %276, %284 : vector<16x128xf32>
    %293 = arith.addf %291, %292 : vector<16x128xf32>
    %294 = math.tanh %293 : vector<16x128xf32>
    %295 = arith.mulf %290, %294 : vector<16x128xf32>
    %296 = arith.truncf %295 : vector<16x128xf32> to vector<16x128xbf16>
    %297 = arith.index_cast %c7_i32 : i32 to index
    %c0_82 = arith.constant 0 : index
    %c0_83 = arith.constant 0 : index
    %298 = vector.load %arg3[%297, %c0_82, %c0_83] : memref<8x16x128xbf16, #tpu.memory_space<vmem>>, vector<1x16x128xbf16>
    %299 = vector.shape_cast %298 : vector<1x16x128xbf16> to vector<16x128xbf16>
    %300 = vector.shape_cast %296 : vector<16x128xbf16> to vector<1x16x128xbf16>
    tpu.vector_store %arg3[%297, %c0_82, %c0_83], %300 {strides = array<i32>} : memref<8x16x128xbf16, #tpu.memory_space<vmem>>, vector<1x16x128xbf16>,
    %c8_i32 = arith.constant 8 : i32
    %c0_84 = arith.constant 0 : index
    %c0_85 = arith.constant 0 : index
    %301 = vector.load %arg4[%c0_84, %c0_85] : memref<16x128xf32, #tpu.memory_space<vmem>>, vector<16x128xf32>
    tpu.vector_store %arg4[%c0_84, %c0_85], %295 {strides = array<i32>} : memref<16x128xf32, #tpu.memory_space<vmem>>, vector<16x128xf32>,
    %c0_86 = arith.constant 0 : index
    %c0_87 = arith.constant 0 : index
    %302 = vector.load %arg5[%c0_86, %c0_87] : memref<16x128xf32, #tpu.memory_space<vmem>>, vector<16x128xf32>
    tpu.vector_store %arg5[%c0_86, %c0_87], %293 {strides = array<i32>} : memref<16x128xf32, #tpu.memory_space<vmem>>, vector<16x128xf32>,
    return
  }
  func.func @transform_0(%arg0: i32) -> (i32, i32, i32) {
    %c0_i32 = arith.constant 0 : i32
    %c0_i32_0 = arith.constant 0 : i32
    %c0_i32_1 = arith.constant 0 : i32
    return %arg0, %c0_i32, %c0_i32_0 : i32, i32, i32
  }
  func.func @transform_1(%arg0: i32) -> (i32, i32) {
    %c0_i32 = arith.constant 0 : i32
    %c0_i32_0 = arith.constant 0 : i32
    %c0_i32_1 = arith.constant 0 : i32
    return %c0_i32, %c0_i32_0 : i32, i32
  }
  func.func @transform_2(%arg0: i32) -> (i32, i32, i32) {
    %c0_i32 = arith.constant 0 : i32
    %c0_i32_0 = arith.constant 0 : i32
    %c0_i32_1 = arith.constant 0 : i32
    return %arg0, %c0_i32, %c0_i32_0 : i32, i32, i32
  }
}

module attributes {stable_mosaic.version = 11 : i64} {
  func.func @_input_proj_kernel(%arg0: i32, %arg1: memref<8x16x128xbf16, #tpu.memory_space<vmem>>, %arg2: memref<128x512xbf16, #tpu.memory_space<vmem>>, %arg3: memref<1x512xf32, #tpu.memory_space<vmem>>, %arg4: memref<8x16x512xf32, #tpu.memory_space<vmem>>) attributes {dimension_semantics = [#tpu.dimension_semantics<parallel>], iteration_bounds = array<i64: 1>, scalar_prefetch = 0 : i64, scratch_operands = 0 : i64, tpu.core_type = #tpu.core_type<tc>, window_params = [{transform_indices = @transform_0, window_bounds = array<i64: 8, 16, 128>}, {pipeline_mode = #tpu.pipeline_mode<synchronous>, transform_indices = @transform_1, window_bounds = array<i64: 128, 512>}, {pipeline_mode = #tpu.pipeline_mode<synchronous>, transform_indices = @transform_2, window_bounds = array<i64: 1, 512>}, {transform_indices = @transform_3, window_bounds = array<i64: 8, 16, 512>}]} {
    %c0 = arith.constant 0 : index
    %c0_0 = arith.constant 0 : index
    %c0_1 = arith.constant 0 : index
    %0 = vector.load %arg1[%c0, %c0_0, %c0_1] : memref<8x16x128xbf16, #tpu.memory_space<vmem>>, vector<8x16x128xbf16>
    %1 = vector.shape_cast %0 : vector<8x16x128xbf16> to vector<128x128xbf16>
    %c0_2 = arith.constant 0 : index
    %c0_3 = arith.constant 0 : index
    %2 = vector.load %arg2[%c0_2, %c0_3] : memref<128x512xbf16, #tpu.memory_space<vmem>>, vector<128x512xbf16>
    %cst = arith.constant dense<0.000000e+00> : vector<128x512xf32>
    %3 = tpu.matmul %1, %2, %cst {dimension_numbers = #tpu.dot_dimension_numbers<[1], [0], [0], [1], [0, 0, 1, 1], [], []>} : vector<128x128xbf16>, vector<128x512xbf16>, vector<128x512xf32> -> vector<128x512xf32>
    %c0_4 = arith.constant 0 : index
    %c0_5 = arith.constant 0 : index
    %4 = vector.load %arg3[%c0_4, %c0_5] : memref<1x512xf32, #tpu.memory_space<vmem>>, vector<1x512xf32>
    %5 = vector.broadcast %4 : vector<1x512xf32> to vector<128x512xf32>
    %6 = arith.addf %3, %5 : vector<128x512xf32>
    %7 = vector.shape_cast %6 : vector<128x512xf32> to vector<8x16x512xf32>
    %c0_6 = arith.constant 0 : index
    %c0_7 = arith.constant 0 : index
    %c0_8 = arith.constant 0 : index
    %8 = vector.load %arg4[%c0_6, %c0_7, %c0_8] : memref<8x16x512xf32, #tpu.memory_space<vmem>>, vector<8x16x512xf32>
    tpu.vector_store %arg4[%c0_6, %c0_7, %c0_8], %7 {strides = array<i32>} : memref<8x16x512xf32, #tpu.memory_space<vmem>>, vector<8x16x512xf32>,
    return
  }
  func.func @transform_0(%arg0: i32) -> (i32, i32, i32) {
    %c0_i32 = arith.constant 0 : i32
    %c0_i32_0 = arith.constant 0 : i32
    %c0_i32_1 = arith.constant 0 : i32
    return %arg0, %c0_i32, %c0_i32_0 : i32, i32, i32
  }
  func.func @transform_1(%arg0: i32) -> (i32, i32) {
    %c0_i32 = arith.constant 0 : i32
    %c0_i32_0 = arith.constant 0 : i32
    %c0_i32_1 = arith.constant 0 : i32
    return %c0_i32, %c0_i32_0 : i32, i32
  }
  func.func @transform_2(%arg0: i32) -> (i32, i32) {
    %c0_i32 = arith.constant 0 : i32
    %c0_i32_0 = arith.constant 0 : i32
    %c0_i32_1 = arith.constant 0 : i32
    return %c0_i32, %c0_i32_0 : i32, i32
  }
  func.func @transform_3(%arg0: i32) -> (i32, i32, i32) {
    %c0_i32 = arith.constant 0 : i32
    %c0_i32_0 = arith.constant 0 : i32
    %c0_i32_1 = arith.constant 0 : i32
    return %arg0, %c0_i32, %c0_i32_0 : i32, i32, i32
  }
}

module attributes {stable_mosaic.version = 11 : i64} {
  func.func @_lstm_last_fc_kernel(%arg0: i32, %arg1: memref<8x16x512xf32, #tpu.memory_space<vmem>>, %arg2: memref<128x512xbf16, #tpu.memory_space<vmem>>, %arg3: memref<128x4xbf16, #tpu.memory_space<vmem>>, %arg4: memref<1x4xf32, #tpu.memory_space<vmem>>, %arg5: memref<16x4xf32, #tpu.memory_space<vmem>>, %arg6: memref<16x128xf32, #tpu.memory_space<vmem>>, %arg7: memref<16x128xf32, #tpu.memory_space<vmem>>) attributes {dimension_semantics = [#tpu.dimension_semantics<arbitrary>], iteration_bounds = array<i64: 1>, scalar_prefetch = 0 : i64, scratch_operands = 2 : i64, tpu.core_type = #tpu.core_type<tc>, window_params = [{transform_indices = @transform_0, window_bounds = array<i64: 8, 16, 512>}, {pipeline_mode = #tpu.pipeline_mode<synchronous>, transform_indices = @transform_1, window_bounds = array<i64: 128, 512>}, {pipeline_mode = #tpu.pipeline_mode<synchronous>, transform_indices = @transform_2, window_bounds = array<i64: 128, 4>}, {pipeline_mode = #tpu.pipeline_mode<synchronous>, transform_indices = @transform_3, window_bounds = array<i64: 1, 4>}, {pipeline_mode = #tpu.pipeline_mode<synchronous>, transform_indices = @transform_4, window_bounds = array<i64: 16, 4>}]} {
    %c0_i32 = arith.constant 0 : i32
    %0 = arith.cmpi eq, %arg0, %c0_i32 : i32
    %1 = arith.extui %0 : i1 to i32
    %c0_i32_0 = arith.constant 0 : i32
    %2 = arith.cmpi ne, %1, %c0_i32_0 : i32
    scf.if %2 {
      %cst_74 = arith.constant 0.000000e+00 : f32
      %266 = vector.broadcast %cst_74 : f32 to vector<16x128xf32>
      %c0_75 = arith.constant 0 : index
      %c0_76 = arith.constant 0 : index
      %267 = vector.load %arg6[%c0_75, %c0_76] : memref<16x128xf32, #tpu.memory_space<vmem>>, vector<16x128xf32>
      tpu.vector_store %arg6[%c0_75, %c0_76], %266 {strides = array<i32>} : memref<16x128xf32, #tpu.memory_space<vmem>>, vector<16x128xf32>,
      %cst_77 = arith.constant 0.000000e+00 : f32
      %268 = vector.broadcast %cst_77 : f32 to vector<16x128xf32>
      %c0_78 = arith.constant 0 : index
      %c0_79 = arith.constant 0 : index
      %269 = vector.load %arg7[%c0_78, %c0_79] : memref<16x128xf32, #tpu.memory_space<vmem>>, vector<16x128xf32>
      tpu.vector_store %arg7[%c0_78, %c0_79], %268 {strides = array<i32>} : memref<16x128xf32, #tpu.memory_space<vmem>>, vector<16x128xf32>,
    } else {
    }
    %c0 = arith.constant 0 : index
    %c0_1 = arith.constant 0 : index
    %3 = vector.load %arg6[%c0, %c0_1] : memref<16x128xf32, #tpu.memory_space<vmem>>, vector<16x128xf32>
    %c0_2 = arith.constant 0 : index
    %c0_3 = arith.constant 0 : index
    %4 = vector.load %arg7[%c0_2, %c0_3] : memref<16x128xf32, #tpu.memory_space<vmem>>, vector<16x128xf32>
    %c0_i32_4 = arith.constant 0 : i32
    %5 = arith.index_cast %c0_i32_4 : i32 to index
    %c0_5 = arith.constant 0 : index
    %c0_6 = arith.constant 0 : index
    %6 = vector.load %arg1[%5, %c0_5, %c0_6] : memref<8x16x512xf32, #tpu.memory_space<vmem>>, vector<1x16x512xf32>
    %7 = vector.shape_cast %6 : vector<1x16x512xf32> to vector<16x512xf32>
    %8 = arith.truncf %3 : vector<16x128xf32> to vector<16x128xbf16>
    %c0_7 = arith.constant 0 : index
    %c0_8 = arith.constant 0 : index
    %9 = vector.load %arg2[%c0_7, %c0_8] : memref<128x512xbf16, #tpu.memory_space<vmem>>, vector<128x512xbf16>
    %cst = arith.constant dense<0.000000e+00> : vector<16x512xf32>
    %10 = tpu.matmul %8, %9, %cst {dimension_numbers = #tpu.dot_dimension_numbers<[1], [0], [0], [1], [0, 0, 1, 1], [], []>} : vector<16x128xbf16>, vector<128x512xbf16>, vector<16x512xf32> -> vector<16x512xf32>
    %11 = arith.addf %7, %10 : vector<16x512xf32>
    %12 = vector.extract_strided_slice %11 {offsets = [0, 0], sizes = [16, 128], strides = [1, 1]} : vector<16x512xf32> to vector<16x128xf32>
    %13 = arith.negf %12 : vector<16x128xf32>
    %14 = math.exp %13 : vector<16x128xf32>
    %cst_9 = arith.constant 1.000000e+00 : f32
    %15 = vector.broadcast %cst_9 : f32 to vector<16x128xf32>
    %16 = arith.addf %15, %14 : vector<16x128xf32>
    %17 = arith.divf %15, %16 : vector<16x128xf32>
    %18 = vector.extract_strided_slice %11 {offsets = [0, 128], sizes = [16, 128], strides = [1, 1]} : vector<16x512xf32> to vector<16x128xf32>
    %19 = arith.negf %18 : vector<16x128xf32>
    %20 = math.exp %19 : vector<16x128xf32>
    %cst_10 = arith.constant 1.000000e+00 : f32
    %21 = vector.broadcast %cst_10 : f32 to vector<16x128xf32>
    %22 = arith.addf %21, %20 : vector<16x128xf32>
    %23 = arith.divf %21, %22 : vector<16x128xf32>
    %24 = vector.extract_strided_slice %11 {offsets = [0, 256], sizes = [16, 128], strides = [1, 1]} : vector<16x512xf32> to vector<16x128xf32>
    %25 = math.tanh %24 : vector<16x128xf32>
    %26 = vector.extract_strided_slice %11 {offsets = [0, 384], sizes = [16, 128], strides = [1, 1]} : vector<16x512xf32> to vector<16x128xf32>
    %27 = arith.negf %26 : vector<16x128xf32>
    %28 = math.exp %27 : vector<16x128xf32>
    %cst_11 = arith.constant 1.000000e+00 : f32
    %29 = vector.broadcast %cst_11 : f32 to vector<16x128xf32>
    %30 = arith.addf %29, %28 : vector<16x128xf32>
    %31 = arith.divf %29, %30 : vector<16x128xf32>
    %32 = arith.mulf %23, %4 : vector<16x128xf32>
    %33 = arith.mulf %17, %25 : vector<16x128xf32>
    %34 = arith.addf %32, %33 : vector<16x128xf32>
    %35 = math.tanh %34 : vector<16x128xf32>
    %36 = arith.mulf %31, %35 : vector<16x128xf32>
    %c1_i32 = arith.constant 1 : i32
    %37 = arith.index_cast %c1_i32 : i32 to index
    %c0_12 = arith.constant 0 : index
    %c0_13 = arith.constant 0 : index
    %38 = vector.load %arg1[%37, %c0_12, %c0_13] : memref<8x16x512xf32, #tpu.memory_space<vmem>>, vector<1x16x512xf32>
    %39 = vector.shape_cast %38 : vector<1x16x512xf32> to vector<16x512xf32>
    %40 = arith.truncf %36 : vector<16x128xf32> to vector<16x128xbf16>
    %c0_14 = arith.constant 0 : index
    %c0_15 = arith.constant 0 : index
    %41 = vector.load %arg2[%c0_14, %c0_15] : memref<128x512xbf16, #tpu.memory_space<vmem>>, vector<128x512xbf16>
    %cst_16 = arith.constant dense<0.000000e+00> : vector<16x512xf32>
    %42 = tpu.matmul %40, %41, %cst_16 {dimension_numbers = #tpu.dot_dimension_numbers<[1], [0], [0], [1], [0, 0, 1, 1], [], []>} : vector<16x128xbf16>, vector<128x512xbf16>, vector<16x512xf32> -> vector<16x512xf32>
    %43 = arith.addf %39, %42 : vector<16x512xf32>
    %44 = vector.extract_strided_slice %43 {offsets = [0, 0], sizes = [16, 128], strides = [1, 1]} : vector<16x512xf32> to vector<16x128xf32>
    %45 = arith.negf %44 : vector<16x128xf32>
    %46 = math.exp %45 : vector<16x128xf32>
    %cst_17 = arith.constant 1.000000e+00 : f32
    %47 = vector.broadcast %cst_17 : f32 to vector<16x128xf32>
    %48 = arith.addf %47, %46 : vector<16x128xf32>
    %49 = arith.divf %47, %48 : vector<16x128xf32>
    %50 = vector.extract_strided_slice %43 {offsets = [0, 128], sizes = [16, 128], strides = [1, 1]} : vector<16x512xf32> to vector<16x128xf32>
    %51 = arith.negf %50 : vector<16x128xf32>
    %52 = math.exp %51 : vector<16x128xf32>
    %cst_18 = arith.constant 1.000000e+00 : f32
    %53 = vector.broadcast %cst_18 : f32 to vector<16x128xf32>
    %54 = arith.addf %53, %52 : vector<16x128xf32>
    %55 = arith.divf %53, %54 : vector<16x128xf32>
    %56 = vector.extract_strided_slice %43 {offsets = [0, 256], sizes = [16, 128], strides = [1, 1]} : vector<16x512xf32> to vector<16x128xf32>
    %57 = math.tanh %56 : vector<16x128xf32>
    %58 = vector.extract_strided_slice %43 {offsets = [0, 384], sizes = [16, 128], strides = [1, 1]} : vector<16x512xf32> to vector<16x128xf32>
    %59 = arith.negf %58 : vector<16x128xf32>
    %60 = math.exp %59 : vector<16x128xf32>
    %cst_19 = arith.constant 1.000000e+00 : f32
    %61 = vector.broadcast %cst_19 : f32 to vector<16x128xf32>
    %62 = arith.addf %61, %60 : vector<16x128xf32>
    %63 = arith.divf %61, %62 : vector<16x128xf32>
    %64 = arith.mulf %55, %34 : vector<16x128xf32>
    %65 = arith.mulf %49, %57 : vector<16x128xf32>
    %66 = arith.addf %64, %65 : vector<16x128xf32>
    %67 = math.tanh %66 : vector<16x128xf32>
    %68 = arith.mulf %63, %67 : vector<16x128xf32>
    %c2_i32 = arith.constant 2 : i32
    %69 = arith.index_cast %c2_i32 : i32 to index
    %c0_20 = arith.constant 0 : index
    %c0_21 = arith.constant 0 : index
    %70 = vector.load %arg1[%69, %c0_20, %c0_21] : memref<8x16x512xf32, #tpu.memory_space<vmem>>, vector<1x16x512xf32>
    %71 = vector.shape_cast %70 : vector<1x16x512xf32> to vector<16x512xf32>
    %72 = arith.truncf %68 : vector<16x128xf32> to vector<16x128xbf16>
    %c0_22 = arith.constant 0 : index
    %c0_23 = arith.constant 0 : index
    %73 = vector.load %arg2[%c0_22, %c0_23] : memref<128x512xbf16, #tpu.memory_space<vmem>>, vector<128x512xbf16>
    %cst_24 = arith.constant dense<0.000000e+00> : vector<16x512xf32>
    %74 = tpu.matmul %72, %73, %cst_24 {dimension_numbers = #tpu.dot_dimension_numbers<[1], [0], [0], [1], [0, 0, 1, 1], [], []>} : vector<16x128xbf16>, vector<128x512xbf16>, vector<16x512xf32> -> vector<16x512xf32>
    %75 = arith.addf %71, %74 : vector<16x512xf32>
    %76 = vector.extract_strided_slice %75 {offsets = [0, 0], sizes = [16, 128], strides = [1, 1]} : vector<16x512xf32> to vector<16x128xf32>
    %77 = arith.negf %76 : vector<16x128xf32>
    %78 = math.exp %77 : vector<16x128xf32>
    %cst_25 = arith.constant 1.000000e+00 : f32
    %79 = vector.broadcast %cst_25 : f32 to vector<16x128xf32>
    %80 = arith.addf %79, %78 : vector<16x128xf32>
    %81 = arith.divf %79, %80 : vector<16x128xf32>
    %82 = vector.extract_strided_slice %75 {offsets = [0, 128], sizes = [16, 128], strides = [1, 1]} : vector<16x512xf32> to vector<16x128xf32>
    %83 = arith.negf %82 : vector<16x128xf32>
    %84 = math.exp %83 : vector<16x128xf32>
    %cst_26 = arith.constant 1.000000e+00 : f32
    %85 = vector.broadcast %cst_26 : f32 to vector<16x128xf32>
    %86 = arith.addf %85, %84 : vector<16x128xf32>
    %87 = arith.divf %85, %86 : vector<16x128xf32>
    %88 = vector.extract_strided_slice %75 {offsets = [0, 256], sizes = [16, 128], strides = [1, 1]} : vector<16x512xf32> to vector<16x128xf32>
    %89 = math.tanh %88 : vector<16x128xf32>
    %90 = vector.extract_strided_slice %75 {offsets = [0, 384], sizes = [16, 128], strides = [1, 1]} : vector<16x512xf32> to vector<16x128xf32>
    %91 = arith.negf %90 : vector<16x128xf32>
    %92 = math.exp %91 : vector<16x128xf32>
    %cst_27 = arith.constant 1.000000e+00 : f32
    %93 = vector.broadcast %cst_27 : f32 to vector<16x128xf32>
    %94 = arith.addf %93, %92 : vector<16x128xf32>
    %95 = arith.divf %93, %94 : vector<16x128xf32>
    %96 = arith.mulf %87, %66 : vector<16x128xf32>
    %97 = arith.mulf %81, %89 : vector<16x128xf32>
    %98 = arith.addf %96, %97 : vector<16x128xf32>
    %99 = math.tanh %98 : vector<16x128xf32>
    %100 = arith.mulf %95, %99 : vector<16x128xf32>
    %c3_i32 = arith.constant 3 : i32
    %101 = arith.index_cast %c3_i32 : i32 to index
    %c0_28 = arith.constant 0 : index
    %c0_29 = arith.constant 0 : index
    %102 = vector.load %arg1[%101, %c0_28, %c0_29] : memref<8x16x512xf32, #tpu.memory_space<vmem>>, vector<1x16x512xf32>
    %103 = vector.shape_cast %102 : vector<1x16x512xf32> to vector<16x512xf32>
    %104 = arith.truncf %100 : vector<16x128xf32> to vector<16x128xbf16>
    %c0_30 = arith.constant 0 : index
    %c0_31 = arith.constant 0 : index
    %105 = vector.load %arg2[%c0_30, %c0_31] : memref<128x512xbf16, #tpu.memory_space<vmem>>, vector<128x512xbf16>
    %cst_32 = arith.constant dense<0.000000e+00> : vector<16x512xf32>
    %106 = tpu.matmul %104, %105, %cst_32 {dimension_numbers = #tpu.dot_dimension_numbers<[1], [0], [0], [1], [0, 0, 1, 1], [], []>} : vector<16x128xbf16>, vector<128x512xbf16>, vector<16x512xf32> -> vector<16x512xf32>
    %107 = arith.addf %103, %106 : vector<16x512xf32>
    %108 = vector.extract_strided_slice %107 {offsets = [0, 0], sizes = [16, 128], strides = [1, 1]} : vector<16x512xf32> to vector<16x128xf32>
    %109 = arith.negf %108 : vector<16x128xf32>
    %110 = math.exp %109 : vector<16x128xf32>
    %cst_33 = arith.constant 1.000000e+00 : f32
    %111 = vector.broadcast %cst_33 : f32 to vector<16x128xf32>
    %112 = arith.addf %111, %110 : vector<16x128xf32>
    %113 = arith.divf %111, %112 : vector<16x128xf32>
    %114 = vector.extract_strided_slice %107 {offsets = [0, 128], sizes = [16, 128], strides = [1, 1]} : vector<16x512xf32> to vector<16x128xf32>
    %115 = arith.negf %114 : vector<16x128xf32>
    %116 = math.exp %115 : vector<16x128xf32>
    %cst_34 = arith.constant 1.000000e+00 : f32
    %117 = vector.broadcast %cst_34 : f32 to vector<16x128xf32>
    %118 = arith.addf %117, %116 : vector<16x128xf32>
    %119 = arith.divf %117, %118 : vector<16x128xf32>
    %120 = vector.extract_strided_slice %107 {offsets = [0, 256], sizes = [16, 128], strides = [1, 1]} : vector<16x512xf32> to vector<16x128xf32>
    %121 = math.tanh %120 : vector<16x128xf32>
    %122 = vector.extract_strided_slice %107 {offsets = [0, 384], sizes = [16, 128], strides = [1, 1]} : vector<16x512xf32> to vector<16x128xf32>
    %123 = arith.negf %122 : vector<16x128xf32>
    %124 = math.exp %123 : vector<16x128xf32>
    %cst_35 = arith.constant 1.000000e+00 : f32
    %125 = vector.broadcast %cst_35 : f32 to vector<16x128xf32>
    %126 = arith.addf %125, %124 : vector<16x128xf32>
    %127 = arith.divf %125, %126 : vector<16x128xf32>
    %128 = arith.mulf %119, %98 : vector<16x128xf32>
    %129 = arith.mulf %113, %121 : vector<16x128xf32>
    %130 = arith.addf %128, %129 : vector<16x128xf32>
    %131 = math.tanh %130 : vector<16x128xf32>
    %132 = arith.mulf %127, %131 : vector<16x128xf32>
    %c4_i32 = arith.constant 4 : i32
    %133 = arith.index_cast %c4_i32 : i32 to index
    %c0_36 = arith.constant 0 : index
    %c0_37 = arith.constant 0 : index
    %134 = vector.load %arg1[%133, %c0_36, %c0_37] : memref<8x16x512xf32, #tpu.memory_space<vmem>>, vector<1x16x512xf32>
    %135 = vector.shape_cast %134 : vector<1x16x512xf32> to vector<16x512xf32>
    %136 = arith.truncf %132 : vector<16x128xf32> to vector<16x128xbf16>
    %c0_38 = arith.constant 0 : index
    %c0_39 = arith.constant 0 : index
    %137 = vector.load %arg2[%c0_38, %c0_39] : memref<128x512xbf16, #tpu.memory_space<vmem>>, vector<128x512xbf16>
    %cst_40 = arith.constant dense<0.000000e+00> : vector<16x512xf32>
    %138 = tpu.matmul %136, %137, %cst_40 {dimension_numbers = #tpu.dot_dimension_numbers<[1], [0], [0], [1], [0, 0, 1, 1], [], []>} : vector<16x128xbf16>, vector<128x512xbf16>, vector<16x512xf32> -> vector<16x512xf32>
    %139 = arith.addf %135, %138 : vector<16x512xf32>
    %140 = vector.extract_strided_slice %139 {offsets = [0, 0], sizes = [16, 128], strides = [1, 1]} : vector<16x512xf32> to vector<16x128xf32>
    %141 = arith.negf %140 : vector<16x128xf32>
    %142 = math.exp %141 : vector<16x128xf32>
    %cst_41 = arith.constant 1.000000e+00 : f32
    %143 = vector.broadcast %cst_41 : f32 to vector<16x128xf32>
    %144 = arith.addf %143, %142 : vector<16x128xf32>
    %145 = arith.divf %143, %144 : vector<16x128xf32>
    %146 = vector.extract_strided_slice %139 {offsets = [0, 128], sizes = [16, 128], strides = [1, 1]} : vector<16x512xf32> to vector<16x128xf32>
    %147 = arith.negf %146 : vector<16x128xf32>
    %148 = math.exp %147 : vector<16x128xf32>
    %cst_42 = arith.constant 1.000000e+00 : f32
    %149 = vector.broadcast %cst_42 : f32 to vector<16x128xf32>
    %150 = arith.addf %149, %148 : vector<16x128xf32>
    %151 = arith.divf %149, %150 : vector<16x128xf32>
    %152 = vector.extract_strided_slice %139 {offsets = [0, 256], sizes = [16, 128], strides = [1, 1]} : vector<16x512xf32> to vector<16x128xf32>
    %153 = math.tanh %152 : vector<16x128xf32>
    %154 = vector.extract_strided_slice %139 {offsets = [0, 384], sizes = [16, 128], strides = [1, 1]} : vector<16x512xf32> to vector<16x128xf32>
    %155 = arith.negf %154 : vector<16x128xf32>
    %156 = math.exp %155 : vector<16x128xf32>
    %cst_43 = arith.constant 1.000000e+00 : f32
    %157 = vector.broadcast %cst_43 : f32 to vector<16x128xf32>
    %158 = arith.addf %157, %156 : vector<16x128xf32>
    %159 = arith.divf %157, %158 : vector<16x128xf32>
    %160 = arith.mulf %151, %130 : vector<16x128xf32>
    %161 = arith.mulf %145, %153 : vector<16x128xf32>
    %162 = arith.addf %160, %161 : vector<16x128xf32>
    %163 = math.tanh %162 : vector<16x128xf32>
    %164 = arith.mulf %159, %163 : vector<16x128xf32>
    %c5_i32 = arith.constant 5 : i32
    %165 = arith.index_cast %c5_i32 : i32 to index
    %c0_44 = arith.constant 0 : index
    %c0_45 = arith.constant 0 : index
    %166 = vector.load %arg1[%165, %c0_44, %c0_45] : memref<8x16x512xf32, #tpu.memory_space<vmem>>, vector<1x16x512xf32>
    %167 = vector.shape_cast %166 : vector<1x16x512xf32> to vector<16x512xf32>
    %168 = arith.truncf %164 : vector<16x128xf32> to vector<16x128xbf16>
    %c0_46 = arith.constant 0 : index
    %c0_47 = arith.constant 0 : index
    %169 = vector.load %arg2[%c0_46, %c0_47] : memref<128x512xbf16, #tpu.memory_space<vmem>>, vector<128x512xbf16>
    %cst_48 = arith.constant dense<0.000000e+00> : vector<16x512xf32>
    %170 = tpu.matmul %168, %169, %cst_48 {dimension_numbers = #tpu.dot_dimension_numbers<[1], [0], [0], [1], [0, 0, 1, 1], [], []>} : vector<16x128xbf16>, vector<128x512xbf16>, vector<16x512xf32> -> vector<16x512xf32>
    %171 = arith.addf %167, %170 : vector<16x512xf32>
    %172 = vector.extract_strided_slice %171 {offsets = [0, 0], sizes = [16, 128], strides = [1, 1]} : vector<16x512xf32> to vector<16x128xf32>
    %173 = arith.negf %172 : vector<16x128xf32>
    %174 = math.exp %173 : vector<16x128xf32>
    %cst_49 = arith.constant 1.000000e+00 : f32
    %175 = vector.broadcast %cst_49 : f32 to vector<16x128xf32>
    %176 = arith.addf %175, %174 : vector<16x128xf32>
    %177 = arith.divf %175, %176 : vector<16x128xf32>
    %178 = vector.extract_strided_slice %171 {offsets = [0, 128], sizes = [16, 128], strides = [1, 1]} : vector<16x512xf32> to vector<16x128xf32>
    %179 = arith.negf %178 : vector<16x128xf32>
    %180 = math.exp %179 : vector<16x128xf32>
    %cst_50 = arith.constant 1.000000e+00 : f32
    %181 = vector.broadcast %cst_50 : f32 to vector<16x128xf32>
    %182 = arith.addf %181, %180 : vector<16x128xf32>
    %183 = arith.divf %181, %182 : vector<16x128xf32>
    %184 = vector.extract_strided_slice %171 {offsets = [0, 256], sizes = [16, 128], strides = [1, 1]} : vector<16x512xf32> to vector<16x128xf32>
    %185 = math.tanh %184 : vector<16x128xf32>
    %186 = vector.extract_strided_slice %171 {offsets = [0, 384], sizes = [16, 128], strides = [1, 1]} : vector<16x512xf32> to vector<16x128xf32>
    %187 = arith.negf %186 : vector<16x128xf32>
    %188 = math.exp %187 : vector<16x128xf32>
    %cst_51 = arith.constant 1.000000e+00 : f32
    %189 = vector.broadcast %cst_51 : f32 to vector<16x128xf32>
    %190 = arith.addf %189, %188 : vector<16x128xf32>
    %191 = arith.divf %189, %190 : vector<16x128xf32>
    %192 = arith.mulf %183, %162 : vector<16x128xf32>
    %193 = arith.mulf %177, %185 : vector<16x128xf32>
    %194 = arith.addf %192, %193 : vector<16x128xf32>
    %195 = math.tanh %194 : vector<16x128xf32>
    %196 = arith.mulf %191, %195 : vector<16x128xf32>
    %c6_i32 = arith.constant 6 : i32
    %197 = arith.index_cast %c6_i32 : i32 to index
    %c0_52 = arith.constant 0 : index
    %c0_53 = arith.constant 0 : index
    %198 = vector.load %arg1[%197, %c0_52, %c0_53] : memref<8x16x512xf32, #tpu.memory_space<vmem>>, vector<1x16x512xf32>
    %199 = vector.shape_cast %198 : vector<1x16x512xf32> to vector<16x512xf32>
    %200 = arith.truncf %196 : vector<16x128xf32> to vector<16x128xbf16>
    %c0_54 = arith.constant 0 : index
    %c0_55 = arith.constant 0 : index
    %201 = vector.load %arg2[%c0_54, %c0_55] : memref<128x512xbf16, #tpu.memory_space<vmem>>, vector<128x512xbf16>
    %cst_56 = arith.constant dense<0.000000e+00> : vector<16x512xf32>
    %202 = tpu.matmul %200, %201, %cst_56 {dimension_numbers = #tpu.dot_dimension_numbers<[1], [0], [0], [1], [0, 0, 1, 1], [], []>} : vector<16x128xbf16>, vector<128x512xbf16>, vector<16x512xf32> -> vector<16x512xf32>
    %203 = arith.addf %199, %202 : vector<16x512xf32>
    %204 = vector.extract_strided_slice %203 {offsets = [0, 0], sizes = [16, 128], strides = [1, 1]} : vector<16x512xf32> to vector<16x128xf32>
    %205 = arith.negf %204 : vector<16x128xf32>
    %206 = math.exp %205 : vector<16x128xf32>
    %cst_57 = arith.constant 1.000000e+00 : f32
    %207 = vector.broadcast %cst_57 : f32 to vector<16x128xf32>
    %208 = arith.addf %207, %206 : vector<16x128xf32>
    %209 = arith.divf %207, %208 : vector<16x128xf32>
    %210 = vector.extract_strided_slice %203 {offsets = [0, 128], sizes = [16, 128], strides = [1, 1]} : vector<16x512xf32> to vector<16x128xf32>
    %211 = arith.negf %210 : vector<16x128xf32>
    %212 = math.exp %211 : vector<16x128xf32>
    %cst_58 = arith.constant 1.000000e+00 : f32
    %213 = vector.broadcast %cst_58 : f32 to vector<16x128xf32>
    %214 = arith.addf %213, %212 : vector<16x128xf32>
    %215 = arith.divf %213, %214 : vector<16x128xf32>
    %216 = vector.extract_strided_slice %203 {offsets = [0, 256], sizes = [16, 128], strides = [1, 1]} : vector<16x512xf32> to vector<16x128xf32>
    %217 = math.tanh %216 : vector<16x128xf32>
    %218 = vector.extract_strided_slice %203 {offsets = [0, 384], sizes = [16, 128], strides = [1, 1]} : vector<16x512xf32> to vector<16x128xf32>
    %219 = arith.negf %218 : vector<16x128xf32>
    %220 = math.exp %219 : vector<16x128xf32>
    %cst_59 = arith.constant 1.000000e+00 : f32
    %221 = vector.broadcast %cst_59 : f32 to vector<16x128xf32>
    %222 = arith.addf %221, %220 : vector<16x128xf32>
    %223 = arith.divf %221, %222 : vector<16x128xf32>
    %224 = arith.mulf %215, %194 : vector<16x128xf32>
    %225 = arith.mulf %209, %217 : vector<16x128xf32>
    %226 = arith.addf %224, %225 : vector<16x128xf32>
    %227 = math.tanh %226 : vector<16x128xf32>
    %228 = arith.mulf %223, %227 : vector<16x128xf32>
    %c7_i32 = arith.constant 7 : i32
    %229 = arith.index_cast %c7_i32 : i32 to index
    %c0_60 = arith.constant 0 : index
    %c0_61 = arith.constant 0 : index
    %230 = vector.load %arg1[%229, %c0_60, %c0_61] : memref<8x16x512xf32, #tpu.memory_space<vmem>>, vector<1x16x512xf32>
    %231 = vector.shape_cast %230 : vector<1x16x512xf32> to vector<16x512xf32>
    %232 = arith.truncf %228 : vector<16x128xf32> to vector<16x128xbf16>
    %c0_62 = arith.constant 0 : index
    %c0_63 = arith.constant 0 : index
    %233 = vector.load %arg2[%c0_62, %c0_63] : memref<128x512xbf16, #tpu.memory_space<vmem>>, vector<128x512xbf16>
    %cst_64 = arith.constant dense<0.000000e+00> : vector<16x512xf32>
    %234 = tpu.matmul %232, %233, %cst_64 {dimension_numbers = #tpu.dot_dimension_numbers<[1], [0], [0], [1], [0, 0, 1, 1], [], []>} : vector<16x128xbf16>, vector<128x512xbf16>, vector<16x512xf32> -> vector<16x512xf32>
    %235 = arith.addf %231, %234 : vector<16x512xf32>
    %236 = vector.extract_strided_slice %235 {offsets = [0, 0], sizes = [16, 128], strides = [1, 1]} : vector<16x512xf32> to vector<16x128xf32>
    %237 = arith.negf %236 : vector<16x128xf32>
    %238 = math.exp %237 : vector<16x128xf32>
    %cst_65 = arith.constant 1.000000e+00 : f32
    %239 = vector.broadcast %cst_65 : f32 to vector<16x128xf32>
    %240 = arith.addf %239, %238 : vector<16x128xf32>
    %241 = arith.divf %239, %240 : vector<16x128xf32>
    %242 = vector.extract_strided_slice %235 {offsets = [0, 128], sizes = [16, 128], strides = [1, 1]} : vector<16x512xf32> to vector<16x128xf32>
    %243 = arith.negf %242 : vector<16x128xf32>
    %244 = math.exp %243 : vector<16x128xf32>
    %cst_66 = arith.constant 1.000000e+00 : f32
    %245 = vector.broadcast %cst_66 : f32 to vector<16x128xf32>
    %246 = arith.addf %245, %244 : vector<16x128xf32>
    %247 = arith.divf %245, %246 : vector<16x128xf32>
    %248 = vector.extract_strided_slice %235 {offsets = [0, 256], sizes = [16, 128], strides = [1, 1]} : vector<16x512xf32> to vector<16x128xf32>
    %249 = math.tanh %248 : vector<16x128xf32>
    %250 = vector.extract_strided_slice %235 {offsets = [0, 384], sizes = [16, 128], strides = [1, 1]} : vector<16x512xf32> to vector<16x128xf32>
    %251 = arith.negf %250 : vector<16x128xf32>
    %252 = math.exp %251 : vector<16x128xf32>
    %cst_67 = arith.constant 1.000000e+00 : f32
    %253 = vector.broadcast %cst_67 : f32 to vector<16x128xf32>
    %254 = arith.addf %253, %252 : vector<16x128xf32>
    %255 = arith.divf %253, %254 : vector<16x128xf32>
    %256 = arith.mulf %247, %226 : vector<16x128xf32>
    %257 = arith.mulf %241, %249 : vector<16x128xf32>
    %258 = arith.addf %256, %257 : vector<16x128xf32>
    %259 = math.tanh %258 : vector<16x128xf32>
    %260 = arith.mulf %255, %259 : vector<16x128xf32>
    %c8_i32 = arith.constant 8 : i32
    %c0_68 = arith.constant 0 : index
    %c0_69 = arith.constant 0 : index
    %261 = vector.load %arg6[%c0_68, %c0_69] : memref<16x128xf32, #tpu.memory_space<vmem>>, vector<16x128xf32>
    tpu.vector_store %arg6[%c0_68, %c0_69], %260 {strides = array<i32>} : memref<16x128xf32, #tpu.memory_space<vmem>>, vector<16x128xf32>,
    %c0_70 = arith.constant 0 : index
    %c0_71 = arith.constant 0 : index
    %262 = vector.load %arg7[%c0_70, %c0_71] : memref<16x128xf32, #tpu.memory_space<vmem>>, vector<16x128xf32>
    tpu.vector_store %arg7[%c0_70, %c0_71], %258 {strides = array<i32>} : memref<16x128xf32, #tpu.memory_space<vmem>>, vector<16x128xf32>,
    %c0_i32_72 = arith.constant 0 : i32
    %263 = arith.cmpi eq, %arg0, %c0_i32_72 : i32
    %264 = arith.extui %263 : i1 to i32
    %c0_i32_73 = arith.constant 0 : i32
    %265 = arith.cmpi ne, %264, %c0_i32_73 : i32
    scf.if %265 {
      %266 = arith.truncf %260 : vector<16x128xf32> to vector<16x128xbf16>
      %c0_74 = arith.constant 0 : index
      %c0_75 = arith.constant 0 : index
      %267 = vector.load %arg3[%c0_74, %c0_75] : memref<128x4xbf16, #tpu.memory_space<vmem>>, vector<128x4xbf16>
      %cst_76 = arith.constant dense<0.000000e+00> : vector<16x4xf32>
      %268 = tpu.matmul %266, %267, %cst_76 {dimension_numbers = #tpu.dot_dimension_numbers<[1], [0], [0], [1], [0, 0, 1, 1], [], []>} : vector<16x128xbf16>, vector<128x4xbf16>, vector<16x4xf32> -> vector<16x4xf32>
      %c0_77 = arith.constant 0 : index
      %c0_78 = arith.constant 0 : index
      %269 = vector.load %arg4[%c0_77, %c0_78] : memref<1x4xf32, #tpu.memory_space<vmem>>, vector<1x4xf32>
      %270 = vector.broadcast %269 : vector<1x4xf32> to vector<16x4xf32>
      %271 = arith.addf %268, %270 : vector<16x4xf32>
      %c0_79 = arith.constant 0 : index
      %c0_80 = arith.constant 0 : index
      %272 = vector.load %arg5[%c0_79, %c0_80] : memref<16x4xf32, #tpu.memory_space<vmem>>, vector<16x4xf32>
      tpu.vector_store %arg5[%c0_79, %c0_80], %271 {strides = array<i32>} : memref<16x4xf32, #tpu.memory_space<vmem>>, vector<16x4xf32>,
    } else {
    }
    return
  }
  func.func @transform_0(%arg0: i32) -> (i32, i32, i32) {
    %c0_i32 = arith.constant 0 : i32
    %c0_i32_0 = arith.constant 0 : i32
    %c0_i32_1 = arith.constant 0 : i32
    return %arg0, %c0_i32, %c0_i32_0 : i32, i32, i32
  }
  func.func @transform_1(%arg0: i32) -> (i32, i32) {
    %c0_i32 = arith.constant 0 : i32
    %c0_i32_0 = arith.constant 0 : i32
    %c0_i32_1 = arith.constant 0 : i32
    return %c0_i32, %c0_i32_0 : i32, i32
  }
  func.func @transform_2(%arg0: i32) -> (i32, i32) {
    %c0_i32 = arith.constant 0 : i32
    %c0_i32_0 = arith.constant 0 : i32
    %c0_i32_1 = arith.constant 0 : i32
    return %c0_i32, %c0_i32_0 : i32, i32
  }
  func.func @transform_3(%arg0: i32) -> (i32, i32) {
    %c0_i32 = arith.constant 0 : i32
    %c0_i32_0 = arith.constant 0 : i32
    %c0_i32_1 = arith.constant 0 : i32
    return %c0_i32, %c0_i32_0 : i32, i32
  }
  func.func @transform_4(%arg0: i32) -> (i32, i32) {
    %c0_i32 = arith.constant 0 : i32
    %c0_i32_0 = arith.constant 0 : i32
    %c0_i32_1 = arith.constant 0 : i32
    return %c0_i32, %c0_i32_0 : i32, i32
  }
}

</mosaic_0001>

<llo_original>
// kernel: deep_lstm_forward.4
$region0: #{deep_lstm_forward.4}
  #allocation0 [shape = 'u32[]', space=smem, size = 0x4, offset = 0x4, fixed_abs, tag = 'smem constant byte address 0x4 - core index']
  #allocation1 [shape = 'u32[144,128]{1,0:T(1,128)}', space=vmem, size = 0x12000, scoped, tag = 'internal scratch']
  %s0 = inlined_call_operand.vmem [shape: bf16[8,16,8], index: 0, kind: input, shape index: {}]
  %s1 = inlined_call_operand.vmem [shape: bf16[8,512], index: 1, kind: input, shape index: {}]
  %s2 = inlined_call_operand.vmem [shape: f32[1,512], index: 2, kind: input, shape index: {}]
  %s3 = inlined_call_operand.vmem [shape: f32[8,16,512], index: 3, kind: output, shape index: {}]
  %s4 = sld [smem:[#allocation0]]
  $region22: #{deep_lstm_forward.4} parent=0
    _
  %s6 = ssub.s32 1, %s4
  %s7 = scalar_select 0, %s6, %s4
  // Predicated region
  $region2: #{deep_lstm_forward.4} parent=0 // pred_check
    _
  $region3: #{deep_lstm_forward.4} parent=0 // pred_check_branch
    %9 = sbr.rel (0) target = $region5
  $region4: #{deep_lstm_forward.4} parent=0 // pred_region
    _
  $region5: #{deep_lstm_forward.4} parent=0 // pred_fallthru
    _
  // Predicated region
  $region6: #{deep_lstm_forward.4} parent=0 // pred_check
    _
  $region7: #{deep_lstm_forward.4} parent=0 // pred_check_branch
    %11 = sbr.rel (0) target = $region9
  $region8: #{deep_lstm_forward.4} parent=0 // pred_region
    _
  $region9: #{deep_lstm_forward.4} parent=0 // pred_fallthru
    _
  // Predicated region
  $region10: #{deep_lstm_forward.4} parent=0 // pred_check
    _
  $region11: #{deep_lstm_forward.4} parent=0 // pred_check_branch
    %13 = sbr.rel (0) target = $region13
  $region12: #{deep_lstm_forward.4} parent=0 // pred_region
    _
  $region13: #{deep_lstm_forward.4} parent=0 // pred_fallthru
    _
  %v15 = vld [vmem:[%s0] sm:$0xf]
  %v16 = vld [vmem:[%s0 + $0x4] sm:$0xf]
  %v17 = vld [vmem:[%s0 + $0x8] sm:$0xf]
  %v18 = vld [vmem:[%s0 + $0xc] sm:$0xf]
  %v19 = vld [vmem:[%s0 + $0x10] sm:$0xf]
  %v20 = vld [vmem:[%s0 + $0x14] sm:$0xf]
  %v21 = vld [vmem:[%s0 + $0x18] sm:$0xf]
  %v22 = vld [vmem:[%s0 + $0x1c] sm:$0xf]
  %v23 = vld [vmem:[%s0 + $0x20] sm:$0xf]
  %v24 = vld [vmem:[%s0 + $0x24] sm:$0xf]
  %v25 = vld [vmem:[%s0 + $0x28] sm:$0xf]
  %v26 = vld [vmem:[%s0 + $0x2c] sm:$0xf]
  %v27 = vld [vmem:[%s0 + $0x30] sm:$0xf]
  %v28 = vld [vmem:[%s0 + $0x34] sm:$0xf]
  %v29 = vld [vmem:[%s0 + $0x38] sm:$0xf]
  %v30 = vld [vmem:[%s0 + $0x3c] sm:$0xf]
  %v31 = vld [vmem:[%s1] sm:$0xff]
  %v32 = vld [vmem:[%s1 + $0x8] sm:$0xff]
  %v33 = vld [vmem:[%s2] sm:$0xf]
  %v35 = vlaneseq
  %v36 = vshrl.u32 %v35, 7
  %v37 = vsub.s32 0, %v36
  %v38 = vrot.slane %v33, %v37
  %v39 = vlaneseq
  %v40 = vshrl.u32 %v39, 7
  %v41 = vsub.s32 1, %v40
  %v42 = vrot.slane %v33, %v41
  %v43 = vlaneseq
  %v44 = vshrl.u32 %v43, 7
  %v45 = vsub.s32 2, %v44
  %v46 = vrot.slane %v33, %v45
  %v47 = vlaneseq
  %v48 = vshrl.u32 %v47, 7
  %v49 = vsub.s32 3, %v48
  %v50 = vrot.slane %v33, %v49
  %v71 = vunpack.c.l.b16 %v15
  %v72 = vunpack.c.l.b16 %v16
  %v73 = vunpack.c.l.b16 %v17
  %v74 = vunpack.c.l.b16 %v18
  %v75 = vunpack.c.l.b16 %v19
  %v76 = vunpack.c.l.b16 %v20
  %v77 = vunpack.c.l.b16 %v21
  %v78 = vunpack.c.l.b16 %v22
  %v79 = vunpack.c.l.b16 %v23
  %v80 = vunpack.c.l.b16 %v24
  %v81 = vunpack.c.l.b16 %v25
  %v82 = vunpack.c.l.b16 %v26
  %v83 = vunpack.c.l.b16 %v27
  %v84 = vunpack.c.l.b16 %v28
  %v85 = vunpack.c.l.b16 %v29
  %v86 = vunpack.c.l.b16 %v30
  %v87 = vpack.c.b16 %v72, %v71
  %v88 = vpack.c.b16 %v74, %v73
  %v89 = vpack.c.b16 %v76, %v75
  %v90 = vpack.c.b16 %v78, %v77
  %v91 = vpack.c.b16 %v80, %v79
  %v92 = vpack.c.b16 %v82, %v81
  %v93 = vpack.c.b16 %v84, %v83
  %v94 = vpack.c.b16 %v86, %v85
  %v97 = vunpack.c.l.b16 %v31
  %v98 = vunpack.c.h.b16 %v31
  %v99 = vunpack.c.l.b16 %v32
  %v100 = vunpack.c.h.b16 %v32
  %v101 = vpack.c.b16 %v97, %v97
  %v102 = vpack.c.b16 %v98, %v98
  %v103 = vpack.c.b16 %v99, %v99
  %v104 = vpack.c.b16 %v100, %v100
  %vm105 = vcmask 64512
  %v107 = vsel %vm105, %v87, 0
  %v110 = vsel %vm105, %v88, 0
  %v113 = vsel %vm105, %v89, 0
  %v116 = vsel %vm105, %v90, 0
  %v119 = vsel %vm105, %v91, 0
  %v122 = vsel %vm105, %v92, 0
  %v125 = vsel %vm105, %v93, 0
  %v128 = vsel %vm105, %v94, 0
  %vm130 = vcmask 1043456
  %v132 = vsel %vm130, %v101, 0
  %v135 = vsel %vm130, %v102, 0
  %v138 = vsel %vm130, %v103, 0
  %v141 = vsel %vm130, %v104, 0
  %143 = vmatprep.subr.bf16.mxu0 %v135
  %144 = vmatpush1.bf16.msra.mxu0 %v132
  %145 = vmatprep.subr.bf16.mxu0 0
  %146 = vmatpush1.bf16.msra.mxu0 0
  %147 = vmatprep.subr.bf16.mxu0 0
  %148 = vmatpush1.bf16.msra.mxu0 0
  %149 = vmatprep.subr.bf16.mxu0 0
  %150 = vmatpush1.bf16.msra.mxu0 0
  %151 = vmatprep.subr.bf16.mxu0 0
  %152 = vmatpush1.bf16.msra.mxu0 0
  %153 = vmatprep.subr.bf16.mxu0 0
  %154 = vmatpush1.bf16.msra.mxu0 0
  %155 = vmatprep.subr.bf16.mxu0 0
  %156 = vmatpush1.bf16.msra.mxu0 0
  %157 = vmatprep.subr.bf16.mxu0 0
  %158 = vmatpush1.bf16.msra.mxu0 0
  %159 = vmatprep.subr.bf16.mxu0 0
  %160 = vmatpush1.bf16.msra.mxu0 0
  %161 = vmatprep.subr.bf16.mxu0 0
  %162 = vmatpush1.bf16.msra.mxu0 0
  %163 = vmatprep.subr.bf16.mxu0 0
  %164 = vmatpush1.bf16.msra.mxu0 0
  %165 = vmatprep.subr.bf16.mxu0 0
  %166 = vmatpush1.bf16.msra.mxu0 0
  %167 = vmatprep.subr.bf16.mxu0 0
  %168 = vmatpush1.bf16.msra.mxu0 0
  %169 = vmatprep.subr.bf16.mxu0 0
  %170 = vmatpush1.bf16.msra.mxu0 0
  %171 = vmatprep.subr.bf16.mxu0 0
  %172 = vmatpush1.bf16.msra.mxu0 0
  %173 = vmatprep.subr.bf16.mxu0 0
  %174 = vmatpush1.bf16.msra.mxu0 0
  %175 = vmatprep.mubr.bf16.mxu0 0
  %176 = vmatmul.mubr.bf16.gmra.mrb[0].mxu0 %v107
  %v177 = vpop.f32.mrb[0].mxu0
  %v178 = vadd.f32 %v38, %v177
  %v179 = vpop.f32.mrb[0].mxu0
  %v180 = vadd.f32 %v42, %v179
  %v181 = vpop.f32.mrb[0].mxu0
  %v182 = vadd.f32 %v38, %v181
  %v183 = vpop.f32.mrb[0].mxu0
  %v184 = vadd.f32 %v42, %v183
  %185 = vmatprep.mubr.bf16.mxu0 0
  %186 = vmatmul.mubr.bf16.gmra.mrb[0].mxu0 %v110
  %v187 = vpop.f32.mrb[0].mxu0
  %v188 = vadd.f32 %v38, %v187
  %v189 = vpop.f32.mrb[0].mxu0
  %v190 = vadd.f32 %v42, %v189
  %v191 = vpop.f32.mrb[0].mxu0
  %v192 = vadd.f32 %v38, %v191
  %v193 = vpop.f32.mrb[0].mxu0
  %v194 = vadd.f32 %v42, %v193
  %195 = vmatprep.mubr.bf16.mxu0 0
  %196 = vmatmul.mubr.bf16.gmra.mrb[0].mxu0 %v113
  %v197 = vpop.f32.mrb[0].mxu0
  %v198 = vadd.f32 %v38, %v197
  %v199 = vpop.f32.mrb[0].mxu0
  %v200 = vadd.f32 %v42, %v199
  %v201 = vpop.f32.mrb[0].mxu0
  %v202 = vadd.f32 %v38, %v201
  %v203 = vpop.f32.mrb[0].mxu0
  %v204 = vadd.f32 %v42, %v203
  %205 = vmatprep.mubr.bf16.mxu0 0
  %206 = vmatmul.mubr.bf16.gmra.mrb[0].mxu0 %v116
  %v207 = vpop.f32.mrb[0].mxu0
  %v208 = vadd.f32 %v38, %v207
  %v209 = vpop.f32.mrb[0].mxu0
  %v210 = vadd.f32 %v42, %v209
  %v211 = vpop.f32.mrb[0].mxu0
  %v212 = vadd.f32 %v38, %v211
  %v213 = vpop.f32.mrb[0].mxu0
  %v214 = vadd.f32 %v42, %v213
  %215 = vmatprep.mubr.bf16.mxu0 0
  %216 = vmatmul.mubr.bf16.gmra.mrb[0].mxu0 %v119
  %v217 = vpop.f32.mrb[0].mxu0
  %v218 = vadd.f32 %v38, %v217
  %v219 = vpop.f32.mrb[0].mxu0
  %v220 = vadd.f32 %v42, %v219
  %v221 = vpop.f32.mrb[0].mxu0
  %v222 = vadd.f32 %v38, %v221
  %v223 = vpop.f32.mrb[0].mxu0
  %v224 = vadd.f32 %v42, %v223
  %225 = vmatprep.mubr.bf16.mxu0 0
  %226 = vmatmul.mubr.bf16.gmra.mrb[0].mxu0 %v122
  %v227 = vpop.f32.mrb[0].mxu0
  %v228 = vadd.f32 %v38, %v227
  %v229 = vpop.f32.mrb[0].mxu0
  %v230 = vadd.f32 %v42, %v229
  %v231 = vpop.f32.mrb[0].mxu0
  %v232 = vadd.f32 %v38, %v231
  %v233 = vpop.f32.mrb[0].mxu0
  %v234 = vadd.f32 %v42, %v233
  %235 = vmatprep.mubr.bf16.mxu0 0
  %236 = vmatmul.mubr.bf16.gmra.mrb[0].mxu0 %v125
  %v237 = vpop.f32.mrb[0].mxu0
  %v238 = vadd.f32 %v38, %v237
  %v239 = vpop.f32.mrb[0].mxu0
  %v240 = vadd.f32 %v42, %v239
  %v241 = vpop.f32.mrb[0].mxu0
  %v242 = vadd.f32 %v38, %v241
  %v243 = vpop.f32.mrb[0].mxu0
  %v244 = vadd.f32 %v42, %v243
  %245 = vmatprep.mubr.bf16.mxu0 0
  %246 = vmatmul.mubr.bf16.gmra.mrb[0].mxu0 %v128
  %v247 = vpop.f32.mrb[0].mxu0
  %v248 = vadd.f32 %v38, %v247
  %v249 = vpop.f32.mrb[0].mxu0
  %v250 = vadd.f32 %v42, %v249
  %v251 = vpop.f32.mrb[0].mxu0
  %v252 = vadd.f32 %v38, %v251
  %v253 = vpop.f32.mrb[0].mxu0
  %v254 = vadd.f32 %v42, %v253
  %255 = vdwg.mxu0
  %256 = vmatprep.subr.bf16.mxu0 %v141
  %257 = vmatpush1.bf16.msra.mxu0 %v138
  %258 = vmatprep.subr.bf16.mxu0 0
  %259 = vmatpush1.bf16.msra.mxu0 0
  %260 = vmatprep.subr.bf16.mxu0 0
  %261 = vmatpush1.bf16.msra.mxu0 0
  %262 = vmatprep.subr.bf16.mxu0 0
  %263 = vmatpush1.bf16.msra.mxu0 0
  %264 = vmatprep.subr.bf16.mxu0 0
  %265 = vmatpush1.bf16.msra.mxu0 0
  %266 = vmatprep.subr.bf16.mxu0 0
  %267 = vmatpush1.bf16.msra.mxu0 0
  %268 = vmatprep.subr.bf16.mxu0 0
  %269 = vmatpush1.bf16.msra.mxu0 0
  %270 = vmatprep.subr.bf16.mxu0 0
  %271 = vmatpush1.bf16.msra.mxu0 0
  %272 = vmatprep.subr.bf16.mxu0 0
  %273 = vmatpush1.bf16.msra.mxu0 0
  %274 = vmatprep.subr.bf16.mxu0 0
  %275 = vmatpush1.bf16.msra.mxu0 0
  %276 = vmatprep.subr.bf16.mxu0 0
  %277 = vmatpush1.bf16.msra.mxu0 0
  %278 = vmatprep.subr.bf16.mxu0 0
  %279 = vmatpush1.bf16.msra.mxu0 0
  %280 = vmatprep.subr.bf16.mxu0 0
  %281 = vmatpush1.bf16.msra.mxu0 0
  %282 = vmatprep.subr.bf16.mxu0 0
  %283 = vmatpush1.bf16.msra.mxu0 0
  %284 = vmatprep.subr.bf16.mxu0 0
  %285 = vmatpush1.bf16.msra.mxu0 0
  %286 = vmatprep.subr.bf16.mxu0 0
  %287 = vmatpush1.bf16.msra.mxu0 0
  %288 = vmatprep.mubr.bf16.mxu0 0
  %289 = vmatmul.mubr.bf16.gmra.mrb[0].mxu0 %v107
  %v290 = vpop.f32.mrb[0].mxu0
  %v291 = vadd.f32 %v46, %v290
  %v292 = vpop.f32.mrb[0].mxu0
  %v293 = vadd.f32 %v50, %v292
  %v294 = vpop.f32.mrb[0].mxu0
  %v295 = vadd.f32 %v46, %v294
  %v296 = vpop.f32.mrb[0].mxu0
  %v297 = vadd.f32 %v50, %v296
  %298 = vmatprep.mubr.bf16.mxu0 0
  %299 = vmatmul.mubr.bf16.gmra.mrb[0].mxu0 %v110
  %v300 = vpop.f32.mrb[0].mxu0
  %v301 = vadd.f32 %v46, %v300
  %v302 = vpop.f32.mrb[0].mxu0
  %v303 = vadd.f32 %v50, %v302
  %v304 = vpop.f32.mrb[0].mxu0
  %v305 = vadd.f32 %v46, %v304
  %v306 = vpop.f32.mrb[0].mxu0
  %v307 = vadd.f32 %v50, %v306
  %308 = vmatprep.mubr.bf16.mxu0 0
  %309 = vmatmul.mubr.bf16.gmra.mrb[0].mxu0 %v113
  %v310 = vpop.f32.mrb[0].mxu0
  %v311 = vadd.f32 %v46, %v310
  %v312 = vpop.f32.mrb[0].mxu0
  %v313 = vadd.f32 %v50, %v312
  %v314 = vpop.f32.mrb[0].mxu0
  %v315 = vadd.f32 %v46, %v314
  %v316 = vpop.f32.mrb[0].mxu0
  %v317 = vadd.f32 %v50, %v316
  %318 = vmatprep.mubr.bf16.mxu0 0
  %319 = vmatmul.mubr.bf16.gmra.mrb[0].mxu0 %v116
  %v320 = vpop.f32.mrb[0].mxu0
  %v321 = vadd.f32 %v46, %v320
  %v322 = vpop.f32.mrb[0].mxu0
  %v323 = vadd.f32 %v50, %v322
  %v324 = vpop.f32.mrb[0].mxu0
  %v325 = vadd.f32 %v46, %v324
  %v326 = vpop.f32.mrb[0].mxu0
  %v327 = vadd.f32 %v50, %v326
  %328 = vmatprep.mubr.bf16.mxu0 0
  %329 = vmatmul.mubr.bf16.gmra.mrb[0].mxu0 %v119
  %v330 = vpop.f32.mrb[0].mxu0
  %v331 = vadd.f32 %v46, %v330
  %v332 = vpop.f32.mrb[0].mxu0
  %v333 = vadd.f32 %v50, %v332
  %v334 = vpop.f32.mrb[0].mxu0
  %v335 = vadd.f32 %v46, %v334
  %v336 = vpop.f32.mrb[0].mxu0
  %v337 = vadd.f32 %v50, %v336
  %338 = vmatprep.mubr.bf16.mxu0 0
  %339 = vmatmul.mubr.bf16.gmra.mrb[0].mxu0 %v122
  %v340 = vpop.f32.mrb[0].mxu0
  %v341 = vadd.f32 %v46, %v340
  %v342 = vpop.f32.mrb[0].mxu0
  %v343 = vadd.f32 %v50, %v342
  %v344 = vpop.f32.mrb[0].mxu0
  %v345 = vadd.f32 %v46, %v344
  %v346 = vpop.f32.mrb[0].mxu0
  %v347 = vadd.f32 %v50, %v346
  %348 = vmatprep.mubr.bf16.mxu0 0
  %349 = vmatmul.mubr.bf16.gmra.mrb[0].mxu0 %v125
  %v350 = vpop.f32.mrb[0].mxu0
  %v351 = vadd.f32 %v46, %v350
  %v352 = vpop.f32.mrb[0].mxu0
  %v353 = vadd.f32 %v50, %v352
  %v354 = vpop.f32.mrb[0].mxu0
  %v355 = vadd.f32 %v46, %v354
  %v356 = vpop.f32.mrb[0].mxu0
  %v357 = vadd.f32 %v50, %v356
  %358 = vmatprep.mubr.bf16.mxu0 0
  %359 = vmatmul.mubr.bf16.gmra.mrb[0].mxu0 %v128
  %v360 = vpop.f32.mrb[0].mxu0
  %v361 = vadd.f32 %v46, %v360
  %v362 = vpop.f32.mrb[0].mxu0
  %v363 = vadd.f32 %v50, %v362
  %v364 = vpop.f32.mrb[0].mxu0
  %v365 = vadd.f32 %v46, %v364
  %v366 = vpop.f32.mrb[0].mxu0
  %v367 = vadd.f32 %v50, %v366
  %368 = vdwg.mxu0
  %369 = vst [vmem:[%s3] sm:$0xff] %v178
  %370 = vst [vmem:[%s3 + $0x8] sm:$0xff] %v180
  %371 = vst [vmem:[%s3 + $0x10] sm:$0xff] %v291
  %372 = vst [vmem:[%s3 + $0x18] sm:$0xff] %v293
  %373 = vst [vmem:[%s3 + $0x20] sm:$0xff] %v182
  %374 = vst [vmem:[%s3 + $0x28] sm:$0xff] %v184
  %375 = vst [vmem:[%s3 + $0x30] sm:$0xff] %v295
  %376 = vst [vmem:[%s3 + $0x38] sm:$0xff] %v297
  %377 = vst [vmem:[%s3 + $0x40] sm:$0xff] %v188
  %378 = vst [vmem:[%s3 + $0x48] sm:$0xff] %v190
  %379 = vst [vmem:[%s3 + $0x50] sm:$0xff] %v301
  %380 = vst [vmem:[%s3 + $0x58] sm:$0xff] %v303
  %381 = vst [vmem:[%s3 + $0x60] sm:$0xff] %v192
  %382 = vst [vmem:[%s3 + $0x68] sm:$0xff] %v194
  %383 = vst [vmem:[%s3 + $0x70] sm:$0xff] %v305
  %384 = vst [vmem:[%s3 + $0x78] sm:$0xff] %v307
  %385 = vst [vmem:[%s3 + $0x80] sm:$0xff] %v198
  %386 = vst [vmem:[%s3 + $0x88] sm:$0xff] %v200
  %387 = vst [vmem:[%s3 + $0x90] sm:$0xff] %v311
  %388 = vst [vmem:[%s3 + $0x98] sm:$0xff] %v313
  %389 = vst [vmem:[%s3 + $0xa0] sm:$0xff] %v202
  %390 = vst [vmem:[%s3 + $0xa8] sm:$0xff] %v204
  %391 = vst [vmem:[%s3 + $0xb0] sm:$0xff] %v315
  %392 = vst [vmem:[%s3 + $0xb8] sm:$0xff] %v317
  %393 = vst [vmem:[%s3 + $0xc0] sm:$0xff] %v208
  %394 = vst [vmem:[%s3 + $0xc8] sm:$0xff] %v210
  %395 = vst [vmem:[%s3 + $0xd0] sm:$0xff] %v321
  %396 = vst [vmem:[%s3 + $0xd8] sm:$0xff] %v323
  %397 = vst [vmem:[%s3 + $0xe0] sm:$0xff] %v212
  %398 = vst [vmem:[%s3 + $0xe8] sm:$0xff] %v214
  %399 = vst [vmem:[%s3 + $0xf0] sm:$0xff] %v325
  %400 = vst [vmem:[%s3 + $0xf8] sm:$0xff] %v327
  %401 = vst [vmem:[%s3 + $0x100] sm:$0xff] %v218
  %402 = vst [vmem:[%s3 + $0x108] sm:$0xff] %v220
  %403 = vst [vmem:[%s3 + $0x110] sm:$0xff] %v331
  %404 = vst [vmem:[%s3 + $0x118] sm:$0xff] %v333
  %405 = vst [vmem:[%s3 + $0x120] sm:$0xff] %v222
  %406 = vst [vmem:[%s3 + $0x128] sm:$0xff] %v224
  %407 = vst [vmem:[%s3 + $0x130] sm:$0xff] %v335
  %408 = vst [vmem:[%s3 + $0x138] sm:$0xff] %v337
  %409 = vst [vmem:[%s3 + $0x140] sm:$0xff] %v228
  %410 = vst [vmem:[%s3 + $0x148] sm:$0xff] %v230
  %411 = vst [vmem:[%s3 + $0x150] sm:$0xff] %v341
  %412 = vst [vmem:[%s3 + $0x158] sm:$0xff] %v343
  %413 = vst [vmem:[%s3 + $0x160] sm:$0xff] %v232
  %414 = vst [vmem:[%s3 + $0x168] sm:$0xff] %v234
  %415 = vst [vmem:[%s3 + $0x170] sm:$0xff] %v345
  %416 = vst [vmem:[%s3 + $0x178] sm:$0xff] %v347
  %417 = vst [vmem:[%s3 + $0x180] sm:$0xff] %v238
  %418 = vst [vmem:[%s3 + $0x188] sm:$0xff] %v240
  %419 = vst [vmem:[%s3 + $0x190] sm:$0xff] %v351
  %420 = vst [vmem:[%s3 + $0x198] sm:$0xff] %v353
  %421 = vst [vmem:[%s3 + $0x1a0] sm:$0xff] %v242
  %422 = vst [vmem:[%s3 + $0x1a8] sm:$0xff] %v244
  %423 = vst [vmem:[%s3 + $0x1b0] sm:$0xff] %v355
  %424 = vst [vmem:[%s3 + $0x1b8] sm:$0xff] %v357
  %425 = vst [vmem:[%s3 + $0x1c0] sm:$0xff] %v248
  %426 = vst [vmem:[%s3 + $0x1c8] sm:$0xff] %v250
  %427 = vst [vmem:[%s3 + $0x1d0] sm:$0xff] %v361
  %428 = vst [vmem:[%s3 + $0x1d8] sm:$0xff] %v363
  %429 = vst [vmem:[%s3 + $0x1e0] sm:$0xff] %v252
  %430 = vst [vmem:[%s3 + $0x1e8] sm:$0xff] %v254
  %431 = vst [vmem:[%s3 + $0x1f0] sm:$0xff] %v365
  %432 = vst [vmem:[%s3 + $0x1f8] sm:$0xff] %v367
  // Predicated region
  $region14: #{deep_lstm_forward.4} parent=0 // pred_check
    _
  $region15: #{deep_lstm_forward.4} parent=0 // pred_check_branch
    %434 = sbr.rel (0) target = $region17
  $region16: #{deep_lstm_forward.4} parent=0 // pred_region
    _
  $region17: #{deep_lstm_forward.4} parent=0 // pred_fallthru
    _
  // Predicated region
  $region18: #{deep_lstm_forward.4} parent=0 // pred_check
    _
  $region19: #{deep_lstm_forward.4} parent=0 // pred_check_branch
    %436 = sbr.rel (0) target = $region21
  $region20: #{deep_lstm_forward.4} parent=0 // pred_region
    _
  $region21: #{deep_lstm_forward.4} parent=0 // pred_fallthru
    _

// kernel: deep_lstm_forward.6
$region0: #{deep_lstm_forward.6}
  #allocation0 [shape = 'u32[]', space=smem, size = 0x4, offset = 0x4, fixed_abs, tag = 'smem constant byte address 0x4 - core index']
  #allocation1 [shape = 'u32[144,128]{1,0:T(1,128)}', space=vmem, size = 0x12000, scoped, tag = 'internal scratch']
  %s0 = inlined_call_operand.vmem [shape: bf16[8,16,128], index: 0, kind: input, shape index: {}]
  %s1 = inlined_call_operand.vmem [shape: bf16[128,512], index: 1, kind: input, shape index: {}]
  %s2 = inlined_call_operand.vmem [shape: f32[1,512], index: 2, kind: input, shape index: {}]
  %s3 = inlined_call_operand.vmem [shape: f32[8,16,512], index: 3, kind: output, shape index: {}]
  %s4 = sld [smem:[#allocation0]]
  $region22: #{deep_lstm_forward.6} parent=0
    _
  %s6 = ssub.s32 1, %s4
  %s7 = scalar_select 0, %s6, %s4
  // Predicated region
  $region2: #{deep_lstm_forward.6} parent=0 // pred_check
    _
  $region3: #{deep_lstm_forward.6} parent=0 // pred_check_branch
    %9 = sbr.rel (0) target = $region5
  $region4: #{deep_lstm_forward.6} parent=0 // pred_region
    _
  $region5: #{deep_lstm_forward.6} parent=0 // pred_fallthru
    _
  // Predicated region
  $region6: #{deep_lstm_forward.6} parent=0 // pred_check
    _
  $region7: #{deep_lstm_forward.6} parent=0 // pred_check_branch
    %11 = sbr.rel (0) target = $region9
  $region8: #{deep_lstm_forward.6} parent=0 // pred_region
    _
  $region9: #{deep_lstm_forward.6} parent=0 // pred_fallthru
    _
  // Predicated region
  $region10: #{deep_lstm_forward.6} parent=0 // pred_check
    _
  $region11: #{deep_lstm_forward.6} parent=0 // pred_check_branch
    %13 = sbr.rel (0) target = $region13
  $region12: #{deep_lstm_forward.6} parent=0 // pred_region
    _
  $region13: #{deep_lstm_forward.6} parent=0 // pred_fallthru
    _
  %v15 = vld [vmem:[%s0] sm:$0xf]
  %v16 = vld [vmem:[%s0 + $0x4] sm:$0xf]
  %v17 = vld [vmem:[%s0 + $0x8] sm:$0xf]
  %v18 = vld [vmem:[%s0 + $0xc] sm:$0xf]
  %v19 = vld [vmem:[%s0 + $0x10] sm:$0xf]
  %v20 = vld [vmem:[%s0 + $0x14] sm:$0xf]
  %v21 = vld [vmem:[%s0 + $0x18] sm:$0xf]
  %v22 = vld [vmem:[%s0 + $0x1c] sm:$0xf]
  %v23 = vld [vmem:[%s0 + $0x20] sm:$0xf]
  %v24 = vld [vmem:[%s0 + $0x24] sm:$0xf]
  %v25 = vld [vmem:[%s0 + $0x28] sm:$0xf]
  %v26 = vld [vmem:[%s0 + $0x2c] sm:$0xf]
  %v27 = vld [vmem:[%s0 + $0x30] sm:$0xf]
  %v28 = vld [vmem:[%s0 + $0x34] sm:$0xf]
  %v29 = vld [vmem:[%s0 + $0x38] sm:$0xf]
  %v30 = vld [vmem:[%s0 + $0x3c] sm:$0xf]
  %v31 = vld [vmem:[%s1] sm:$0xff]
  %v32 = vld [vmem:[%s1 + $0x8] sm:$0xff]
  %v33 = vld [vmem:[%s1 + $0x10] sm:$0xff]
  %v34 = vld [vmem:[%s1 + $0x18] sm:$0xff]
  %v35 = vld [vmem:[%s1 + $0x20] sm:$0xff]
  %v36 = vld [vmem:[%s1 + $0x28] sm:$0xff]
  %v37 = vld [vmem:[%s1 + $0x30] sm:$0xff]
  %v38 = vld [vmem:[%s1 + $0x38] sm:$0xff]
  %v39 = vld [vmem:[%s1 + $0x40] sm:$0xff]
  %v40 = vld [vmem:[%s1 + $0x48] sm:$0xff]
  %v41 = vld [vmem:[%s1 + $0x50] sm:$0xff]
  %v42 = vld [vmem:[%s1 + $0x58] sm:$0xff]
  %v43 = vld [vmem:[%s1 + $0x60] sm:$0xff]
  %v44 = vld [vmem:[%s1 + $0x68] sm:$0xff]
  %v45 = vld [vmem:[%s1 + $0x70] sm:$0xff]
  %v46 = vld [vmem:[%s1 + $0x78] sm:$0xff]
  %v47 = vld [vmem:[%s1 + $0x80] sm:$0xff]
  %v48 = vld [vmem:[%s1 + $0x88] sm:$0xff]
  %v49 = vld [vmem:[%s1 + $0x90] sm:$0xff]
  %v50 = vld [vmem:[%s1 + $0x98] sm:$0xff]
  %v51 = vld [vmem:[%s1 + $0xa0] sm:$0xff]
  %v52 = vld [vmem:[%s1 + $0xa8] sm:$0xff]
  %v53 = vld [vmem:[%s1 + $0xb0] sm:$0xff]
  %v54 = vld [vmem:[%s1 + $0xb8] sm:$0xff]
  %v55 = vld [vmem:[%s1 + $0xc0] sm:$0xff]
  %v56 = vld [vmem:[%s1 + $0xc8] sm:$0xff]
  %v57 = vld [vmem:[%s1 + $0xd0] sm:$0xff]
  %v58 = vld [vmem:[%s1 + $0xd8] sm:$0xff]
  %v59 = vld [vmem:[%s1 + $0xe0] sm:$0xff]
  %v60 = vld [vmem:[%s1 + $0xe8] sm:$0xff]
  %v61 = vld [vmem:[%s1 + $0xf0] sm:$0xff]
  %v62 = vld [vmem:[%s1 + $0xf8] sm:$0xff]
  %v63 = vld [vmem:[%s2] sm:$0xf]
  %v65 = vlaneseq
  %v66 = vshrl.u32 %v65, 7
  %v67 = vsub.s32 0, %v66
  %v68 = vrot.slane %v63, %v67
  %v69 = vlaneseq
  %v70 = vshrl.u32 %v69, 7
  %v71 = vsub.s32 1, %v70
  %v72 = vrot.slane %v63, %v71
  %v73 = vlaneseq
  %v74 = vshrl.u32 %v73, 7
  %v75 = vsub.s32 2, %v74
  %v76 = vrot.slane %v63, %v75
  %v77 = vlaneseq
  %v78 = vshrl.u32 %v77, 7
  %v79 = vsub.s32 3, %v78
  %v80 = vrot.slane %v63, %v79
  %v101 = vunpack.c.l.b16 %v15
  %v102 = vunpack.c.l.b16 %v16
  %v103 = vunpack.c.l.b16 %v17
  %v104 = vunpack.c.l.b16 %v18
  %v105 = vunpack.c.l.b16 %v19
  %v106 = vunpack.c.l.b16 %v20
  %v107 = vunpack.c.l.b16 %v21
  %v108 = vunpack.c.l.b16 %v22
  %v109 = vunpack.c.l.b16 %v23
  %v110 = vunpack.c.l.b16 %v24
  %v111 = vunpack.c.l.b16 %v25
  %v112 = vunpack.c.l.b16 %v26
  %v113 = vunpack.c.l.b16 %v27
  %v114 = vunpack.c.l.b16 %v28
  %v115 = vunpack.c.l.b16 %v29
  %v116 = vunpack.c.l.b16 %v30
  %v117 = vpack.c.b16 %v102, %v101
  %v118 = vpack.c.b16 %v104, %v103
  %v119 = vpack.c.b16 %v106, %v105
  %v120 = vpack.c.b16 %v108, %v107
  %v121 = vpack.c.b16 %v110, %v109
  %v122 = vpack.c.b16 %v112, %v111
  %v123 = vpack.c.b16 %v114, %v113
  %v124 = vpack.c.b16 %v116, %v115
  %v165 = vunpack.c.l.b16 %v31
  %v166 = vunpack.c.h.b16 %v31
  %v167 = vunpack.c.l.b16 %v32
  %v168 = vunpack.c.h.b16 %v32
  %v169 = vunpack.c.l.b16 %v33
  %v170 = vunpack.c.h.b16 %v33
  %v171 = vunpack.c.l.b16 %v34
  %v172 = vunpack.c.h.b16 %v34
  %v173 = vunpack.c.l.b16 %v35
  %v174 = vunpack.c.h.b16 %v35
  %v175 = vunpack.c.l.b16 %v36
  %v176 = vunpack.c.h.b16 %v36
  %v177 = vunpack.c.l.b16 %v37
  %v178 = vunpack.c.h.b16 %v37
  %v179 = vunpack.c.l.b16 %v38
  %v180 = vunpack.c.h.b16 %v38
  %v181 = vunpack.c.l.b16 %v39
  %v182 = vunpack.c.h.b16 %v39
  %v183 = vunpack.c.l.b16 %v40
  %v184 = vunpack.c.h.b16 %v40
  %v185 = vunpack.c.l.b16 %v41
  %v186 = vunpack.c.h.b16 %v41
  %v187 = vunpack.c.l.b16 %v42
  %v188 = vunpack.c.h.b16 %v42
  %v189 = vunpack.c.l.b16 %v43
  %v190 = vunpack.c.h.b16 %v43
  %v191 = vunpack.c.l.b16 %v44
  %v192 = vunpack.c.h.b16 %v44
  %v193 = vunpack.c.l.b16 %v45
  %v194 = vunpack.c.h.b16 %v45
  %v195 = vunpack.c.l.b16 %v46
  %v196 = vunpack.c.h.b16 %v46
  %v197 = vunpack.c.l.b16 %v47
  %v198 = vunpack.c.h.b16 %v47
  %v199 = vunpack.c.l.b16 %v48
  %v200 = vunpack.c.h.b16 %v48
  %v201 = vunpack.c.l.b16 %v49
  %v202 = vunpack.c.h.b16 %v49
  %v203 = vunpack.c.l.b16 %v50
  %v204 = vunpack.c.h.b16 %v50
  %v205 = vunpack.c.l.b16 %v51
  %v206 = vunpack.c.h.b16 %v51
  %v207 = vunpack.c.l.b16 %v52
  %v208 = vunpack.c.h.b16 %v52
  %v209 = vunpack.c.l.b16 %v53
  %v210 = vunpack.c.h.b16 %v53
  %v211 = vunpack.c.l.b16 %v54
  %v212 = vunpack.c.h.b16 %v54
  %v213 = vunpack.c.l.b16 %v55
  %v214 = vunpack.c.h.b16 %v55
  %v215 = vunpack.c.l.b16 %v56
  %v216 = vunpack.c.h.b16 %v56
  %v217 = vunpack.c.l.b16 %v57
  %v218 = vunpack.c.h.b16 %v57
  %v219 = vunpack.c.l.b16 %v58
  %v220 = vunpack.c.h.b16 %v58
  %v221 = vunpack.c.l.b16 %v59
  %v222 = vunpack.c.h.b16 %v59
  %v223 = vunpack.c.l.b16 %v60
  %v224 = vunpack.c.h.b16 %v60
  %v225 = vunpack.c.l.b16 %v61
  %v226 = vunpack.c.h.b16 %v61
  %v227 = vunpack.c.l.b16 %v62
  %v228 = vunpack.c.h.b16 %v62
  %v229 = vpack.c.b16 %v169, %v165
  %v230 = vpack.c.b16 %v170, %v166
  %v231 = vpack.c.b16 %v171, %v167
  %v232 = vpack.c.b16 %v172, %v168
  %v233 = vpack.c.b16 %v177, %v173
  %v234 = vpack.c.b16 %v178, %v174
  %v235 = vpack.c.b16 %v179, %v175
  %v236 = vpack.c.b16 %v180, %v176
  %v237 = vpack.c.b16 %v185, %v181
  %v238 = vpack.c.b16 %v186, %v182
  %v239 = vpack.c.b16 %v187, %v183
  %v240 = vpack.c.b16 %v188, %v184
  %v241 = vpack.c.b16 %v193, %v189
  %v242 = vpack.c.b16 %v194, %v190
  %v243 = vpack.c.b16 %v195, %v191
  %v244 = vpack.c.b16 %v196, %v192
  %v245 = vpack.c.b16 %v201, %v197
  %v246 = vpack.c.b16 %v202, %v198
  %v247 = vpack.c.b16 %v203, %v199
  %v248 = vpack.c.b16 %v204, %v200
  %v249 = vpack.c.b16 %v209, %v205
  %v250 = vpack.c.b16 %v210, %v206
  %v251 = vpack.c.b16 %v211, %v207
  %v252 = vpack.c.b16 %v212, %v208
  %v253 = vpack.c.b16 %v217, %v213
  %v254 = vpack.c.b16 %v218, %v214
  %v255 = vpack.c.b16 %v219, %v215
  %v256 = vpack.c.b16 %v220, %v216
  %v257 = vpack.c.b16 %v225, %v221
  %v258 = vpack.c.b16 %v226, %v222
  %v259 = vpack.c.b16 %v227, %v223
  %v260 = vpack.c.b16 %v228, %v224
  %293 = vmatprep.subr.bf16.mxu0 %v230
  %294 = vmatpush1.bf16.msra.mxu0 %v229
  %295 = vmatprep.subr.bf16.mxu0 %v234
  %296 = vmatpush1.bf16.msra.mxu0 %v233
  %297 = vmatprep.subr.bf16.mxu0 %v238
  %298 = vmatpush1.bf16.msra.mxu0 %v237
  %299 = vmatprep.subr.bf16.mxu0 %v242
  %300 = vmatpush1.bf16.msra.mxu0 %v241
  %301 = vmatprep.subr.bf16.mxu0 %v246
  %302 = vmatpush1.bf16.msra.mxu0 %v245
  %303 = vmatprep.subr.bf16.mxu0 %v250
  %304 = vmatpush1.bf16.msra.mxu0 %v249
  %305 = vmatprep.subr.bf16.mxu0 %v254
  %306 = vmatpush1.bf16.msra.mxu0 %v253
  %307 = vmatprep.subr.bf16.mxu0 %v258
  %308 = vmatpush1.bf16.msra.mxu0 %v257
  %309 = vmatprep.subr.bf16.mxu0 0
  %310 = vmatpush1.bf16.msra.mxu0 0
  %311 = vmatprep.subr.bf16.mxu0 0
  %312 = vmatpush1.bf16.msra.mxu0 0
  %313 = vmatprep.subr.bf16.mxu0 0
  %314 = vmatpush1.bf16.msra.mxu0 0
  %315 = vmatprep.subr.bf16.mxu0 0
  %316 = vmatpush1.bf16.msra.mxu0 0
  %317 = vmatprep.subr.bf16.mxu0 0
  %318 = vmatpush1.bf16.msra.mxu0 0
  %319 = vmatprep.subr.bf16.mxu0 0
  %320 = vmatpush1.bf16.msra.mxu0 0
  %321 = vmatprep.subr.bf16.mxu0 0
  %322 = vmatpush1.bf16.msra.mxu0 0
  %323 = vmatprep.subr.bf16.mxu0 0
  %324 = vmatpush1.bf16.msra.mxu0 0
  %325 = vmatprep.mubr.bf16.mxu0 0
  %326 = vmatmul.mubr.bf16.gmra.mrb[0].mxu0 %v117
  %v327 = vpop.f32.mrb[0].mxu0
  %v328 = vadd.f32 %v68, %v327
  %v329 = vpop.f32.mrb[0].mxu0
  %v330 = vadd.f32 %v72, %v329
  %v331 = vpop.f32.mrb[0].mxu0
  %v332 = vadd.f32 %v68, %v331
  %v333 = vpop.f32.mrb[0].mxu0
  %v334 = vadd.f32 %v72, %v333
  %335 = vmatprep.mubr.bf16.mxu0 0
  %336 = vmatmul.mubr.bf16.gmra.mrb[0].mxu0 %v118
  %v337 = vpop.f32.mrb[0].mxu0
  %v338 = vadd.f32 %v68, %v337
  %v339 = vpop.f32.mrb[0].mxu0
  %v340 = vadd.f32 %v72, %v339
  %v341 = vpop.f32.mrb[0].mxu0
  %v342 = vadd.f32 %v68, %v341
  %v343 = vpop.f32.mrb[0].mxu0
  %v344 = vadd.f32 %v72, %v343
  %345 = vmatprep.mubr.bf16.mxu0 0
  %346 = vmatmul.mubr.bf16.gmra.mrb[0].mxu0 %v119
  %v347 = vpop.f32.mrb[0].mxu0
  %v348 = vadd.f32 %v68, %v347
  %v349 = vpop.f32.mrb[0].mxu0
  %v350 = vadd.f32 %v72, %v349
  %v351 = vpop.f32.mrb[0].mxu0
  %v352 = vadd.f32 %v68, %v351
  %v353 = vpop.f32.mrb[0].mxu0
  %v354 = vadd.f32 %v72, %v353
  %355 = vmatprep.mubr.bf16.mxu0 0
  %356 = vmatmul.mubr.bf16.gmra.mrb[0].mxu0 %v120
  %v357 = vpop.f32.mrb[0].mxu0
  %v358 = vadd.f32 %v68, %v357
  %v359 = vpop.f32.mrb[0].mxu0
  %v360 = vadd.f32 %v72, %v359
  %v361 = vpop.f32.mrb[0].mxu0
  %v362 = vadd.f32 %v68, %v361
  %v363 = vpop.f32.mrb[0].mxu0
  %v364 = vadd.f32 %v72, %v363
  %365 = vmatprep.mubr.bf16.mxu0 0
  %366 = vmatmul.mubr.bf16.gmra.mrb[0].mxu0 %v121
  %v367 = vpop.f32.mrb[0].mxu0
  %v368 = vadd.f32 %v68, %v367
  %v369 = vpop.f32.mrb[0].mxu0
  %v370 = vadd.f32 %v72, %v369
  %v371 = vpop.f32.mrb[0].mxu0
  %v372 = vadd.f32 %v68, %v371
  %v373 = vpop.f32.mrb[0].mxu0
  %v374 = vadd.f32 %v72, %v373
  %375 = vmatprep.mubr.bf16.mxu0 0
  %376 = vmatmul.mubr.bf16.gmra.mrb[0].mxu0 %v122
  %v377 = vpop.f32.mrb[0].mxu0
  %v378 = vadd.f32 %v68, %v377
  %v379 = vpop.f32.mrb[0].mxu0
  %v380 = vadd.f32 %v72, %v379
  %v381 = vpop.f32.mrb[0].mxu0
  %v382 = vadd.f32 %v68, %v381
  %v383 = vpop.f32.mrb[0].mxu0
  %v384 = vadd.f32 %v72, %v383
  %385 = vmatprep.mubr.bf16.mxu0 0
  %386 = vmatmul.mubr.bf16.gmra.mrb[0].mxu0 %v123
  %v387 = vpop.f32.mrb[0].mxu0
  %v388 = vadd.f32 %v68, %v387
  %v389 = vpop.f32.mrb[0].mxu0
  %v390 = vadd.f32 %v72, %v389
  %v391 = vpop.f32.mrb[0].mxu0
  %v392 = vadd.f32 %v68, %v391
  %v393 = vpop.f32.mrb[0].mxu0
  %v394 = vadd.f32 %v72, %v393
  %395 = vmatprep.mubr.bf16.mxu0 0
  %396 = vmatmul.mubr.bf16.gmra.mrb[0].mxu0 %v124
  %v397 = vpop.f32.mrb[0].mxu0
  %v398 = vadd.f32 %v68, %v397
  %v399 = vpop.f32.mrb[0].mxu0
  %v400 = vadd.f32 %v72, %v399
  %v401 = vpop.f32.mrb[0].mxu0
  %v402 = vadd.f32 %v68, %v401
  %v403 = vpop.f32.mrb[0].mxu0
  %v404 = vadd.f32 %v72, %v403
  %405 = vdwg.mxu0
  %406 = vmatprep.subr.bf16.mxu0 %v232
  %407 = vmatpush1.bf16.msra.mxu0 %v231
  %408 = vmatprep.subr.bf16.mxu0 %v236
  %409 = vmatpush1.bf16.msra.mxu0 %v235
  %410 = vmatprep.subr.bf16.mxu0 %v240
  %411 = vmatpush1.bf16.msra.mxu0 %v239
  %412 = vmatprep.subr.bf16.mxu0 %v244
  %413 = vmatpush1.bf16.msra.mxu0 %v243
  %414 = vmatprep.subr.bf16.mxu0 %v248
  %415 = vmatpush1.bf16.msra.mxu0 %v247
  %416 = vmatprep.subr.bf16.mxu0 %v252
  %417 = vmatpush1.bf16.msra.mxu0 %v251
  %418 = vmatprep.subr.bf16.mxu0 %v256
  %419 = vmatpush1.bf16.msra.mxu0 %v255
  %420 = vmatprep.subr.bf16.mxu0 %v260
  %421 = vmatpush1.bf16.msra.mxu0 %v259
  %422 = vmatprep.subr.bf16.mxu0 0
  %423 = vmatpush1.bf16.msra.mxu0 0
  %424 = vmatprep.subr.bf16.mxu0 0
  %425 = vmatpush1.bf16.msra.mxu0 0
  %426 = vmatprep.subr.bf16.mxu0 0
  %427 = vmatpush1.bf16.msra.mxu0 0
  %428 = vmatprep.subr.bf16.mxu0 0
  %429 = vmatpush1.bf16.msra.mxu0 0
  %430 = vmatprep.subr.bf16.mxu0 0
  %431 = vmatpush1.bf16.msra.mxu0 0
  %432 = vmatprep.subr.bf16.mxu0 0
  %433 = vmatpush1.bf16.msra.mxu0 0
  %434 = vmatprep.subr.bf16.mxu0 0
  %435 = vmatpush1.bf16.msra.mxu0 0
  %436 = vmatprep.subr.bf16.mxu0 0
  %437 = vmatpush1.bf16.msra.mxu0 0
  %438 = vmatprep.mubr.bf16.mxu0 0
  %439 = vmatmul.mubr.bf16.gmra.mrb[0].mxu0 %v117
  %v440 = vpop.f32.mrb[0].mxu0
  %v441 = vadd.f32 %v76, %v440
  %v442 = vpop.f32.mrb[0].mxu0
  %v443 = vadd.f32 %v80, %v442
  %v444 = vpop.f32.mrb[0].mxu0
  %v445 = vadd.f32 %v76, %v444
  %v446 = vpop.f32.mrb[0].mxu0
  %v447 = vadd.f32 %v80, %v446
  %448 = vmatprep.mubr.bf16.mxu0 0
  %449 = vmatmul.mubr.bf16.gmra.mrb[0].mxu0 %v118
  %v450 = vpop.f32.mrb[0].mxu0
  %v451 = vadd.f32 %v76, %v450
  %v452 = vpop.f32.mrb[0].mxu0
  %v453 = vadd.f32 %v80, %v452
  %v454 = vpop.f32.mrb[0].mxu0
  %v455 = vadd.f32 %v76, %v454
  %v456 = vpop.f32.mrb[0].mxu0
  %v457 = vadd.f32 %v80, %v456
  %458 = vmatprep.mubr.bf16.mxu0 0
  %459 = vmatmul.mubr.bf16.gmra.mrb[0].mxu0 %v119
  %v460 = vpop.f32.mrb[0].mxu0
  %v461 = vadd.f32 %v76, %v460
  %v462 = vpop.f32.mrb[0].mxu0
  %v463 = vadd.f32 %v80, %v462
  %v464 = vpop.f32.mrb[0].mxu0
  %v465 = vadd.f32 %v76, %v464
  %v466 = vpop.f32.mrb[0].mxu0
  %v467 = vadd.f32 %v80, %v466
  %468 = vmatprep.mubr.bf16.mxu0 0
  %469 = vmatmul.mubr.bf16.gmra.mrb[0].mxu0 %v120
  %v470 = vpop.f32.mrb[0].mxu0
  %v471 = vadd.f32 %v76, %v470
  %v472 = vpop.f32.mrb[0].mxu0
  %v473 = vadd.f32 %v80, %v472
  %v474 = vpop.f32.mrb[0].mxu0
  %v475 = vadd.f32 %v76, %v474
  %v476 = vpop.f32.mrb[0].mxu0
  %v477 = vadd.f32 %v80, %v476
  %478 = vmatprep.mubr.bf16.mxu0 0
  %479 = vmatmul.mubr.bf16.gmra.mrb[0].mxu0 %v121
  %v480 = vpop.f32.mrb[0].mxu0
  %v481 = vadd.f32 %v76, %v480
  %v482 = vpop.f32.mrb[0].mxu0
  %v483 = vadd.f32 %v80, %v482
  %v484 = vpop.f32.mrb[0].mxu0
  %v485 = vadd.f32 %v76, %v484
  %v486 = vpop.f32.mrb[0].mxu0
  %v487 = vadd.f32 %v80, %v486
  %488 = vmatprep.mubr.bf16.mxu0 0
  %489 = vmatmul.mubr.bf16.gmra.mrb[0].mxu0 %v122
  %v490 = vpop.f32.mrb[0].mxu0
  %v491 = vadd.f32 %v76, %v490
  %v492 = vpop.f32.mrb[0].mxu0
  %v493 = vadd.f32 %v80, %v492
  %v494 = vpop.f32.mrb[0].mxu0
  %v495 = vadd.f32 %v76, %v494
  %v496 = vpop.f32.mrb[0].mxu0
  %v497 = vadd.f32 %v80, %v496
  %498 = vmatprep.mubr.bf16.mxu0 0
  %499 = vmatmul.mubr.bf16.gmra.mrb[0].mxu0 %v123
  %v500 = vpop.f32.mrb[0].mxu0
  %v501 = vadd.f32 %v76, %v500
  %v502 = vpop.f32.mrb[0].mxu0
  %v503 = vadd.f32 %v80, %v502
  %v504 = vpop.f32.mrb[0].mxu0
  %v505 = vadd.f32 %v76, %v504
  %v506 = vpop.f32.mrb[0].mxu0
  %v507 = vadd.f32 %v80, %v506
  %508 = vmatprep.mubr.bf16.mxu0 0
  %509 = vmatmul.mubr.bf16.gmra.mrb[0].mxu0 %v124
  %v510 = vpop.f32.mrb[0].mxu0
  %v511 = vadd.f32 %v76, %v510
  %v512 = vpop.f32.mrb[0].mxu0
  %v513 = vadd.f32 %v80, %v512
  %v514 = vpop.f32.mrb[0].mxu0
  %v515 = vadd.f32 %v76, %v514
  %v516 = vpop.f32.mrb[0].mxu0
  %v517 = vadd.f32 %v80, %v516
  %518 = vdwg.mxu0
  %519 = vst [vmem:[%s3] sm:$0xff] %v328
  %520 = vst [vmem:[%s3 + $0x8] sm:$0xff] %v330
  %521 = vst [vmem:[%s3 + $0x10] sm:$0xff] %v441
  %522 = vst [vmem:[%s3 + $0x18] sm:$0xff] %v443
  %523 = vst [vmem:[%s3 + $0x20] sm:$0xff] %v332
  %524 = vst [vmem:[%s3 + $0x28] sm:$0xff] %v334
  %525 = vst [vmem:[%s3 + $0x30] sm:$0xff] %v445
  %526 = vst [vmem:[%s3 + $0x38] sm:$0xff] %v447
  %527 = vst [vmem:[%s3 + $0x40] sm:$0xff] %v338
  %528 = vst [vmem:[%s3 + $0x48] sm:$0xff] %v340
  %529 = vst [vmem:[%s3 + $0x50] sm:$0xff] %v451
  %530 = vst [vmem:[%s3 + $0x58] sm:$0xff] %v453
  %531 = vst [vmem:[%s3 + $0x60] sm:$0xff] %v342
  %532 = vst [vmem:[%s3 + $0x68] sm:$0xff] %v344
  %533 = vst [vmem:[%s3 + $0x70] sm:$0xff] %v455
  %534 = vst [vmem:[%s3 + $0x78] sm:$0xff] %v457
  %535 = vst [vmem:[%s3 + $0x80] sm:$0xff] %v348
  %536 = vst [vmem:[%s3 + $0x88] sm:$0xff] %v350
  %537 = vst [vmem:[%s3 + $0x90] sm:$0xff] %v461
  %538 = vst [vmem:[%s3 + $0x98] sm:$0xff] %v463
  %539 = vst [vmem:[%s3 + $0xa0] sm:$0xff] %v352
  %540 = vst [vmem:[%s3 + $0xa8] sm:$0xff] %v354
  %541 = vst [vmem:[%s3 + $0xb0] sm:$0xff] %v465
  %542 = vst [vmem:[%s3 + $0xb8] sm:$0xff] %v467
  %543 = vst [vmem:[%s3 + $0xc0] sm:$0xff] %v358
  %544 = vst [vmem:[%s3 + $0xc8] sm:$0xff] %v360
  %545 = vst [vmem:[%s3 + $0xd0] sm:$0xff] %v471
  %546 = vst [vmem:[%s3 + $0xd8] sm:$0xff] %v473
  %547 = vst [vmem:[%s3 + $0xe0] sm:$0xff] %v362
  %548 = vst [vmem:[%s3 + $0xe8] sm:$0xff] %v364
  %549 = vst [vmem:[%s3 + $0xf0] sm:$0xff] %v475
  %550 = vst [vmem:[%s3 + $0xf8] sm:$0xff] %v477
  %551 = vst [vmem:[%s3 + $0x100] sm:$0xff] %v368
  %552 = vst [vmem:[%s3 + $0x108] sm:$0xff] %v370
  %553 = vst [vmem:[%s3 + $0x110] sm:$0xff] %v481
  %554 = vst [vmem:[%s3 + $0x118] sm:$0xff] %v483
  %555 = vst [vmem:[%s3 + $0x120] sm:$0xff] %v372
  %556 = vst [vmem:[%s3 + $0x128] sm:$0xff] %v374
  %557 = vst [vmem:[%s3 + $0x130] sm:$0xff] %v485
  %558 = vst [vmem:[%s3 + $0x138] sm:$0xff] %v487
  %559 = vst [vmem:[%s3 + $0x140] sm:$0xff] %v378
  %560 = vst [vmem:[%s3 + $0x148] sm:$0xff] %v380
  %561 = vst [vmem:[%s3 + $0x150] sm:$0xff] %v491
  %562 = vst [vmem:[%s3 + $0x158] sm:$0xff] %v493
  %563 = vst [vmem:[%s3 + $0x160] sm:$0xff] %v382
  %564 = vst [vmem:[%s3 + $0x168] sm:$0xff] %v384
  %565 = vst [vmem:[%s3 + $0x170] sm:$0xff] %v495
  %566 = vst [vmem:[%s3 + $0x178] sm:$0xff] %v497
  %567 = vst [vmem:[%s3 + $0x180] sm:$0xff] %v388
  %568 = vst [vmem:[%s3 + $0x188] sm:$0xff] %v390
  %569 = vst [vmem:[%s3 + $0x190] sm:$0xff] %v501
  %570 = vst [vmem:[%s3 + $0x198] sm:$0xff] %v503
  %571 = vst [vmem:[%s3 + $0x1a0] sm:$0xff] %v392
  %572 = vst [vmem:[%s3 + $0x1a8] sm:$0xff] %v394
  %573 = vst [vmem:[%s3 + $0x1b0] sm:$0xff] %v505
  %574 = vst [vmem:[%s3 + $0x1b8] sm:$0xff] %v507
  %575 = vst [vmem:[%s3 + $0x1c0] sm:$0xff] %v398
  %576 = vst [vmem:[%s3 + $0x1c8] sm:$0xff] %v400
  %577 = vst [vmem:[%s3 + $0x1d0] sm:$0xff] %v511
  %578 = vst [vmem:[%s3 + $0x1d8] sm:$0xff] %v513
  %579 = vst [vmem:[%s3 + $0x1e0] sm:$0xff] %v402
  %580 = vst [vmem:[%s3 + $0x1e8] sm:$0xff] %v404
  %581 = vst [vmem:[%s3 + $0x1f0] sm:$0xff] %v515
  %582 = vst [vmem:[%s3 + $0x1f8] sm:$0xff] %v517
  // Predicated region
  $region14: #{deep_lstm_forward.6} parent=0 // pred_check
    _
  $region15: #{deep_lstm_forward.6} parent=0 // pred_check_branch
    %584 = sbr.rel (0) target = $region17
  $region16: #{deep_lstm_forward.6} parent=0 // pred_region
    _
  $region17: #{deep_lstm_forward.6} parent=0 // pred_fallthru
    _
  // Predicated region
  $region18: #{deep_lstm_forward.6} parent=0 // pred_check
    _
  $region19: #{deep_lstm_forward.6} parent=0 // pred_check_branch
    %586 = sbr.rel (0) target = $region21
  $region20: #{deep_lstm_forward.6} parent=0 // pred_region
    _
  $region21: #{deep_lstm_forward.6} parent=0 // pred_fallthru
    _

// kernel: deep_lstm_forward.7
$region0: #{deep_lstm_forward.7}
  #allocation0 [shape = 'u32[]', space=smem, size = 0x4, offset = 0x4, fixed_abs, tag = 'smem constant byte address 0x4 - core index']
  #allocation1 [shape = 'u32[144,128]{1,0:T(1,128)}', space=vmem, size = 0x12000, scoped, tag = 'internal scratch']
  #allocation2 [shape = 'f32[16,128]{1,0:T(8,128)}', space=vmem, size = 0x2000, scoped, tag = 'scratch operand']
  #allocation3 [shape = 'f32[16,128]{1,0:T(8,128)}', space=vmem, size = 0x2000, scoped, tag = 'scratch operand']
  %s0 = inlined_call_operand.vmem [shape: f32[8,16,512], index: 0, kind: input, shape index: {}]
  %s1 = inlined_call_operand.vmem [shape: bf16[128,512], index: 1, kind: input, shape index: {}]
  %s2 = inlined_call_operand.vmem [shape: bf16[128,4], index: 2, kind: input, shape index: {}]
  %s3 = inlined_call_operand.vmem [shape: f32[1,4], index: 3, kind: input, shape index: {}]
  %s4 = inlined_call_operand.vmem [shape: f32[16,4], index: 4, kind: output, shape index: {}]
  %s5 = sld [smem:[#allocation0]]
  $region34: #{deep_lstm_forward.7} parent=0
    _
  %s7 = ssub.s32 1, %s5
  %s8 = scalar_select 0, %s7, %s5
  // Predicated region
  $region2: #{deep_lstm_forward.7} parent=0 // pred_check
    _
  $region3: #{deep_lstm_forward.7} parent=0 // pred_check_branch
    %10 = sbr.rel (0) target = $region5
  $region4: #{deep_lstm_forward.7} parent=0 // pred_region
    _
  $region5: #{deep_lstm_forward.7} parent=0 // pred_fallthru
    _
  // Predicated region
  $region6: #{deep_lstm_forward.7} parent=0 // pred_check
    _
  $region7: #{deep_lstm_forward.7} parent=0 // pred_check_branch
    %12 = sbr.rel (0) target = $region9
  $region8: #{deep_lstm_forward.7} parent=0 // pred_region
    _
  $region9: #{deep_lstm_forward.7} parent=0 // pred_fallthru
    _
  // Predicated region
  $region10: #{deep_lstm_forward.7} parent=0 // pred_check
    _
  $region11: #{deep_lstm_forward.7} parent=0 // pred_check_branch
    %14 = sbr.rel (0) target = $region13
  $region12: #{deep_lstm_forward.7} parent=0 // pred_region
    _
  $region13: #{deep_lstm_forward.7} parent=0 // pred_fallthru
    _
  // Predicated region
  $region14: #{deep_lstm_forward.7} parent=0 // pred_check
    _
  $region15: #{deep_lstm_forward.7} parent=0 // pred_check_branch
    %16 = sbr.rel (0) target = $region17
  $region16: #{deep_lstm_forward.7} parent=0 // pred_region
    _
  $region17: #{deep_lstm_forward.7} parent=0 // pred_fallthru
    _
  %p18 = scmp.eq.s32.totalorder 0, 0
  // Predicated region
  $region18: #{deep_lstm_forward.7} parent=0 // pred_check
    %p19 = pneg %p18
  $region19: #{deep_lstm_forward.7} parent=0 // pred_check_branch
    %21 = sbr.rel (%p19) target = $region21
  $region20: #{deep_lstm_forward.7} parent=0 // pred_region
    %22 = vst [vmem:[#allocation2] sm:$0xff] 0.0
    %23 = vst [vmem:[#allocation2 + $0x8] sm:$0xff] 0.0
    %24 = vst [vmem:[#allocation3] sm:$0xff] 0.0
    %25 = vst [vmem:[#allocation3 + $0x8] sm:$0xff] 0.0
  $region21: #{deep_lstm_forward.7} parent=0 // pred_fallthru
    _
  %v26 = vld [vmem:[#allocation2] sm:$0xff]
  %v27 = vld [vmem:[#allocation2 + $0x8] sm:$0xff]
  %v28 = vld [vmem:[#allocation3] sm:$0xff]
  %v29 = vld [vmem:[#allocation3 + $0x8] sm:$0xff]
  %v30 = vld [vmem:[%s0] sm:$0xff]
  %v31 = vld [vmem:[%s0 + $0x8] sm:$0xff]
  %v32 = vld [vmem:[%s0 + $0x10] sm:$0xff]
  %v33 = vld [vmem:[%s0 + $0x18] sm:$0xff]
  %v34 = vld [vmem:[%s0 + $0x20] sm:$0xff]
  %v35 = vld [vmem:[%s0 + $0x28] sm:$0xff]
  %v36 = vld [vmem:[%s0 + $0x30] sm:$0xff]
  %v37 = vld [vmem:[%s0 + $0x38] sm:$0xff]
  %v38 = vpack.c.bf16 %v27, %v26
  %v39 = vld [vmem:[%s1] sm:$0xff]
  %v40 = vld [vmem:[%s1 + $0x8] sm:$0xff]
  %v41 = vld [vmem:[%s1 + $0x10] sm:$0xff]
  %v42 = vld [vmem:[%s1 + $0x18] sm:$0xff]
  %v43 = vld [vmem:[%s1 + $0x20] sm:$0xff]
  %v44 = vld [vmem:[%s1 + $0x28] sm:$0xff]
  %v45 = vld [vmem:[%s1 + $0x30] sm:$0xff]
  %v46 = vld [vmem:[%s1 + $0x38] sm:$0xff]
  %v47 = vld [vmem:[%s1 + $0x40] sm:$0xff]
  %v48 = vld [vmem:[%s1 + $0x48] sm:$0xff]
  %v49 = vld [vmem:[%s1 + $0x50] sm:$0xff]
  %v50 = vld [vmem:[%s1 + $0x58] sm:$0xff]
  %v51 = vld [vmem:[%s1 + $0x60] sm:$0xff]
  %v52 = vld [vmem:[%s1 + $0x68] sm:$0xff]
  %v53 = vld [vmem:[%s1 + $0x70] sm:$0xff]
  %v54 = vld [vmem:[%s1 + $0x78] sm:$0xff]
  %v55 = vld [vmem:[%s1 + $0x80] sm:$0xff]
  %v56 = vld [vmem:[%s1 + $0x88] sm:$0xff]
  %v57 = vld [vmem:[%s1 + $0x90] sm:$0xff]
  %v58 = vld [vmem:[%s1 + $0x98] sm:$0xff]
  %v59 = vld [vmem:[%s1 + $0xa0] sm:$0xff]
  %v60 = vld [vmem:[%s1 + $0xa8] sm:$0xff]
  %v61 = vld [vmem:[%s1 + $0xb0] sm:$0xff]
  %v62 = vld [vmem:[%s1 + $0xb8] sm:$0xff]
  %v63 = vld [vmem:[%s1 + $0xc0] sm:$0xff]
  %v64 = vld [vmem:[%s1 + $0xc8] sm:$0xff]
  %v65 = vld [vmem:[%s1 + $0xd0] sm:$0xff]
  %v66 = vld [vmem:[%s1 + $0xd8] sm:$0xff]
  %v67 = vld [vmem:[%s1 + $0xe0] sm:$0xff]
  %v68 = vld [vmem:[%s1 + $0xe8] sm:$0xff]
  %v69 = vld [vmem:[%s1 + $0xf0] sm:$0xff]
  %v70 = vld [vmem:[%s1 + $0xf8] sm:$0xff]
  %v103 = vunpack.c.l.b16 %v39
  %v104 = vunpack.c.h.b16 %v39
  %v105 = vunpack.c.l.b16 %v40
  %v106 = vunpack.c.h.b16 %v40
  %v107 = vunpack.c.l.b16 %v41
  %v108 = vunpack.c.h.b16 %v41
  %v109 = vunpack.c.l.b16 %v42
  %v110 = vunpack.c.h.b16 %v42
  %v111 = vunpack.c.l.b16 %v43
  %v112 = vunpack.c.h.b16 %v43
  %v113 = vunpack.c.l.b16 %v44
  %v114 = vunpack.c.h.b16 %v44
  %v115 = vunpack.c.l.b16 %v45
  %v116 = vunpack.c.h.b16 %v45
  %v117 = vunpack.c.l.b16 %v46
  %v118 = vunpack.c.h.b16 %v46
  %v119 = vunpack.c.l.b16 %v47
  %v120 = vunpack.c.h.b16 %v47
  %v121 = vunpack.c.l.b16 %v48
  %v122 = vunpack.c.h.b16 %v48
  %v123 = vunpack.c.l.b16 %v49
  %v124 = vunpack.c.h.b16 %v49
  %v125 = vunpack.c.l.b16 %v50
  %v126 = vunpack.c.h.b16 %v50
  %v127 = vunpack.c.l.b16 %v51
  %v128 = vunpack.c.h.b16 %v51
  %v129 = vunpack.c.l.b16 %v52
  %v130 = vunpack.c.h.b16 %v52
  %v131 = vunpack.c.l.b16 %v53
  %v132 = vunpack.c.h.b16 %v53
  %v133 = vunpack.c.l.b16 %v54
  %v134 = vunpack.c.h.b16 %v54
  %v135 = vunpack.c.l.b16 %v55
  %v136 = vunpack.c.h.b16 %v55
  %v137 = vunpack.c.l.b16 %v56
  %v138 = vunpack.c.h.b16 %v56
  %v139 = vunpack.c.l.b16 %v57
  %v140 = vunpack.c.h.b16 %v57
  %v141 = vunpack.c.l.b16 %v58
  %v142 = vunpack.c.h.b16 %v58
  %v143 = vunpack.c.l.b16 %v59
  %v144 = vunpack.c.h.b16 %v59
  %v145 = vunpack.c.l.b16 %v60
  %v146 = vunpack.c.h.b16 %v60
  %v147 = vunpack.c.l.b16 %v61
  %v148 = vunpack.c.h.b16 %v61
  %v149 = vunpack.c.l.b16 %v62
  %v150 = vunpack.c.h.b16 %v62
  %v151 = vunpack.c.l.b16 %v63
  %v152 = vunpack.c.h.b16 %v63
  %v153 = vunpack.c.l.b16 %v64
  %v154 = vunpack.c.h.b16 %v64
  %v155 = vunpack.c.l.b16 %v65
  %v156 = vunpack.c.h.b16 %v65
  %v157 = vunpack.c.l.b16 %v66
  %v158 = vunpack.c.h.b16 %v66
  %v159 = vunpack.c.l.b16 %v67
  %v160 = vunpack.c.h.b16 %v67
  %v161 = vunpack.c.l.b16 %v68
  %v162 = vunpack.c.h.b16 %v68
  %v163 = vunpack.c.l.b16 %v69
  %v164 = vunpack.c.h.b16 %v69
  %v165 = vunpack.c.l.b16 %v70
  %v166 = vunpack.c.h.b16 %v70
  %v167 = vpack.c.b16 %v107, %v103
  %v168 = vpack.c.b16 %v108, %v104
  %v169 = vpack.c.b16 %v109, %v105
  %v170 = vpack.c.b16 %v110, %v106
  %v171 = vpack.c.b16 %v115, %v111
  %v172 = vpack.c.b16 %v116, %v112
  %v173 = vpack.c.b16 %v117, %v113
  %v174 = vpack.c.b16 %v118, %v114
  %v175 = vpack.c.b16 %v123, %v119
  %v176 = vpack.c.b16 %v124, %v120
  %v177 = vpack.c.b16 %v125, %v121
  %v178 = vpack.c.b16 %v126, %v122
  %v179 = vpack.c.b16 %v131, %v127
  %v180 = vpack.c.b16 %v132, %v128
  %v181 = vpack.c.b16 %v133, %v129
  %v182 = vpack.c.b16 %v134, %v130
  %v183 = vpack.c.b16 %v139, %v135
  %v184 = vpack.c.b16 %v140, %v136
  %v185 = vpack.c.b16 %v141, %v137
  %v186 = vpack.c.b16 %v142, %v138
  %v187 = vpack.c.b16 %v147, %v143
  %v188 = vpack.c.b16 %v148, %v144
  %v189 = vpack.c.b16 %v149, %v145
  %v190 = vpack.c.b16 %v150, %v146
  %v191 = vpack.c.b16 %v155, %v151
  %v192 = vpack.c.b16 %v156, %v152
  %v193 = vpack.c.b16 %v157, %v153
  %v194 = vpack.c.b16 %v158, %v154
  %v195 = vpack.c.b16 %v163, %v159
  %v196 = vpack.c.b16 %v164, %v160
  %v197 = vpack.c.b16 %v165, %v161
  %v198 = vpack.c.b16 %v166, %v162
  %231 = vmatprep.subr.bf16.mxu0 %v168
  %232 = vmatpush1.bf16.msra.mxu0 %v167
  %233 = vmatprep.subr.bf16.mxu0 %v172
  %234 = vmatpush1.bf16.msra.mxu0 %v171
  %235 = vmatprep.subr.bf16.mxu0 %v176
  %236 = vmatpush1.bf16.msra.mxu0 %v175
  %237 = vmatprep.subr.bf16.mxu0 %v180
  %238 = vmatpush1.bf16.msra.mxu0 %v179
  %239 = vmatprep.subr.bf16.mxu0 %v184
  %240 = vmatpush1.bf16.msra.mxu0 %v183
  %241 = vmatprep.subr.bf16.mxu0 %v188
  %242 = vmatpush1.bf16.msra.mxu0 %v187
  %243 = vmatprep.subr.bf16.mxu0 %v192
  %244 = vmatpush1.bf16.msra.mxu0 %v191
  %245 = vmatprep.subr.bf16.mxu0 %v196
  %246 = vmatpush1.bf16.msra.mxu0 %v195
  %247 = vmatprep.subr.bf16.mxu0 0
  %248 = vmatpush1.bf16.msra.mxu0 0
  %249 = vmatprep.subr.bf16.mxu0 0
  %250 = vmatpush1.bf16.msra.mxu0 0
  %251 = vmatprep.subr.bf16.mxu0 0
  %252 = vmatpush1.bf16.msra.mxu0 0
  %253 = vmatprep.subr.bf16.mxu0 0
  %254 = vmatpush1.bf16.msra.mxu0 0
  %255 = vmatprep.subr.bf16.mxu0 0
  %256 = vmatpush1.bf16.msra.mxu0 0
  %257 = vmatprep.subr.bf16.mxu0 0
  %258 = vmatpush1.bf16.msra.mxu0 0
  %259 = vmatprep.subr.bf16.mxu0 0
  %260 = vmatpush1.bf16.msra.mxu0 0
  %261 = vmatprep.subr.bf16.mxu0 0
  %262 = vmatpush1.bf16.msra.mxu0 0
  %263 = vmatprep.mubr.bf16.mxu0 0
  %264 = vmatmul.mubr.bf16.gmra.mrb[0].mxu0 %v38
  %v265 = vpop.f32.mrb[0].mxu0
  %v266 = vadd.f32 0.0, %v265
  %v267 = vpop.f32.mrb[0].mxu0
  %v268 = vadd.f32 0.0, %v267
  %v269 = vpop.f32.mrb[0].mxu0
  %v270 = vadd.f32 0.0, %v269
  %v271 = vpop.f32.mrb[0].mxu0
  %v272 = vadd.f32 0.0, %v271
  %273 = vdwg.mxu0
  %274 = vmatprep.subr.bf16.mxu0 %v170
  %275 = vmatpush1.bf16.msra.mxu0 %v169
  %276 = vmatprep.subr.bf16.mxu0 %v174
  %277 = vmatpush1.bf16.msra.mxu0 %v173
  %278 = vmatprep.subr.bf16.mxu0 %v178
  %279 = vmatpush1.bf16.msra.mxu0 %v177
  %280 = vmatprep.subr.bf16.mxu0 %v182
  %281 = vmatpush1.bf16.msra.mxu0 %v181
  %282 = vmatprep.subr.bf16.mxu0 %v186
  %283 = vmatpush1.bf16.msra.mxu0 %v185
  %284 = vmatprep.subr.bf16.mxu0 %v190
  %285 = vmatpush1.bf16.msra.mxu0 %v189
  %286 = vmatprep.subr.bf16.mxu0 %v194
  %287 = vmatpush1.bf16.msra.mxu0 %v193
  %288 = vmatprep.subr.bf16.mxu0 %v198
  %289 = vmatpush1.bf16.msra.mxu0 %v197
  %290 = vmatprep.subr.bf16.mxu0 0
  %291 = vmatpush1.bf16.msra.mxu0 0
  %292 = vmatprep.subr.bf16.mxu0 0
  %293 = vmatpush1.bf16.msra.mxu0 0
  %294 = vmatprep.subr.bf16.mxu0 0
  %295 = vmatpush1.bf16.msra.mxu0 0
  %296 = vmatprep.subr.bf16.mxu0 0
  %297 = vmatpush1.bf16.msra.mxu0 0
  %298 = vmatprep.subr.bf16.mxu0 0
  %299 = vmatpush1.bf16.msra.mxu0 0
  %300 = vmatprep.subr.bf16.mxu0 0
  %301 = vmatpush1.bf16.msra.mxu0 0
  %302 = vmatprep.subr.bf16.mxu0 0
  %303 = vmatpush1.bf16.msra.mxu0 0
  %304 = vmatprep.subr.bf16.mxu0 0
  %305 = vmatpush1.bf16.msra.mxu0 0
  %306 = vmatprep.mubr.bf16.mxu0 0
  %307 = vmatmul.mubr.bf16.gmra.mrb[0].mxu0 %v38
  %v308 = vpop.f32.mrb[0].mxu0
  %v309 = vadd.f32 0.0, %v308
  %v310 = vpop.f32.mrb[0].mxu0
  %v311 = vadd.f32 0.0, %v310
  %v312 = vpop.f32.mrb[0].mxu0
  %v313 = vadd.f32 0.0, %v312
  %v314 = vpop.f32.mrb[0].mxu0
  %v315 = vadd.f32 0.0, %v314
  %316 = vdwg.mxu0
  %v317 = vadd.f32 %v30, %v266
  %v318 = vadd.f32 %v31, %v268
  %v319 = vadd.f32 %v32, %v309
  %v320 = vadd.f32 %v33, %v311
  %v321 = vadd.f32 %v34, %v270
  %v322 = vadd.f32 %v35, %v272
  %v323 = vadd.f32 %v36, %v313
  %v324 = vadd.f32 %v37, %v315
  %v325 = vxor.u32 %v317, 2147483648
  %v326 = vxor.u32 %v321, 2147483648
  %v327 = vmul.f32 %v325, 1.442695
  %v328 = vpow.pop %v327
  %v329 = vmul.f32 %v326, 1.442695
  %v330 = vpow.pop %v329
  %v331 = vadd.f32 %v328, 1.0
  %v332 = vadd.f32 %v330, 1.0
  %v333 = vrcp.pop %v331
  %v334 = vmul.f32 1.0, %v333
  %v335 = vrcp.pop %v332
  %v336 = vmul.f32 1.0, %v335
  %v337 = vxor.u32 %v318, 2147483648
  %v338 = vxor.u32 %v322, 2147483648
  %v339 = vmul.f32 %v337, 1.442695
  %v340 = vpow.pop %v339
  %v341 = vmul.f32 %v338, 1.442695
  %v342 = vpow.pop %v341
  %v343 = vadd.f32 %v340, 1.0
  %v344 = vadd.f32 %v342, 1.0
  %v345 = vrcp.pop %v343
  %v346 = vmul.f32 1.0, %v345
  %v347 = vrcp.pop %v344
  %v348 = vmul.f32 1.0, %v347
  %v349 = vtanh.pop %v319
  %v350 = vtanh.pop %v323
  %v351 = vxor.u32 %v320, 2147483648
  %v352 = vxor.u32 %v324, 2147483648
  %v353 = vmul.f32 %v351, 1.442695
  %v354 = vpow.pop %v353
  %v355 = vmul.f32 %v352, 1.442695
  %v356 = vpow.pop %v355
  %v357 = vadd.f32 %v354, 1.0
  %v358 = vadd.f32 %v356, 1.0
  %v359 = vrcp.pop %v357
  %v360 = vmul.f32 1.0, %v359
  %v361 = vrcp.pop %v358
  %v362 = vmul.f32 1.0, %v361
  %v363 = vmul.f32 %v346, %v28
  %v364 = vmul.f32 %v348, %v29
  %v365 = vmul.f32 %v334, %v349
  %v366 = vmul.f32 %v336, %v350
  %v367 = vadd.f32 %v363, %v365
  %v368 = vadd.f32 %v364, %v366
  %v369 = vtanh.pop %v367
  %v370 = vtanh.pop %v368
  %v371 = vmul.f32 %v360, %v369
  %v372 = vmul.f32 %v362, %v370
  %s373 = scalar_lea.vmem %s0, 64
  %v374 = vld [vmem:[%s373] sm:$0xff]
  %v375 = vld [vmem:[%s373 + $0x8] sm:$0xff]
  %v376 = vld [vmem:[%s373 + $0x10] sm:$0xff]
  %v377 = vld [vmem:[%s373 + $0x18] sm:$0xff]
  %v378 = vld [vmem:[%s373 + $0x20] sm:$0xff]
  %v379 = vld [vmem:[%s373 + $0x28] sm:$0xff]
  %v380 = vld [vmem:[%s373 + $0x30] sm:$0xff]
  %v381 = vld [vmem:[%s373 + $0x38] sm:$0xff]
  %v382 = vpack.c.bf16 %v372, %v371
  %383 = vmatprep.subr.bf16.mxu0 %v168
  %384 = vmatpush1.bf16.msra.mxu0 %v167
  %385 = vmatprep.subr.bf16.mxu0 %v172
  %386 = vmatpush1.bf16.msra.mxu0 %v171
  %387 = vmatprep.subr.bf16.mxu0 %v176
  %388 = vmatpush1.bf16.msra.mxu0 %v175
  %389 = vmatprep.subr.bf16.mxu0 %v180
  %390 = vmatpush1.bf16.msra.mxu0 %v179
  %391 = vmatprep.subr.bf16.mxu0 %v184
  %392 = vmatpush1.bf16.msra.mxu0 %v183
  %393 = vmatprep.subr.bf16.mxu0 %v188
  %394 = vmatpush1.bf16.msra.mxu0 %v187
  %395 = vmatprep.subr.bf16.mxu0 %v192
  %396 = vmatpush1.bf16.msra.mxu0 %v191
  %397 = vmatprep.subr.bf16.mxu0 %v196
  %398 = vmatpush1.bf16.msra.mxu0 %v195
  %399 = vmatprep.subr.bf16.mxu0 0
  %400 = vmatpush1.bf16.msra.mxu0 0
  %401 = vmatprep.subr.bf16.mxu0 0
  %402 = vmatpush1.bf16.msra.mxu0 0
  %403 = vmatprep.subr.bf16.mxu0 0
  %404 = vmatpush1.bf16.msra.mxu0 0
  %405 = vmatprep.subr.bf16.mxu0 0
  %406 = vmatpush1.bf16.msra.mxu0 0
  %407 = vmatprep.subr.bf16.mxu0 0
  %408 = vmatpush1.bf16.msra.mxu0 0
  %409 = vmatprep.subr.bf16.mxu0 0
  %410 = vmatpush1.bf16.msra.mxu0 0
  %411 = vmatprep.subr.bf16.mxu0 0
  %412 = vmatpush1.bf16.msra.mxu0 0
  %413 = vmatprep.subr.bf16.mxu0 0
  %414 = vmatpush1.bf16.msra.mxu0 0
  %415 = vmatprep.mubr.bf16.mxu0 0
  %416 = vmatmul.mubr.bf16.gmra.mrb[0].mxu0 %v382
  %v417 = vpop.f32.mrb[0].mxu0
  %v418 = vadd.f32 0.0, %v417
  %v419 = vpop.f32.mrb[0].mxu0
  %v420 = vadd.f32 0.0, %v419
  %v421 = vpop.f32.mrb[0].mxu0
  %v422 = vadd.f32 0.0, %v421
  %v423 = vpop.f32.mrb[0].mxu0
  %v424 = vadd.f32 0.0, %v423
  %425 = vdwg.mxu0
  %426 = vmatprep.subr.bf16.mxu0 %v170
  %427 = vmatpush1.bf16.msra.mxu0 %v169
  %428 = vmatprep.subr.bf16.mxu0 %v174
  %429 = vmatpush1.bf16.msra.mxu0 %v173
  %430 = vmatprep.subr.bf16.mxu0 %v178
  %431 = vmatpush1.bf16.msra.mxu0 %v177
  %432 = vmatprep.subr.bf16.mxu0 %v182
  %433 = vmatpush1.bf16.msra.mxu0 %v181
  %434 = vmatprep.subr.bf16.mxu0 %v186
  %435 = vmatpush1.bf16.msra.mxu0 %v185
  %436 = vmatprep.subr.bf16.mxu0 %v190
  %437 = vmatpush1.bf16.msra.mxu0 %v189
  %438 = vmatprep.subr.bf16.mxu0 %v194
  %439 = vmatpush1.bf16.msra.mxu0 %v193
  %440 = vmatprep.subr.bf16.mxu0 %v198
  %441 = vmatpush1.bf16.msra.mxu0 %v197
  %442 = vmatprep.subr.bf16.mxu0 0
  %443 = vmatpush1.bf16.msra.mxu0 0
  %444 = vmatprep.subr.bf16.mxu0 0
  %445 = vmatpush1.bf16.msra.mxu0 0
  %446 = vmatprep.subr.bf16.mxu0 0
  %447 = vmatpush1.bf16.msra.mxu0 0
  %448 = vmatprep.subr.bf16.mxu0 0
  %449 = vmatpush1.bf16.msra.mxu0 0
  %450 = vmatprep.subr.bf16.mxu0 0
  %451 = vmatpush1.bf16.msra.mxu0 0
  %452 = vmatprep.subr.bf16.mxu0 0
  %453 = vmatpush1.bf16.msra.mxu0 0
  %454 = vmatprep.subr.bf16.mxu0 0
  %455 = vmatpush1.bf16.msra.mxu0 0
  %456 = vmatprep.subr.bf16.mxu0 0
  %457 = vmatpush1.bf16.msra.mxu0 0
  %458 = vmatprep.mubr.bf16.mxu0 0
  %459 = vmatmul.mubr.bf16.gmra.mrb[0].mxu0 %v382
  %v460 = vpop.f32.mrb[0].mxu0
  %v461 = vadd.f32 0.0, %v460
  %v462 = vpop.f32.mrb[0].mxu0
  %v463 = vadd.f32 0.0, %v462
  %v464 = vpop.f32.mrb[0].mxu0
  %v465 = vadd.f32 0.0, %v464
  %v466 = vpop.f32.mrb[0].mxu0
  %v467 = vadd.f32 0.0, %v466
  %468 = vdwg.mxu0
  %v469 = vadd.f32 %v374, %v418
  %v470 = vadd.f32 %v375, %v420
  %v471 = vadd.f32 %v376, %v461
  %v472 = vadd.f32 %v377, %v463
  %v473 = vadd.f32 %v378, %v422
  %v474 = vadd.f32 %v379, %v424
  %v475 = vadd.f32 %v380, %v465
  %v476 = vadd.f32 %v381, %v467
  %v477 = vxor.u32 %v469, 2147483648
  %v478 = vxor.u32 %v473, 2147483648
  %v479 = vmul.f32 %v477, 1.442695
  %v480 = vpow.pop %v479
  %v481 = vmul.f32 %v478, 1.442695
  %v482 = vpow.pop %v481
  %v483 = vadd.f32 %v480, 1.0
  %v484 = vadd.f32 %v482, 1.0
  %v485 = vrcp.pop %v483
  %v486 = vmul.f32 1.0, %v485
  %v487 = vrcp.pop %v484
  %v488 = vmul.f32 1.0, %v487
  %v489 = vxor.u32 %v470, 2147483648
  %v490 = vxor.u32 %v474, 2147483648
  %v491 = vmul.f32 %v489, 1.442695
  %v492 = vpow.pop %v491
  %v493 = vmul.f32 %v490, 1.442695
  %v494 = vpow.pop %v493
  %v495 = vadd.f32 %v492, 1.0
  %v496 = vadd.f32 %v494, 1.0
  %v497 = vrcp.pop %v495
  %v498 = vmul.f32 1.0, %v497
  %v499 = vrcp.pop %v496
  %v500 = vmul.f32 1.0, %v499
  %v501 = vtanh.pop %v471
  %v502 = vtanh.pop %v475
  %v503 = vxor.u32 %v472, 2147483648
  %v504 = vxor.u32 %v476, 2147483648
  %v505 = vmul.f32 %v503, 1.442695
  %v506 = vpow.pop %v505
  %v507 = vmul.f32 %v504, 1.442695
  %v508 = vpow.pop %v507
  %v509 = vadd.f32 %v506, 1.0
  %v510 = vadd.f32 %v508, 1.0
  %v511 = vrcp.pop %v509
  %v512 = vmul.f32 1.0, %v511
  %v513 = vrcp.pop %v510
  %v514 = vmul.f32 1.0, %v513
  %v515 = vmul.f32 %v498, %v367
  %v516 = vmul.f32 %v500, %v368
  %v517 = vmul.f32 %v486, %v501
  %v518 = vmul.f32 %v488, %v502
  %v519 = vadd.f32 %v515, %v517
  %v520 = vadd.f32 %v516, %v518
  %v521 = vtanh.pop %v519
  %v522 = vtanh.pop %v520
  %v523 = vmul.f32 %v512, %v521
  %v524 = vmul.f32 %v514, %v522
  %s525 = scalar_lea.vmem %s0, 128
  %v526 = vld [vmem:[%s525] sm:$0xff]
  %v527 = vld [vmem:[%s525 + $0x8] sm:$0xff]
  %v528 = vld [vmem:[%s525 + $0x10] sm:$0xff]
  %v529 = vld [vmem:[%s525 + $0x18] sm:$0xff]
  %v530 = vld [vmem:[%s525 + $0x20] sm:$0xff]
  %v531 = vld [vmem:[%s525 + $0x28] sm:$0xff]
  %v532 = vld [vmem:[%s525 + $0x30] sm:$0xff]
  %v533 = vld [vmem:[%s525 + $0x38] sm:$0xff]
  %v534 = vpack.c.bf16 %v524, %v523
  %535 = vmatprep.subr.bf16.mxu0 %v168
  %536 = vmatpush1.bf16.msra.mxu0 %v167
  %537 = vmatprep.subr.bf16.mxu0 %v172
  %538 = vmatpush1.bf16.msra.mxu0 %v171
  %539 = vmatprep.subr.bf16.mxu0 %v176
  %540 = vmatpush1.bf16.msra.mxu0 %v175
  %541 = vmatprep.subr.bf16.mxu0 %v180
  %542 = vmatpush1.bf16.msra.mxu0 %v179
  %543 = vmatprep.subr.bf16.mxu0 %v184
  %544 = vmatpush1.bf16.msra.mxu0 %v183
  %545 = vmatprep.subr.bf16.mxu0 %v188
  %546 = vmatpush1.bf16.msra.mxu0 %v187
  %547 = vmatprep.subr.bf16.mxu0 %v192
  %548 = vmatpush1.bf16.msra.mxu0 %v191
  %549 = vmatprep.subr.bf16.mxu0 %v196
  %550 = vmatpush1.bf16.msra.mxu0 %v195
  %551 = vmatprep.subr.bf16.mxu0 0
  %552 = vmatpush1.bf16.msra.mxu0 0
  %553 = vmatprep.subr.bf16.mxu0 0
  %554 = vmatpush1.bf16.msra.mxu0 0
  %555 = vmatprep.subr.bf16.mxu0 0
  %556 = vmatpush1.bf16.msra.mxu0 0
  %557 = vmatprep.subr.bf16.mxu0 0
  %558 = vmatpush1.bf16.msra.mxu0 0
  %559 = vmatprep.subr.bf16.mxu0 0
  %560 = vmatpush1.bf16.msra.mxu0 0
  %561 = vmatprep.subr.bf16.mxu0 0
  %562 = vmatpush1.bf16.msra.mxu0 0
  %563 = vmatprep.subr.bf16.mxu0 0
  %564 = vmatpush1.bf16.msra.mxu0 0
  %565 = vmatprep.subr.bf16.mxu0 0
  %566 = vmatpush1.bf16.msra.mxu0 0
  %567 = vmatprep.mubr.bf16.mxu0 0
  %568 = vmatmul.mubr.bf16.gmra.mrb[0].mxu0 %v534
  %v569 = vpop.f32.mrb[0].mxu0
  %v570 = vadd.f32 0.0, %v569
  %v571 = vpop.f32.mrb[0].mxu0
  %v572 = vadd.f32 0.0, %v571
  %v573 = vpop.f32.mrb[0].mxu0
  %v574 = vadd.f32 0.0, %v573
  %v575 = vpop.f32.mrb[0].mxu0
  %v576 = vadd.f32 0.0, %v575
  %577 = vdwg.mxu0
  %578 = vmatprep.subr.bf16.mxu0 %v170
  %579 = vmatpush1.bf16.msra.mxu0 %v169
  %580 = vmatprep.subr.bf16.mxu0 %v174
  %581 = vmatpush1.bf16.msra.mxu0 %v173
  %582 = vmatprep.subr.bf16.mxu0 %v178
  %583 = vmatpush1.bf16.msra.mxu0 %v177
  %584 = vmatprep.subr.bf16.mxu0 %v182
  %585 = vmatpush1.bf16.msra.mxu0 %v181
  %586 = vmatprep.subr.bf16.mxu0 %v186
  %587 = vmatpush1.bf16.msra.mxu0 %v185
  %588 = vmatprep.subr.bf16.mxu0 %v190
  %589 = vmatpush1.bf16.msra.mxu0 %v189
  %590 = vmatprep.subr.bf16.mxu0 %v194
  %591 = vmatpush1.bf16.msra.mxu0 %v193
  %592 = vmatprep.subr.bf16.mxu0 %v198
  %593 = vmatpush1.bf16.msra.mxu0 %v197
  %594 = vmatprep.subr.bf16.mxu0 0
  %595 = vmatpush1.bf16.msra.mxu0 0
  %596 = vmatprep.subr.bf16.mxu0 0
  %597 = vmatpush1.bf16.msra.mxu0 0
  %598 = vmatprep.subr.bf16.mxu0 0
  %599 = vmatpush1.bf16.msra.mxu0 0
  %600 = vmatprep.subr.bf16.mxu0 0
  %601 = vmatpush1.bf16.msra.mxu0 0
  %602 = vmatprep.subr.bf16.mxu0 0
  %603 = vmatpush1.bf16.msra.mxu0 0
  %604 = vmatprep.subr.bf16.mxu0 0
  %605 = vmatpush1.bf16.msra.mxu0 0
  %606 = vmatprep.subr.bf16.mxu0 0
  %607 = vmatpush1.bf16.msra.mxu0 0
  %608 = vmatprep.subr.bf16.mxu0 0
  %609 = vmatpush1.bf16.msra.mxu0 0
  %610 = vmatprep.mubr.bf16.mxu0 0
  %611 = vmatmul.mubr.bf16.gmra.mrb[0].mxu0 %v534
  %v612 = vpop.f32.mrb[0].mxu0
  %v613 = vadd.f32 0.0, %v612
  %v614 = vpop.f32.mrb[0].mxu0
  %v615 = vadd.f32 0.0, %v614
  %v616 = vpop.f32.mrb[0].mxu0
  %v617 = vadd.f32 0.0, %v616
  %v618 = vpop.f32.mrb[0].mxu0
  %v619 = vadd.f32 0.0, %v618
  %620 = vdwg.mxu0
  %v621 = vadd.f32 %v526, %v570
  %v622 = vadd.f32 %v527, %v572
  %v623 = vadd.f32 %v528, %v613
  %v624 = vadd.f32 %v529, %v615
  %v625 = vadd.f32 %v530, %v574
  %v626 = vadd.f32 %v531, %v576
  %v627 = vadd.f32 %v532, %v617
  %v628 = vadd.f32 %v533, %v619
  %v629 = vxor.u32 %v621, 2147483648
  %v630 = vxor.u32 %v625, 2147483648
  %v631 = vmul.f32 %v629, 1.442695
  %v632 = vpow.pop %v631
  %v633 = vmul.f32 %v630, 1.442695
  %v634 = vpow.pop %v633
  %v635 = vadd.f32 %v632, 1.0
  %v636 = vadd.f32 %v634, 1.0
  %v637 = vrcp.pop %v635
  %v638 = vmul.f32 1.0, %v637
  %v639 = vrcp.pop %v636
  %v640 = vmul.f32 1.0, %v639
  %v641 = vxor.u32 %v622, 2147483648
  %v642 = vxor.u32 %v626, 2147483648
  %v643 = vmul.f32 %v641, 1.442695
  %v644 = vpow.pop %v643
  %v645 = vmul.f32 %v642, 1.442695
  %v646 = vpow.pop %v645
  %v647 = vadd.f32 %v644, 1.0
  %v648 = vadd.f32 %v646, 1.0
  %v649 = vrcp.pop %v647
  %v650 = vmul.f32 1.0, %v649
  %v651 = vrcp.pop %v648
  %v652 = vmul.f32 1.0, %v651
  %v653 = vtanh.pop %v623
  %v654 = vtanh.pop %v627
  %v655 = vxor.u32 %v624, 2147483648
  %v656 = vxor.u32 %v628, 2147483648
  %v657 = vmul.f32 %v655, 1.442695
  %v658 = vpow.pop %v657
  %v659 = vmul.f32 %v656, 1.442695
  %v660 = vpow.pop %v659
  %v661 = vadd.f32 %v658, 1.0
  %v662 = vadd.f32 %v660, 1.0
  %v663 = vrcp.pop %v661
  %v664 = vmul.f32 1.0, %v663
  %v665 = vrcp.pop %v662
  %v666 = vmul.f32 1.0, %v665
  %v667 = vmul.f32 %v650, %v519
  %v668 = vmul.f32 %v652, %v520
  %v669 = vmul.f32 %v638, %v653
  %v670 = vmul.f32 %v640, %v654
  %v671 = vadd.f32 %v667, %v669
  %v672 = vadd.f32 %v668, %v670
  %v673 = vtanh.pop %v671
  %v674 = vtanh.pop %v672
  %v675 = vmul.f32 %v664, %v673
  %v676 = vmul.f32 %v666, %v674
  %s677 = scalar_lea.vmem %s0, 192
  %v678 = vld [vmem:[%s677] sm:$0xff]
  %v679 = vld [vmem:[%s677 + $0x8] sm:$0xff]
  %v680 = vld [vmem:[%s677 + $0x10] sm:$0xff]
  %v681 = vld [vmem:[%s677 + $0x18] sm:$0xff]
  %v682 = vld [vmem:[%s677 + $0x20] sm:$0xff]
  %v683 = vld [vmem:[%s677 + $0x28] sm:$0xff]
  %v684 = vld [vmem:[%s677 + $0x30] sm:$0xff]
  %v685 = vld [vmem:[%s677 + $0x38] sm:$0xff]
  %v686 = vpack.c.bf16 %v676, %v675
  %687 = vmatprep.subr.bf16.mxu0 %v168
  %688 = vmatpush1.bf16.msra.mxu0 %v167
  %689 = vmatprep.subr.bf16.mxu0 %v172
  %690 = vmatpush1.bf16.msra.mxu0 %v171
  %691 = vmatprep.subr.bf16.mxu0 %v176
  %692 = vmatpush1.bf16.msra.mxu0 %v175
  %693 = vmatprep.subr.bf16.mxu0 %v180
  %694 = vmatpush1.bf16.msra.mxu0 %v179
  %695 = vmatprep.subr.bf16.mxu0 %v184
  %696 = vmatpush1.bf16.msra.mxu0 %v183
  %697 = vmatprep.subr.bf16.mxu0 %v188
  %698 = vmatpush1.bf16.msra.mxu0 %v187
  %699 = vmatprep.subr.bf16.mxu0 %v192
  %700 = vmatpush1.bf16.msra.mxu0 %v191
  %701 = vmatprep.subr.bf16.mxu0 %v196
  %702 = vmatpush1.bf16.msra.mxu0 %v195
  %703 = vmatprep.subr.bf16.mxu0 0
  %704 = vmatpush1.bf16.msra.mxu0 0
  %705 = vmatprep.subr.bf16.mxu0 0
  %706 = vmatpush1.bf16.msra.mxu0 0
  %707 = vmatprep.subr.bf16.mxu0 0
  %708 = vmatpush1.bf16.msra.mxu0 0
  %709 = vmatprep.subr.bf16.mxu0 0
  %710 = vmatpush1.bf16.msra.mxu0 0
  %711 = vmatprep.subr.bf16.mxu0 0
  %712 = vmatpush1.bf16.msra.mxu0 0
  %713 = vmatprep.subr.bf16.mxu0 0
  %714 = vmatpush1.bf16.msra.mxu0 0
  %715 = vmatprep.subr.bf16.mxu0 0
  %716 = vmatpush1.bf16.msra.mxu0 0
  %717 = vmatprep.subr.bf16.mxu0 0
  %718 = vmatpush1.bf16.msra.mxu0 0
  %719 = vmatprep.mubr.bf16.mxu0 0
  %720 = vmatmul.mubr.bf16.gmra.mrb[0].mxu0 %v686
  %v721 = vpop.f32.mrb[0].mxu0
  %v722 = vadd.f32 0.0, %v721
  %v723 = vpop.f32.mrb[0].mxu0
  %v724 = vadd.f32 0.0, %v723
  %v725 = vpop.f32.mrb[0].mxu0
  %v726 = vadd.f32 0.0, %v725
  %v727 = vpop.f32.mrb[0].mxu0
  %v728 = vadd.f32 0.0, %v727
  %729 = vdwg.mxu0
  %730 = vmatprep.subr.bf16.mxu0 %v170
  %731 = vmatpush1.bf16.msra.mxu0 %v169
  %732 = vmatprep.subr.bf16.mxu0 %v174
  %733 = vmatpush1.bf16.msra.mxu0 %v173
  %734 = vmatprep.subr.bf16.mxu0 %v178
  %735 = vmatpush1.bf16.msra.mxu0 %v177
  %736 = vmatprep.subr.bf16.mxu0 %v182
  %737 = vmatpush1.bf16.msra.mxu0 %v181
  %738 = vmatprep.subr.bf16.mxu0 %v186
  %739 = vmatpush1.bf16.msra.mxu0 %v185
  %740 = vmatprep.subr.bf16.mxu0 %v190
  %741 = vmatpush1.bf16.msra.mxu0 %v189
  %742 = vmatprep.subr.bf16.mxu0 %v194
  %743 = vmatpush1.bf16.msra.mxu0 %v193
  %744 = vmatprep.subr.bf16.mxu0 %v198
  %745 = vmatpush1.bf16.msra.mxu0 %v197
  %746 = vmatprep.subr.bf16.mxu0 0
  %747 = vmatpush1.bf16.msra.mxu0 0
  %748 = vmatprep.subr.bf16.mxu0 0
  %749 = vmatpush1.bf16.msra.mxu0 0
  %750 = vmatprep.subr.bf16.mxu0 0
  %751 = vmatpush1.bf16.msra.mxu0 0
  %752 = vmatprep.subr.bf16.mxu0 0
  %753 = vmatpush1.bf16.msra.mxu0 0
  %754 = vmatprep.subr.bf16.mxu0 0
  %755 = vmatpush1.bf16.msra.mxu0 0
  %756 = vmatprep.subr.bf16.mxu0 0
  %757 = vmatpush1.bf16.msra.mxu0 0
  %758 = vmatprep.subr.bf16.mxu0 0
  %759 = vmatpush1.bf16.msra.mxu0 0
  %760 = vmatprep.subr.bf16.mxu0 0
  %761 = vmatpush1.bf16.msra.mxu0 0
  %762 = vmatprep.mubr.bf16.mxu0 0
  %763 = vmatmul.mubr.bf16.gmra.mrb[0].mxu0 %v686
  %v764 = vpop.f32.mrb[0].mxu0
  %v765 = vadd.f32 0.0, %v764
  %v766 = vpop.f32.mrb[0].mxu0
  %v767 = vadd.f32 0.0, %v766
  %v768 = vpop.f32.mrb[0].mxu0
  %v769 = vadd.f32 0.0, %v768
  %v770 = vpop.f32.mrb[0].mxu0
  %v771 = vadd.f32 0.0, %v770
  %772 = vdwg.mxu0
  %v773 = vadd.f32 %v678, %v722
  %v774 = vadd.f32 %v679, %v724
  %v775 = vadd.f32 %v680, %v765
  %v776 = vadd.f32 %v681, %v767
  %v777 = vadd.f32 %v682, %v726
  %v778 = vadd.f32 %v683, %v728
  %v779 = vadd.f32 %v684, %v769
  %v780 = vadd.f32 %v685, %v771
  %v781 = vxor.u32 %v773, 2147483648
  %v782 = vxor.u32 %v777, 2147483648
  %v783 = vmul.f32 %v781, 1.442695
  %v784 = vpow.pop %v783
  %v785 = vmul.f32 %v782, 1.442695
  %v786 = vpow.pop %v785
  %v787 = vadd.f32 %v784, 1.0
  %v788 = vadd.f32 %v786, 1.0
  %v789 = vrcp.pop %v787
  %v790 = vmul.f32 1.0, %v789
  %v791 = vrcp.pop %v788
  %v792 = vmul.f32 1.0, %v791
  %v793 = vxor.u32 %v774, 2147483648
  %v794 = vxor.u32 %v778, 2147483648
  %v795 = vmul.f32 %v793, 1.442695
  %v796 = vpow.pop %v795
  %v797 = vmul.f32 %v794, 1.442695
  %v798 = vpow.pop %v797
  %v799 = vadd.f32 %v796, 1.0
  %v800 = vadd.f32 %v798, 1.0
  %v801 = vrcp.pop %v799
  %v802 = vmul.f32 1.0, %v801
  %v803 = vrcp.pop %v800
  %v804 = vmul.f32 1.0, %v803
  %v805 = vtanh.pop %v775
  %v806 = vtanh.pop %v779
  %v807 = vxor.u32 %v776, 2147483648
  %v808 = vxor.u32 %v780, 2147483648
  %v809 = vmul.f32 %v807, 1.442695
  %v810 = vpow.pop %v809
  %v811 = vmul.f32 %v808, 1.442695
  %v812 = vpow.pop %v811
  %v813 = vadd.f32 %v810, 1.0
  %v814 = vadd.f32 %v812, 1.0
  %v815 = vrcp.pop %v813
  %v816 = vmul.f32 1.0, %v815
  %v817 = vrcp.pop %v814
  %v818 = vmul.f32 1.0, %v817
  %v819 = vmul.f32 %v802, %v671
  %v820 = vmul.f32 %v804, %v672
  %v821 = vmul.f32 %v790, %v805
  %v822 = vmul.f32 %v792, %v806
  %v823 = vadd.f32 %v819, %v821
  %v824 = vadd.f32 %v820, %v822
  %v825 = vtanh.pop %v823
  %v826 = vtanh.pop %v824
  %v827 = vmul.f32 %v816, %v825
  %v828 = vmul.f32 %v818, %v826
  %s829 = scalar_lea.vmem %s0, 256
  %v830 = vld [vmem:[%s829] sm:$0xff]
  %v831 = vld [vmem:[%s829 + $0x8] sm:$0xff]
  %v832 = vld [vmem:[%s829 + $0x10] sm:$0xff]
  %v833 = vld [vmem:[%s829 + $0x18] sm:$0xff]
  %v834 = vld [vmem:[%s829 + $0x20] sm:$0xff]
  %v835 = vld [vmem:[%s829 + $0x28] sm:$0xff]
  %v836 = vld [vmem:[%s829 + $0x30] sm:$0xff]
  %v837 = vld [vmem:[%s829 + $0x38] sm:$0xff]
  %v838 = vpack.c.bf16 %v828, %v827
  %839 = vmatprep.subr.bf16.mxu0 %v168
  %840 = vmatpush1.bf16.msra.mxu0 %v167
  %841 = vmatprep.subr.bf16.mxu0 %v172
  %842 = vmatpush1.bf16.msra.mxu0 %v171
  %843 = vmatprep.subr.bf16.mxu0 %v176
  %844 = vmatpush1.bf16.msra.mxu0 %v175
  %845 = vmatprep.subr.bf16.mxu0 %v180
  %846 = vmatpush1.bf16.msra.mxu0 %v179
  %847 = vmatprep.subr.bf16.mxu0 %v184
  %848 = vmatpush1.bf16.msra.mxu0 %v183
  %849 = vmatprep.subr.bf16.mxu0 %v188
  %850 = vmatpush1.bf16.msra.mxu0 %v187
  %851 = vmatprep.subr.bf16.mxu0 %v192
  %852 = vmatpush1.bf16.msra.mxu0 %v191
  %853 = vmatprep.subr.bf16.mxu0 %v196
  %854 = vmatpush1.bf16.msra.mxu0 %v195
  %855 = vmatprep.subr.bf16.mxu0 0
  %856 = vmatpush1.bf16.msra.mxu0 0
  %857 = vmatprep.subr.bf16.mxu0 0
  %858 = vmatpush1.bf16.msra.mxu0 0
  %859 = vmatprep.subr.bf16.mxu0 0
  %860 = vmatpush1.bf16.msra.mxu0 0
  %861 = vmatprep.subr.bf16.mxu0 0
  %862 = vmatpush1.bf16.msra.mxu0 0
  %863 = vmatprep.subr.bf16.mxu0 0
  %864 = vmatpush1.bf16.msra.mxu0 0
  %865 = vmatprep.subr.bf16.mxu0 0
  %866 = vmatpush1.bf16.msra.mxu0 0
  %867 = vmatprep.subr.bf16.mxu0 0
  %868 = vmatpush1.bf16.msra.mxu0 0
  %869 = vmatprep.subr.bf16.mxu0 0
  %870 = vmatpush1.bf16.msra.mxu0 0
  %871 = vmatprep.mubr.bf16.mxu0 0
  %872 = vmatmul.mubr.bf16.gmra.mrb[0].mxu0 %v838
  %v873 = vpop.f32.mrb[0].mxu0
  %v874 = vadd.f32 0.0, %v873
  %v875 = vpop.f32.mrb[0].mxu0
  %v876 = vadd.f32 0.0, %v875
  %v877 = vpop.f32.mrb[0].mxu0
  %v878 = vadd.f32 0.0, %v877
  %v879 = vpop.f32.mrb[0].mxu0
  %v880 = vadd.f32 0.0, %v879
  %881 = vdwg.mxu0
  %882 = vmatprep.subr.bf16.mxu0 %v170
  %883 = vmatpush1.bf16.msra.mxu0 %v169
  %884 = vmatprep.subr.bf16.mxu0 %v174
  %885 = vmatpush1.bf16.msra.mxu0 %v173
  %886 = vmatprep.subr.bf16.mxu0 %v178
  %887 = vmatpush1.bf16.msra.mxu0 %v177
  %888 = vmatprep.subr.bf16.mxu0 %v182
  %889 = vmatpush1.bf16.msra.mxu0 %v181
  %890 = vmatprep.subr.bf16.mxu0 %v186
  %891 = vmatpush1.bf16.msra.mxu0 %v185
  %892 = vmatprep.subr.bf16.mxu0 %v190
  %893 = vmatpush1.bf16.msra.mxu0 %v189
  %894 = vmatprep.subr.bf16.mxu0 %v194
  %895 = vmatpush1.bf16.msra.mxu0 %v193
  %896 = vmatprep.subr.bf16.mxu0 %v198
  %897 = vmatpush1.bf16.msra.mxu0 %v197
  %898 = vmatprep.subr.bf16.mxu0 0
  %899 = vmatpush1.bf16.msra.mxu0 0
  %900 = vmatprep.subr.bf16.mxu0 0
  %901 = vmatpush1.bf16.msra.mxu0 0
  %902 = vmatprep.subr.bf16.mxu0 0
  %903 = vmatpush1.bf16.msra.mxu0 0
  %904 = vmatprep.subr.bf16.mxu0 0
  %905 = vmatpush1.bf16.msra.mxu0 0
  %906 = vmatprep.subr.bf16.mxu0 0
  %907 = vmatpush1.bf16.msra.mxu0 0
  %908 = vmatprep.subr.bf16.mxu0 0
  %909 = vmatpush1.bf16.msra.mxu0 0
  %910 = vmatprep.subr.bf16.mxu0 0
  %911 = vmatpush1.bf16.msra.mxu0 0
  %912 = vmatprep.subr.bf16.mxu0 0
  %913 = vmatpush1.bf16.msra.mxu0 0
  %914 = vmatprep.mubr.bf16.mxu0 0
  %915 = vmatmul.mubr.bf16.gmra.mrb[0].mxu0 %v838
  %v916 = vpop.f32.mrb[0].mxu0
  %v917 = vadd.f32 0.0, %v916
  %v918 = vpop.f32.mrb[0].mxu0
  %v919 = vadd.f32 0.0, %v918
  %v920 = vpop.f32.mrb[0].mxu0
  %v921 = vadd.f32 0.0, %v920
  %v922 = vpop.f32.mrb[0].mxu0
  %v923 = vadd.f32 0.0, %v922
  %924 = vdwg.mxu0
  %v925 = vadd.f32 %v830, %v874
  %v926 = vadd.f32 %v831, %v876
  %v927 = vadd.f32 %v832, %v917
  %v928 = vadd.f32 %v833, %v919
  %v929 = vadd.f32 %v834, %v878
  %v930 = vadd.f32 %v835, %v880
  %v931 = vadd.f32 %v836, %v921
  %v932 = vadd.f32 %v837, %v923
  %v933 = vxor.u32 %v925, 2147483648
  %v934 = vxor.u32 %v929, 2147483648
  %v935 = vmul.f32 %v933, 1.442695
  %v936 = vpow.pop %v935
  %v937 = vmul.f32 %v934, 1.442695
  %v938 = vpow.pop %v937
  %v939 = vadd.f32 %v936, 1.0
  %v940 = vadd.f32 %v938, 1.0
  %v941 = vrcp.pop %v939
  %v942 = vmul.f32 1.0, %v941
  %v943 = vrcp.pop %v940
  %v944 = vmul.f32 1.0, %v943
  %v945 = vxor.u32 %v926, 2147483648
  %v946 = vxor.u32 %v930, 2147483648
  %v947 = vmul.f32 %v945, 1.442695
  %v948 = vpow.pop %v947
  %v949 = vmul.f32 %v946, 1.442695
  %v950 = vpow.pop %v949
  %v951 = vadd.f32 %v948, 1.0
  %v952 = vadd.f32 %v950, 1.0
  %v953 = vrcp.pop %v951
  %v954 = vmul.f32 1.0, %v953
  %v955 = vrcp.pop %v952
  %v956 = vmul.f32 1.0, %v955
  %v957 = vtanh.pop %v927
  %v958 = vtanh.pop %v931
  %v959 = vxor.u32 %v928, 2147483648
  %v960 = vxor.u32 %v932, 2147483648
  %v961 = vmul.f32 %v959, 1.442695
  %v962 = vpow.pop %v961
  %v963 = vmul.f32 %v960, 1.442695
  %v964 = vpow.pop %v963
  %v965 = vadd.f32 %v962, 1.0
  %v966 = vadd.f32 %v964, 1.0
  %v967 = vrcp.pop %v965
  %v968 = vmul.f32 1.0, %v967
  %v969 = vrcp.pop %v966
  %v970 = vmul.f32 1.0, %v969
  %v971 = vmul.f32 %v954, %v823
  %v972 = vmul.f32 %v956, %v824
  %v973 = vmul.f32 %v942, %v957
  %v974 = vmul.f32 %v944, %v958
  %v975 = vadd.f32 %v971, %v973
  %v976 = vadd.f32 %v972, %v974
  %v977 = vtanh.pop %v975
  %v978 = vtanh.pop %v976
  %v979 = vmul.f32 %v968, %v977
  %v980 = vmul.f32 %v970, %v978
  %s981 = scalar_lea.vmem %s0, 320
  %v982 = vld [vmem:[%s981] sm:$0xff]
  %v983 = vld [vmem:[%s981 + $0x8] sm:$0xff]
  %v984 = vld [vmem:[%s981 + $0x10] sm:$0xff]
  %v985 = vld [vmem:[%s981 + $0x18] sm:$0xff]
  %v986 = vld [vmem:[%s981 + $0x20] sm:$0xff]
  %v987 = vld [vmem:[%s981 + $0x28] sm:$0xff]
  %v988 = vld [vmem:[%s981 + $0x30] sm:$0xff]
  %v989 = vld [vmem:[%s981 + $0x38] sm:$0xff]
  %v990 = vpack.c.bf16 %v980, %v979
  %991 = vmatprep.subr.bf16.mxu0 %v168
  %992 = vmatpush1.bf16.msra.mxu0 %v167
  %993 = vmatprep.subr.bf16.mxu0 %v172
  %994 = vmatpush1.bf16.msra.mxu0 %v171
  %995 = vmatprep.subr.bf16.mxu0 %v176
  %996 = vmatpush1.bf16.msra.mxu0 %v175
  %997 = vmatprep.subr.bf16.mxu0 %v180
  %998 = vmatpush1.bf16.msra.mxu0 %v179
  %999 = vmatprep.subr.bf16.mxu0 %v184
  %1000 = vmatpush1.bf16.msra.mxu0 %v183
  %1001 = vmatprep.subr.bf16.mxu0 %v188
  %1002 = vmatpush1.bf16.msra.mxu0 %v187
  %1003 = vmatprep.subr.bf16.mxu0 %v192
  %1004 = vmatpush1.bf16.msra.mxu0 %v191
  %1005 = vmatprep.subr.bf16.mxu0 %v196
  %1006 = vmatpush1.bf16.msra.mxu0 %v195
  %1007 = vmatprep.subr.bf16.mxu0 0
  %1008 = vmatpush1.bf16.msra.mxu0 0
  %1009 = vmatprep.subr.bf16.mxu0 0
  %1010 = vmatpush1.bf16.msra.mxu0 0
  %1011 = vmatprep.subr.bf16.mxu0 0
  %1012 = vmatpush1.bf16.msra.mxu0 0
  %1013 = vmatprep.subr.bf16.mxu0 0
  %1014 = vmatpush1.bf16.msra.mxu0 0
  %1015 = vmatprep.subr.bf16.mxu0 0
  %1016 = vmatpush1.bf16.msra.mxu0 0
  %1017 = vmatprep.subr.bf16.mxu0 0
  %1018 = vmatpush1.bf16.msra.mxu0 0
  %1019 = vmatprep.subr.bf16.mxu0 0
  %1020 = vmatpush1.bf16.msra.mxu0 0
  %1021 = vmatprep.subr.bf16.mxu0 0
  %1022 = vmatpush1.bf16.msra.mxu0 0
  %1023 = vmatprep.mubr.bf16.mxu0 0
  %1024 = vmatmul.mubr.bf16.gmra.mrb[0].mxu0 %v990
  %v1025 = vpop.f32.mrb[0].mxu0
  %v1026 = vadd.f32 0.0, %v1025
  %v1027 = vpop.f32.mrb[0].mxu0
  %v1028 = vadd.f32 0.0, %v1027
  %v1029 = vpop.f32.mrb[0].mxu0
  %v1030 = vadd.f32 0.0, %v1029
  %v1031 = vpop.f32.mrb[0].mxu0
  %v1032 = vadd.f32 0.0, %v1031
  %1033 = vdwg.mxu0
  %1034 = vmatprep.subr.bf16.mxu0 %v170
  %1035 = vmatpush1.bf16.msra.mxu0 %v169
  %1036 = vmatprep.subr.bf16.mxu0 %v174
  %1037 = vmatpush1.bf16.msra.mxu0 %v173
  %1038 = vmatprep.subr.bf16.mxu0 %v178
  %1039 = vmatpush1.bf16.msra.mxu0 %v177
  %1040 = vmatprep.subr.bf16.mxu0 %v182
  %1041 = vmatpush1.bf16.msra.mxu0 %v181
  %1042 = vmatprep.subr.bf16.mxu0 %v186
  %1043 = vmatpush1.bf16.msra.mxu0 %v185
  %1044 = vmatprep.subr.bf16.mxu0 %v190
  %1045 = vmatpush1.bf16.msra.mxu0 %v189
  %1046 = vmatprep.subr.bf16.mxu0 %v194
  %1047 = vmatpush1.bf16.msra.mxu0 %v193
  %1048 = vmatprep.subr.bf16.mxu0 %v198
  %1049 = vmatpush1.bf16.msra.mxu0 %v197
  %1050 = vmatprep.subr.bf16.mxu0 0
  %1051 = vmatpush1.bf16.msra.mxu0 0
  %1052 = vmatprep.subr.bf16.mxu0 0
  %1053 = vmatpush1.bf16.msra.mxu0 0
  %1054 = vmatprep.subr.bf16.mxu0 0
  %1055 = vmatpush1.bf16.msra.mxu0 0
  %1056 = vmatprep.subr.bf16.mxu0 0
  %1057 = vmatpush1.bf16.msra.mxu0 0
  %1058 = vmatprep.subr.bf16.mxu0 0
  %1059 = vmatpush1.bf16.msra.mxu0 0
  %1060 = vmatprep.subr.bf16.mxu0 0
  %1061 = vmatpush1.bf16.msra.mxu0 0
  %1062 = vmatprep.subr.bf16.mxu0 0
  %1063 = vmatpush1.bf16.msra.mxu0 0
  %1064 = vmatprep.subr.bf16.mxu0 0
  %1065 = vmatpush1.bf16.msra.mxu0 0
  %1066 = vmatprep.mubr.bf16.mxu0 0
  %1067 = vmatmul.mubr.bf16.gmra.mrb[0].mxu0 %v990
  %v1068 = vpop.f32.mrb[0].mxu0
  %v1069 = vadd.f32 0.0, %v1068
  %v1070 = vpop.f32.mrb[0].mxu0
  %v1071 = vadd.f32 0.0, %v1070
  %v1072 = vpop.f32.mrb[0].mxu0
  %v1073 = vadd.f32 0.0, %v1072
  %v1074 = vpop.f32.mrb[0].mxu0
  %v1075 = vadd.f32 0.0, %v1074
  %1076 = vdwg.mxu0
  %v1077 = vadd.f32 %v982, %v1026
  %v1078 = vadd.f32 %v983, %v1028
  %v1079 = vadd.f32 %v984, %v1069
  %v1080 = vadd.f32 %v985, %v1071
  %v1081 = vadd.f32 %v986, %v1030
  %v1082 = vadd.f32 %v987, %v1032
  %v1083 = vadd.f32 %v988, %v1073
  %v1084 = vadd.f32 %v989, %v1075
  %v1085 = vxor.u32 %v1077, 2147483648
  %v1086 = vxor.u32 %v1081, 2147483648
  %v1087 = vmul.f32 %v1085, 1.442695
  %v1088 = vpow.pop %v1087
  %v1089 = vmul.f32 %v1086, 1.442695
  %v1090 = vpow.pop %v1089
  %v1091 = vadd.f32 %v1088, 1.0
  %v1092 = vadd.f32 %v1090, 1.0
  %v1093 = vrcp.pop %v1091
  %v1094 = vmul.f32 1.0, %v1093
  %v1095 = vrcp.pop %v1092
  %v1096 = vmul.f32 1.0, %v1095
  %v1097 = vxor.u32 %v1078, 2147483648
  %v1098 = vxor.u32 %v1082, 2147483648
  %v1099 = vmul.f32 %v1097, 1.442695
  %v1100 = vpow.pop %v1099
  %v1101 = vmul.f32 %v1098, 1.442695
  %v1102 = vpow.pop %v1101
  %v1103 = vadd.f32 %v1100, 1.0
  %v1104 = vadd.f32 %v1102, 1.0
  %v1105 = vrcp.pop %v1103
  %v1106 = vmul.f32 1.0, %v1105
  %v1107 = vrcp.pop %v1104
  %v1108 = vmul.f32 1.0, %v1107
  %v1109 = vtanh.pop %v1079
  %v1110 = vtanh.pop %v1083
  %v1111 = vxor.u32 %v1080, 2147483648
  %v1112 = vxor.u32 %v1084, 2147483648
  %v1113 = vmul.f32 %v1111, 1.442695
  %v1114 = vpow.pop %v1113
  %v1115 = vmul.f32 %v1112, 1.442695
  %v1116 = vpow.pop %v1115
  %v1117 = vadd.f32 %v1114, 1.0
  %v1118 = vadd.f32 %v1116, 1.0
  %v1119 = vrcp.pop %v1117
  %v1120 = vmul.f32 1.0, %v1119
  %v1121 = vrcp.pop %v1118
  %v1122 = vmul.f32 1.0, %v1121
  %v1123 = vmul.f32 %v1106, %v975
  %v1124 = vmul.f32 %v1108, %v976
  %v1125 = vmul.f32 %v1094, %v1109
  %v1126 = vmul.f32 %v1096, %v1110
  %v1127 = vadd.f32 %v1123, %v1125
  %v1128 = vadd.f32 %v1124, %v1126
  %v1129 = vtanh.pop %v1127
  %v1130 = vtanh.pop %v1128
  %v1131 = vmul.f32 %v1120, %v1129
  %v1132 = vmul.f32 %v1122, %v1130
  %s1133 = scalar_lea.vmem %s0, 384
  %v1134 = vld [vmem:[%s1133] sm:$0xff]
  %v1135 = vld [vmem:[%s1133 + $0x8] sm:$0xff]
  %v1136 = vld [vmem:[%s1133 + $0x10] sm:$0xff]
  %v1137 = vld [vmem:[%s1133 + $0x18] sm:$0xff]
  %v1138 = vld [vmem:[%s1133 + $0x20] sm:$0xff]
  %v1139 = vld [vmem:[%s1133 + $0x28] sm:$0xff]
  %v1140 = vld [vmem:[%s1133 + $0x30] sm:$0xff]
  %v1141 = vld [vmem:[%s1133 + $0x38] sm:$0xff]
  %v1142 = vpack.c.bf16 %v1132, %v1131
  %1143 = vmatprep.subr.bf16.mxu0 %v168
  %1144 = vmatpush1.bf16.msra.mxu0 %v167
  %1145 = vmatprep.subr.bf16.mxu0 %v172
  %1146 = vmatpush1.bf16.msra.mxu0 %v171
  %1147 = vmatprep.subr.bf16.mxu0 %v176
  %1148 = vmatpush1.bf16.msra.mxu0 %v175
  %1149 = vmatprep.subr.bf16.mxu0 %v180
  %1150 = vmatpush1.bf16.msra.mxu0 %v179
  %1151 = vmatprep.subr.bf16.mxu0 %v184
  %1152 = vmatpush1.bf16.msra.mxu0 %v183
  %1153 = vmatprep.subr.bf16.mxu0 %v188
  %1154 = vmatpush1.bf16.msra.mxu0 %v187
  %1155 = vmatprep.subr.bf16.mxu0 %v192
  %1156 = vmatpush1.bf16.msra.mxu0 %v191
  %1157 = vmatprep.subr.bf16.mxu0 %v196
  %1158 = vmatpush1.bf16.msra.mxu0 %v195
  %1159 = vmatprep.subr.bf16.mxu0 0
  %1160 = vmatpush1.bf16.msra.mxu0 0
  %1161 = vmatprep.subr.bf16.mxu0 0
  %1162 = vmatpush1.bf16.msra.mxu0 0
  %1163 = vmatprep.subr.bf16.mxu0 0
  %1164 = vmatpush1.bf16.msra.mxu0 0
  %1165 = vmatprep.subr.bf16.mxu0 0
  %1166 = vmatpush1.bf16.msra.mxu0 0
  %1167 = vmatprep.subr.bf16.mxu0 0
  %1168 = vmatpush1.bf16.msra.mxu0 0
  %1169 = vmatprep.subr.bf16.mxu0 0
  %1170 = vmatpush1.bf16.msra.mxu0 0
  %1171 = vmatprep.subr.bf16.mxu0 0
  %1172 = vmatpush1.bf16.msra.mxu0 0
  %1173 = vmatprep.subr.bf16.mxu0 0
  %1174 = vmatpush1.bf16.msra.mxu0 0
  %1175 = vmatprep.mubr.bf16.mxu0 0
  %1176 = vmatmul.mubr.bf16.gmra.mrb[0].mxu0 %v1142
  %v1177 = vpop.f32.mrb[0].mxu0
  %v1178 = vadd.f32 0.0, %v1177
  %v1179 = vpop.f32.mrb[0].mxu0
  %v1180 = vadd.f32 0.0, %v1179
  %v1181 = vpop.f32.mrb[0].mxu0
  %v1182 = vadd.f32 0.0, %v1181
  %v1183 = vpop.f32.mrb[0].mxu0
  %v1184 = vadd.f32 0.0, %v1183
  %1185 = vdwg.mxu0
  %1186 = vmatprep.subr.bf16.mxu0 %v170
  %1187 = vmatpush1.bf16.msra.mxu0 %v169
  %1188 = vmatprep.subr.bf16.mxu0 %v174
  %1189 = vmatpush1.bf16.msra.mxu0 %v173
  %1190 = vmatprep.subr.bf16.mxu0 %v178
  %1191 = vmatpush1.bf16.msra.mxu0 %v177
  %1192 = vmatprep.subr.bf16.mxu0 %v182
  %1193 = vmatpush1.bf16.msra.mxu0 %v181
  %1194 = vmatprep.subr.bf16.mxu0 %v186
  %1195 = vmatpush1.bf16.msra.mxu0 %v185
  %1196 = vmatprep.subr.bf16.mxu0 %v190
  %1197 = vmatpush1.bf16.msra.mxu0 %v189
  %1198 = vmatprep.subr.bf16.mxu0 %v194
  %1199 = vmatpush1.bf16.msra.mxu0 %v193
  %1200 = vmatprep.subr.bf16.mxu0 %v198
  %1201 = vmatpush1.bf16.msra.mxu0 %v197
  %1202 = vmatprep.subr.bf16.mxu0 0
  %1203 = vmatpush1.bf16.msra.mxu0 0
  %1204 = vmatprep.subr.bf16.mxu0 0
  %1205 = vmatpush1.bf16.msra.mxu0 0
  %1206 = vmatprep.subr.bf16.mxu0 0
  %1207 = vmatpush1.bf16.msra.mxu0 0
  %1208 = vmatprep.subr.bf16.mxu0 0
  %1209 = vmatpush1.bf16.msra.mxu0 0
  %1210 = vmatprep.subr.bf16.mxu0 0
  %1211 = vmatpush1.bf16.msra.mxu0 0
  %1212 = vmatprep.subr.bf16.mxu0 0
  %1213 = vmatpush1.bf16.msra.mxu0 0
  %1214 = vmatprep.subr.bf16.mxu0 0
  %1215 = vmatpush1.bf16.msra.mxu0 0
  %1216 = vmatprep.subr.bf16.mxu0 0
  %1217 = vmatpush1.bf16.msra.mxu0 0
  %1218 = vmatprep.mubr.bf16.mxu0 0
  %1219 = vmatmul.mubr.bf16.gmra.mrb[0].mxu0 %v1142
  %v1220 = vpop.f32.mrb[0].mxu0
  %v1221 = vadd.f32 0.0, %v1220
  %v1222 = vpop.f32.mrb[0].mxu0
  %v1223 = vadd.f32 0.0, %v1222
  %v1224 = vpop.f32.mrb[0].mxu0
  %v1225 = vadd.f32 0.0, %v1224
  %v1226 = vpop.f32.mrb[0].mxu0
  %v1227 = vadd.f32 0.0, %v1226
  %1228 = vdwg.mxu0
  %v1229 = vadd.f32 %v1134, %v1178
  %v1230 = vadd.f32 %v1135, %v1180
  %v1231 = vadd.f32 %v1136, %v1221
  %v1232 = vadd.f32 %v1137, %v1223
  %v1233 = vadd.f32 %v1138, %v1182
  %v1234 = vadd.f32 %v1139, %v1184
  %v1235 = vadd.f32 %v1140, %v1225
  %v1236 = vadd.f32 %v1141, %v1227
  %v1237 = vxor.u32 %v1229, 2147483648
  %v1238 = vxor.u32 %v1233, 2147483648
  %v1239 = vmul.f32 %v1237, 1.442695
  %v1240 = vpow.pop %v1239
  %v1241 = vmul.f32 %v1238, 1.442695
  %v1242 = vpow.pop %v1241
  %v1243 = vadd.f32 %v1240, 1.0
  %v1244 = vadd.f32 %v1242, 1.0
  %v1245 = vrcp.pop %v1243
  %v1246 = vmul.f32 1.0, %v1245
  %v1247 = vrcp.pop %v1244
  %v1248 = vmul.f32 1.0, %v1247
  %v1249 = vxor.u32 %v1230, 2147483648
  %v1250 = vxor.u32 %v1234, 2147483648
  %v1251 = vmul.f32 %v1249, 1.442695
  %v1252 = vpow.pop %v1251
  %v1253 = vmul.f32 %v1250, 1.442695
  %v1254 = vpow.pop %v1253
  %v1255 = vadd.f32 %v1252, 1.0
  %v1256 = vadd.f32 %v1254, 1.0
  %v1257 = vrcp.pop %v1255
  %v1258 = vmul.f32 1.0, %v1257
  %v1259 = vrcp.pop %v1256
  %v1260 = vmul.f32 1.0, %v1259
  %v1261 = vtanh.pop %v1231
  %v1262 = vtanh.pop %v1235
  %v1263 = vxor.u32 %v1232, 2147483648
  %v1264 = vxor.u32 %v1236, 2147483648
  %v1265 = vmul.f32 %v1263, 1.442695
  %v1266 = vpow.pop %v1265
  %v1267 = vmul.f32 %v1264, 1.442695
  %v1268 = vpow.pop %v1267
  %v1269 = vadd.f32 %v1266, 1.0
  %v1270 = vadd.f32 %v1268, 1.0
  %v1271 = vrcp.pop %v1269
  %v1272 = vmul.f32 1.0, %v1271
  %v1273 = vrcp.pop %v1270
  %v1274 = vmul.f32 1.0, %v1273
  %v1275 = vmul.f32 %v1258, %v1127
  %v1276 = vmul.f32 %v1260, %v1128
  %v1277 = vmul.f32 %v1246, %v1261
  %v1278 = vmul.f32 %v1248, %v1262
  %v1279 = vadd.f32 %v1275, %v1277
  %v1280 = vadd.f32 %v1276, %v1278
  %v1281 = vtanh.pop %v1279
  %v1282 = vtanh.pop %v1280
  %v1283 = vmul.f32 %v1272, %v1281
  %v1284 = vmul.f32 %v1274, %v1282
  %s1285 = scalar_lea.vmem %s0, 448
  %v1286 = vld [vmem:[%s1285] sm:$0xff]
  %v1287 = vld [vmem:[%s1285 + $0x8] sm:$0xff]
  %v1288 = vld [vmem:[%s1285 + $0x10] sm:$0xff]
  %v1289 = vld [vmem:[%s1285 + $0x18] sm:$0xff]
  %v1290 = vld [vmem:[%s1285 + $0x20] sm:$0xff]
  %v1291 = vld [vmem:[%s1285 + $0x28] sm:$0xff]
  %v1292 = vld [vmem:[%s1285 + $0x30] sm:$0xff]
  %v1293 = vld [vmem:[%s1285 + $0x38] sm:$0xff]
  %v1294 = vpack.c.bf16 %v1284, %v1283
  %1295 = vmatprep.subr.bf16.mxu0 %v168
  %1296 = vmatpush1.bf16.msra.mxu0 %v167
  %1297 = vmatprep.subr.bf16.mxu0 %v172
  %1298 = vmatpush1.bf16.msra.mxu0 %v171
  %1299 = vmatprep.subr.bf16.mxu0 %v176
  %1300 = vmatpush1.bf16.msra.mxu0 %v175
  %1301 = vmatprep.subr.bf16.mxu0 %v180
  %1302 = vmatpush1.bf16.msra.mxu0 %v179
  %1303 = vmatprep.subr.bf16.mxu0 %v184
  %1304 = vmatpush1.bf16.msra.mxu0 %v183
  %1305 = vmatprep.subr.bf16.mxu0 %v188
  %1306 = vmatpush1.bf16.msra.mxu0 %v187
  %1307 = vmatprep.subr.bf16.mxu0 %v192
  %1308 = vmatpush1.bf16.msra.mxu0 %v191
  %1309 = vmatprep.subr.bf16.mxu0 %v196
  %1310 = vmatpush1.bf16.msra.mxu0 %v195
  %1311 = vmatprep.subr.bf16.mxu0 0
  %1312 = vmatpush1.bf16.msra.mxu0 0
  %1313 = vmatprep.subr.bf16.mxu0 0
  %1314 = vmatpush1.bf16.msra.mxu0 0
  %1315 = vmatprep.subr.bf16.mxu0 0
  %1316 = vmatpush1.bf16.msra.mxu0 0
  %1317 = vmatprep.subr.bf16.mxu0 0
  %1318 = vmatpush1.bf16.msra.mxu0 0
  %1319 = vmatprep.subr.bf16.mxu0 0
  %1320 = vmatpush1.bf16.msra.mxu0 0
  %1321 = vmatprep.subr.bf16.mxu0 0
  %1322 = vmatpush1.bf16.msra.mxu0 0
  %1323 = vmatprep.subr.bf16.mxu0 0
  %1324 = vmatpush1.bf16.msra.mxu0 0
  %1325 = vmatprep.subr.bf16.mxu0 0
  %1326 = vmatpush1.bf16.msra.mxu0 0
  %1327 = vmatprep.mubr.bf16.mxu0 0
  %1328 = vmatmul.mubr.bf16.gmra.mrb[0].mxu0 %v1294
  %v1329 = vpop.f32.mrb[0].mxu0
  %v1330 = vadd.f32 0.0, %v1329
  %v1331 = vpop.f32.mrb[0].mxu0
  %v1332 = vadd.f32 0.0, %v1331
  %v1333 = vpop.f32.mrb[0].mxu0
  %v1334 = vadd.f32 0.0, %v1333
  %v1335 = vpop.f32.mrb[0].mxu0
  %v1336 = vadd.f32 0.0, %v1335
  %1337 = vdwg.mxu0
  %1338 = vmatprep.subr.bf16.mxu0 %v170
  %1339 = vmatpush1.bf16.msra.mxu0 %v169
  %1340 = vmatprep.subr.bf16.mxu0 %v174
  %1341 = vmatpush1.bf16.msra.mxu0 %v173
  %1342 = vmatprep.subr.bf16.mxu0 %v178
  %1343 = vmatpush1.bf16.msra.mxu0 %v177
  %1344 = vmatprep.subr.bf16.mxu0 %v182
  %1345 = vmatpush1.bf16.msra.mxu0 %v181
  %1346 = vmatprep.subr.bf16.mxu0 %v186
  %1347 = vmatpush1.bf16.msra.mxu0 %v185
  %1348 = vmatprep.subr.bf16.mxu0 %v190
  %1349 = vmatpush1.bf16.msra.mxu0 %v189
  %1350 = vmatprep.subr.bf16.mxu0 %v194
  %1351 = vmatpush1.bf16.msra.mxu0 %v193
  %1352 = vmatprep.subr.bf16.mxu0 %v198
  %1353 = vmatpush1.bf16.msra.mxu0 %v197
  %1354 = vmatprep.subr.bf16.mxu0 0
  %1355 = vmatpush1.bf16.msra.mxu0 0
  %1356 = vmatprep.subr.bf16.mxu0 0
  %1357 = vmatpush1.bf16.msra.mxu0 0
  %1358 = vmatprep.subr.bf16.mxu0 0
  %1359 = vmatpush1.bf16.msra.mxu0 0
  %1360 = vmatprep.subr.bf16.mxu0 0
  %1361 = vmatpush1.bf16.msra.mxu0 0
  %1362 = vmatprep.subr.bf16.mxu0 0
  %1363 = vmatpush1.bf16.msra.mxu0 0
  %1364 = vmatprep.subr.bf16.mxu0 0
  %1365 = vmatpush1.bf16.msra.mxu0 0
  %1366 = vmatprep.subr.bf16.mxu0 0
  %1367 = vmatpush1.bf16.msra.mxu0 0
  %1368 = vmatprep.subr.bf16.mxu0 0
  %1369 = vmatpush1.bf16.msra.mxu0 0
  %1370 = vmatprep.mubr.bf16.mxu0 0
  %1371 = vmatmul.mubr.bf16.gmra.mrb[0].mxu0 %v1294
  %v1372 = vpop.f32.mrb[0].mxu0
  %v1373 = vadd.f32 0.0, %v1372
  %v1374 = vpop.f32.mrb[0].mxu0
  %v1375 = vadd.f32 0.0, %v1374
  %v1376 = vpop.f32.mrb[0].mxu0
  %v1377 = vadd.f32 0.0, %v1376
  %v1378 = vpop.f32.mrb[0].mxu0
  %v1379 = vadd.f32 0.0, %v1378
  %1380 = vdwg.mxu0
  %v1381 = vadd.f32 %v1286, %v1330
  %v1382 = vadd.f32 %v1287, %v1332
  %v1383 = vadd.f32 %v1288, %v1373
  %v1384 = vadd.f32 %v1289, %v1375
  %v1385 = vadd.f32 %v1290, %v1334
  %v1386 = vadd.f32 %v1291, %v1336
  %v1387 = vadd.f32 %v1292, %v1377
  %v1388 = vadd.f32 %v1293, %v1379
  %v1389 = vxor.u32 %v1381, 2147483648
  %v1390 = vxor.u32 %v1385, 2147483648
  %v1391 = vmul.f32 %v1389, 1.442695
  %v1392 = vpow.pop %v1391
  %v1393 = vmul.f32 %v1390, 1.442695
  %v1394 = vpow.pop %v1393
  %v1395 = vadd.f32 %v1392, 1.0
  %v1396 = vadd.f32 %v1394, 1.0
  %v1397 = vrcp.pop %v1395
  %v1398 = vmul.f32 1.0, %v1397
  %v1399 = vrcp.pop %v1396
  %v1400 = vmul.f32 1.0, %v1399
  %v1401 = vxor.u32 %v1382, 2147483648
  %v1402 = vxor.u32 %v1386, 2147483648
  %v1403 = vmul.f32 %v1401, 1.442695
  %v1404 = vpow.pop %v1403
  %v1405 = vmul.f32 %v1402, 1.442695
  %v1406 = vpow.pop %v1405
  %v1407 = vadd.f32 %v1404, 1.0
  %v1408 = vadd.f32 %v1406, 1.0
  %v1409 = vrcp.pop %v1407
  %v1410 = vmul.f32 1.0, %v1409
  %v1411 = vrcp.pop %v1408
  %v1412 = vmul.f32 1.0, %v1411
  %v1413 = vtanh.pop %v1383
  %v1414 = vtanh.pop %v1387
  %v1415 = vxor.u32 %v1384, 2147483648
  %v1416 = vxor.u32 %v1388, 2147483648
  %v1417 = vmul.f32 %v1415, 1.442695
  %v1418 = vpow.pop %v1417
  %v1419 = vmul.f32 %v1416, 1.442695
  %v1420 = vpow.pop %v1419
  %v1421 = vadd.f32 %v1418, 1.0
  %v1422 = vadd.f32 %v1420, 1.0
  %v1423 = vrcp.pop %v1421
  %v1424 = vmul.f32 1.0, %v1423
  %v1425 = vrcp.pop %v1422
  %v1426 = vmul.f32 1.0, %v1425
  %v1427 = vmul.f32 %v1410, %v1279
  %v1428 = vmul.f32 %v1412, %v1280
  %v1429 = vmul.f32 %v1398, %v1413
  %v1430 = vmul.f32 %v1400, %v1414
  %v1431 = vadd.f32 %v1427, %v1429
  %v1432 = vadd.f32 %v1428, %v1430
  %v1433 = vtanh.pop %v1431
  %v1434 = vtanh.pop %v1432
  %v1435 = vmul.f32 %v1424, %v1433
  %v1436 = vmul.f32 %v1426, %v1434
  %1437 = vst [vmem:[#allocation2] sm:$0xff] %v1435
  %1438 = vst [vmem:[#allocation2 + $0x8] sm:$0xff] %v1436
  %1439 = vst [vmem:[#allocation3] sm:$0xff] %v1431
  %1440 = vst [vmem:[#allocation3 + $0x8] sm:$0xff] %v1432
  // Predicated region
  $region22: #{deep_lstm_forward.7} parent=0 // pred_check
    %p1441 = pneg %p18
  $region23: #{deep_lstm_forward.7} parent=0 // pred_check_branch
    %1443 = sbr.rel (%p1441) target = $region25
  $region24: #{deep_lstm_forward.7} parent=0 // pred_region
    %v1444 = vpack.c.bf16 %v1436, %v1435
    %v1445 = vld [vmem:[%s2] sm:$0xf]
    %v1446 = vld [vmem:[%s2 + $0x4] sm:$0xf]
    %v1447 = vld [vmem:[%s2 + $0x8] sm:$0xf]
    %v1448 = vld [vmem:[%s2 + $0xc] sm:$0xf]
    %v1449 = vld [vmem:[%s2 + $0x10] sm:$0xf]
    %v1450 = vld [vmem:[%s2 + $0x14] sm:$0xf]
    %v1451 = vld [vmem:[%s2 + $0x18] sm:$0xf]
    %v1452 = vld [vmem:[%s2 + $0x1c] sm:$0xf]
    %v1453 = vld [vmem:[%s2 + $0x20] sm:$0xf]
    %v1454 = vld [vmem:[%s2 + $0x24] sm:$0xf]
    %v1455 = vld [vmem:[%s2 + $0x28] sm:$0xf]
    %v1456 = vld [vmem:[%s2 + $0x2c] sm:$0xf]
    %v1457 = vld [vmem:[%s2 + $0x30] sm:$0xf]
    %v1458 = vld [vmem:[%s2 + $0x34] sm:$0xf]
    %v1459 = vld [vmem:[%s2 + $0x38] sm:$0xf]
    %v1460 = vld [vmem:[%s2 + $0x3c] sm:$0xf]
    %v1461 = vld [vmem:[%s3] sm:$0x1]
    %v1463 = vlaneseq
    %v1464 = vshrl.u32 %v1463, 7
    %v1465 = vsub.s32 0, %v1464
    %v1466 = vrot.slane %v1461, %v1465
    %v1484 = vunpack.c.l.b16 %v1445
    %v1485 = vunpack.c.l.b16 %v1446
    %v1486 = vunpack.c.l.b16 %v1447
    %v1487 = vunpack.c.l.b16 %v1448
    %v1488 = vunpack.c.l.b16 %v1449
    %v1489 = vunpack.c.l.b16 %v1450
    %v1490 = vunpack.c.l.b16 %v1451
    %v1491 = vunpack.c.l.b16 %v1452
    %v1492 = vunpack.c.l.b16 %v1453
    %v1493 = vunpack.c.l.b16 %v1454
    %v1494 = vunpack.c.l.b16 %v1455
    %v1495 = vunpack.c.l.b16 %v1456
    %v1496 = vunpack.c.l.b16 %v1457
    %v1497 = vunpack.c.l.b16 %v1458
    %v1498 = vunpack.c.l.b16 %v1459
    %v1499 = vunpack.c.l.b16 %v1460
    %v1500 = vpack.c.b16 %v1485, %v1484
    %v1501 = vpack.c.b16 %v1487, %v1486
    %v1502 = vpack.c.b16 %v1489, %v1488
    %v1503 = vpack.c.b16 %v1491, %v1490
    %v1504 = vpack.c.b16 %v1493, %v1492
    %v1505 = vpack.c.b16 %v1495, %v1494
    %v1506 = vpack.c.b16 %v1497, %v1496
    %v1507 = vpack.c.b16 %v1499, %v1498
    %1516 = vmatprep.subr.bf16.mxu0 0
    %1517 = vmatpush1.bf16.msra.mxu0 %v1500
    %1518 = vmatprep.subr.bf16.mxu0 0
    %1519 = vmatpush1.bf16.msra.mxu0 %v1501
    %1520 = vmatprep.subr.bf16.mxu0 0
    %1521 = vmatpush1.bf16.msra.mxu0 %v1502
    %1522 = vmatprep.subr.bf16.mxu0 0
    %1523 = vmatpush1.bf16.msra.mxu0 %v1503
    %1524 = vmatprep.subr.bf16.mxu0 0
    %1525 = vmatpush1.bf16.msra.mxu0 %v1504
    %1526 = vmatprep.subr.bf16.mxu0 0
    %1527 = vmatpush1.bf16.msra.mxu0 %v1505
    %1528 = vmatprep.subr.bf16.mxu0 0
    %1529 = vmatpush1.bf16.msra.mxu0 %v1506
    %1530 = vmatprep.subr.bf16.mxu0 0
    %1531 = vmatpush1.bf16.msra.mxu0 %v1507
    %1532 = vmatprep.subr.bf16.mxu0 0
    %1533 = vmatpush1.bf16.msra.mxu0 0
    %1534 = vmatprep.subr.bf16.mxu0 0
    %1535 = vmatpush1.bf16.msra.mxu0 0
    %1536 = vmatprep.subr.bf16.mxu0 0
    %1537 = vmatpush1.bf16.msra.mxu0 0
    %1538 = vmatprep.subr.bf16.mxu0 0
    %1539 = vmatpush1.bf16.msra.mxu0 0
    %1540 = vmatprep.subr.bf16.mxu0 0
    %1541 = vmatpush1.bf16.msra.mxu0 0
    %1542 = vmatprep.subr.bf16.mxu0 0
    %1543 = vmatpush1.bf16.msra.mxu0 0
    %1544 = vmatprep.subr.bf16.mxu0 0
    %1545 = vmatpush1.bf16.msra.mxu0 0
    %1546 = vmatprep.subr.bf16.mxu0 0
    %1547 = vmatpush1.bf16.msra.mxu0 0
    %1548 = vmatprep.mubr.bf16.mxu0 0
    %1549 = vmatmul.mubr.bf16.gmra.mrb[0].mxu0 %v1444
    %v1550 = vpop.f32.mrb[0].mxu0
    %v1551 = vadd.f32 %v1466, %v1550
    %v1552 = vpop.f32.mrb[0].mxu0
    %v1553 = vpop.f32.mrb[0].mxu0
    %v1554 = vadd.f32 %v1466, %v1553
    %v1555 = vpop.f32.mrb[0].mxu0
    %1556 = vdwg.mxu0
    %vm1557 = vcmask 31744
    %1558 = vst.msk [vmem:[%s4] sm:$0xff] %vm1557, %v1551
    %1559 = vst.msk [vmem:[%s4 + $0x8] sm:$0xff] %vm1557, %v1554
  $region25: #{deep_lstm_forward.7} parent=0 // pred_fallthru
    _
  // Predicated region
  $region26: #{deep_lstm_forward.7} parent=0 // pred_check
    _
  $region27: #{deep_lstm_forward.7} parent=0 // pred_check_branch
    %1561 = sbr.rel (0) target = $region29
  $region28: #{deep_lstm_forward.7} parent=0 // pred_region
    _
  $region29: #{deep_lstm_forward.7} parent=0 // pred_fallthru
    _
  // Predicated region
  $region30: #{deep_lstm_forward.7} parent=0 // pred_check
    _
  $region31: #{deep_lstm_forward.7} parent=0 // pred_check_branch
    %1563 = sbr.rel (0) target = $region33
  $region32: #{deep_lstm_forward.7} parent=0 // pred_region
    _
  $region33: #{deep_lstm_forward.7} parent=0 // pred_fallthru
    _

// kernel: deep_lstm_forward.5
$region0: #{deep_lstm_forward.5}
  #allocation0 [shape = 'u32[]', space=smem, size = 0x4, offset = 0x4, fixed_abs, tag = 'smem constant byte address 0x4 - core index']
  #allocation1 [shape = 'u32[144,128]{1,0:T(1,128)}', space=vmem, size = 0x12000, scoped, tag = 'internal scratch']
  #allocation2 [shape = 'f32[16,128]{1,0:T(8,128)}', space=vmem, size = 0x2000, scoped, tag = 'scratch operand']
  #allocation3 [shape = 'f32[16,128]{1,0:T(8,128)}', space=vmem, size = 0x2000, scoped, tag = 'scratch operand']
  %s0 = inlined_call_operand.vmem [shape: f32[8,16,512], index: 0, kind: input, shape index: {}]
  %s1 = inlined_call_operand.vmem [shape: bf16[128,512], index: 1, kind: input, shape index: {}]
  %s2 = inlined_call_operand.vmem [shape: bf16[8,16,128], index: 2, kind: output, shape index: {}]
  %s3 = sld [smem:[#allocation0]]
  $region22: #{deep_lstm_forward.5} parent=0
    _
  %s5 = ssub.s32 1, %s3
  %s6 = scalar_select 0, %s5, %s3
  // Predicated region
  $region2: #{deep_lstm_forward.5} parent=0 // pred_check
    _
  $region3: #{deep_lstm_forward.5} parent=0 // pred_check_branch
    %8 = sbr.rel (0) target = $region5
  $region4: #{deep_lstm_forward.5} parent=0 // pred_region
    _
  $region5: #{deep_lstm_forward.5} parent=0 // pred_fallthru
    _
  // Predicated region
  $region6: #{deep_lstm_forward.5} parent=0 // pred_check
    _
  $region7: #{deep_lstm_forward.5} parent=0 // pred_check_branch
    %10 = sbr.rel (0) target = $region9
  $region8: #{deep_lstm_forward.5} parent=0 // pred_region
    _
  $region9: #{deep_lstm_forward.5} parent=0 // pred_fallthru
    _
  %p12 = scmp.eq.s32.totalorder 0, 0
  // Predicated region
  $region10: #{deep_lstm_forward.5} parent=0 // pred_check
    %p13 = pneg %p12
  $region11: #{deep_lstm_forward.5} parent=0 // pred_check_branch
    %15 = sbr.rel (%p13) target = $region13
  $region12: #{deep_lstm_forward.5} parent=0 // pred_region
    %16 = vst [vmem:[#allocation2] sm:$0xff] 0.0
    %17 = vst [vmem:[#allocation2 + $0x8] sm:$0xff] 0.0
    %18 = vst [vmem:[#allocation3] sm:$0xff] 0.0
    %19 = vst [vmem:[#allocation3 + $0x8] sm:$0xff] 0.0
  $region13: #{deep_lstm_forward.5} parent=0 // pred_fallthru
    _
  %v20 = vld [vmem:[#allocation2] sm:$0xff]
  %v21 = vld [vmem:[#allocation2 + $0x8] sm:$0xff]
  %v22 = vld [vmem:[#allocation3] sm:$0xff]
  %v23 = vld [vmem:[#allocation3 + $0x8] sm:$0xff]
  %v24 = vld [vmem:[%s0] sm:$0xff]
  %v25 = vld [vmem:[%s0 + $0x8] sm:$0xff]
  %v26 = vld [vmem:[%s0 + $0x10] sm:$0xff]
  %v27 = vld [vmem:[%s0 + $0x18] sm:$0xff]
  %v28 = vld [vmem:[%s0 + $0x20] sm:$0xff]
  %v29 = vld [vmem:[%s0 + $0x28] sm:$0xff]
  %v30 = vld [vmem:[%s0 + $0x30] sm:$0xff]
  %v31 = vld [vmem:[%s0 + $0x38] sm:$0xff]
  %v32 = vpack.c.bf16 %v21, %v20
  %v33 = vld [vmem:[%s1] sm:$0xff]
  %v34 = vld [vmem:[%s1 + $0x8] sm:$0xff]
  %v35 = vld [vmem:[%s1 + $0x10] sm:$0xff]
  %v36 = vld [vmem:[%s1 + $0x18] sm:$0xff]
  %v37 = vld [vmem:[%s1 + $0x20] sm:$0xff]
  %v38 = vld [vmem:[%s1 + $0x28] sm:$0xff]
  %v39 = vld [vmem:[%s1 + $0x30] sm:$0xff]
  %v40 = vld [vmem:[%s1 + $0x38] sm:$0xff]
  %v41 = vld [vmem:[%s1 + $0x40] sm:$0xff]
  %v42 = vld [vmem:[%s1 + $0x48] sm:$0xff]
  %v43 = vld [vmem:[%s1 + $0x50] sm:$0xff]
  %v44 = vld [vmem:[%s1 + $0x58] sm:$0xff]
  %v45 = vld [vmem:[%s1 + $0x60] sm:$0xff]
  %v46 = vld [vmem:[%s1 + $0x68] sm:$0xff]
  %v47 = vld [vmem:[%s1 + $0x70] sm:$0xff]
  %v48 = vld [vmem:[%s1 + $0x78] sm:$0xff]
  %v49 = vld [vmem:[%s1 + $0x80] sm:$0xff]
  %v50 = vld [vmem:[%s1 + $0x88] sm:$0xff]
  %v51 = vld [vmem:[%s1 + $0x90] sm:$0xff]
  %v52 = vld [vmem:[%s1 + $0x98] sm:$0xff]
  %v53 = vld [vmem:[%s1 + $0xa0] sm:$0xff]
  %v54 = vld [vmem:[%s1 + $0xa8] sm:$0xff]
  %v55 = vld [vmem:[%s1 + $0xb0] sm:$0xff]
  %v56 = vld [vmem:[%s1 + $0xb8] sm:$0xff]
  %v57 = vld [vmem:[%s1 + $0xc0] sm:$0xff]
  %v58 = vld [vmem:[%s1 + $0xc8] sm:$0xff]
  %v59 = vld [vmem:[%s1 + $0xd0] sm:$0xff]
  %v60 = vld [vmem:[%s1 + $0xd8] sm:$0xff]
  %v61 = vld [vmem:[%s1 + $0xe0] sm:$0xff]
  %v62 = vld [vmem:[%s1 + $0xe8] sm:$0xff]
  %v63 = vld [vmem:[%s1 + $0xf0] sm:$0xff]
  %v64 = vld [vmem:[%s1 + $0xf8] sm:$0xff]
  %v97 = vunpack.c.l.b16 %v33
  %v98 = vunpack.c.h.b16 %v33
  %v99 = vunpack.c.l.b16 %v34
  %v100 = vunpack.c.h.b16 %v34
  %v101 = vunpack.c.l.b16 %v35
  %v102 = vunpack.c.h.b16 %v35
  %v103 = vunpack.c.l.b16 %v36
  %v104 = vunpack.c.h.b16 %v36
  %v105 = vunpack.c.l.b16 %v37
  %v106 = vunpack.c.h.b16 %v37
  %v107 = vunpack.c.l.b16 %v38
  %v108 = vunpack.c.h.b16 %v38
  %v109 = vunpack.c.l.b16 %v39
  %v110 = vunpack.c.h.b16 %v39
  %v111 = vunpack.c.l.b16 %v40
  %v112 = vunpack.c.h.b16 %v40
  %v113 = vunpack.c.l.b16 %v41
  %v114 = vunpack.c.h.b16 %v41
  %v115 = vunpack.c.l.b16 %v42
  %v116 = vunpack.c.h.b16 %v42
  %v117 = vunpack.c.l.b16 %v43
  %v118 = vunpack.c.h.b16 %v43
  %v119 = vunpack.c.l.b16 %v44
  %v120 = vunpack.c.h.b16 %v44
  %v121 = vunpack.c.l.b16 %v45
  %v122 = vunpack.c.h.b16 %v45
  %v123 = vunpack.c.l.b16 %v46
  %v124 = vunpack.c.h.b16 %v46
  %v125 = vunpack.c.l.b16 %v47
  %v126 = vunpack.c.h.b16 %v47
  %v127 = vunpack.c.l.b16 %v48
  %v128 = vunpack.c.h.b16 %v48
  %v129 = vunpack.c.l.b16 %v49
  %v130 = vunpack.c.h.b16 %v49
  %v131 = vunpack.c.l.b16 %v50
  %v132 = vunpack.c.h.b16 %v50
  %v133 = vunpack.c.l.b16 %v51
  %v134 = vunpack.c.h.b16 %v51
  %v135 = vunpack.c.l.b16 %v52
  %v136 = vunpack.c.h.b16 %v52
  %v137 = vunpack.c.l.b16 %v53
  %v138 = vunpack.c.h.b16 %v53
  %v139 = vunpack.c.l.b16 %v54
  %v140 = vunpack.c.h.b16 %v54
  %v141 = vunpack.c.l.b16 %v55
  %v142 = vunpack.c.h.b16 %v55
  %v143 = vunpack.c.l.b16 %v56
  %v144 = vunpack.c.h.b16 %v56
  %v145 = vunpack.c.l.b16 %v57
  %v146 = vunpack.c.h.b16 %v57
  %v147 = vunpack.c.l.b16 %v58
  %v148 = vunpack.c.h.b16 %v58
  %v149 = vunpack.c.l.b16 %v59
  %v150 = vunpack.c.h.b16 %v59
  %v151 = vunpack.c.l.b16 %v60
  %v152 = vunpack.c.h.b16 %v60
  %v153 = vunpack.c.l.b16 %v61
  %v154 = vunpack.c.h.b16 %v61
  %v155 = vunpack.c.l.b16 %v62
  %v156 = vunpack.c.h.b16 %v62
  %v157 = vunpack.c.l.b16 %v63
  %v158 = vunpack.c.h.b16 %v63
  %v159 = vunpack.c.l.b16 %v64
  %v160 = vunpack.c.h.b16 %v64
  %v161 = vpack.c.b16 %v101, %v97
  %v162 = vpack.c.b16 %v102, %v98
  %v163 = vpack.c.b16 %v103, %v99
  %v164 = vpack.c.b16 %v104, %v100
  %v165 = vpack.c.b16 %v109, %v105
  %v166 = vpack.c.b16 %v110, %v106
  %v167 = vpack.c.b16 %v111, %v107
  %v168 = vpack.c.b16 %v112, %v108
  %v169 = vpack.c.b16 %v117, %v113
  %v170 = vpack.c.b16 %v118, %v114
  %v171 = vpack.c.b16 %v119, %v115
  %v172 = vpack.c.b16 %v120, %v116
  %v173 = vpack.c.b16 %v125, %v121
  %v174 = vpack.c.b16 %v126, %v122
  %v175 = vpack.c.b16 %v127, %v123
  %v176 = vpack.c.b16 %v128, %v124
  %v177 = vpack.c.b16 %v133, %v129
  %v178 = vpack.c.b16 %v134, %v130
  %v179 = vpack.c.b16 %v135, %v131
  %v180 = vpack.c.b16 %v136, %v132
  %v181 = vpack.c.b16 %v141, %v137
  %v182 = vpack.c.b16 %v142, %v138
  %v183 = vpack.c.b16 %v143, %v139
  %v184 = vpack.c.b16 %v144, %v140
  %v185 = vpack.c.b16 %v149, %v145
  %v186 = vpack.c.b16 %v150, %v146
  %v187 = vpack.c.b16 %v151, %v147
  %v188 = vpack.c.b16 %v152, %v148
  %v189 = vpack.c.b16 %v157, %v153
  %v190 = vpack.c.b16 %v158, %v154
  %v191 = vpack.c.b16 %v159, %v155
  %v192 = vpack.c.b16 %v160, %v156
  %225 = vmatprep.subr.bf16.mxu0 %v162
  %226 = vmatpush1.bf16.msra.mxu0 %v161
  %227 = vmatprep.subr.bf16.mxu0 %v166
  %228 = vmatpush1.bf16.msra.mxu0 %v165
  %229 = vmatprep.subr.bf16.mxu0 %v170
  %230 = vmatpush1.bf16.msra.mxu0 %v169
  %231 = vmatprep.subr.bf16.mxu0 %v174
  %232 = vmatpush1.bf16.msra.mxu0 %v173
  %233 = vmatprep.subr.bf16.mxu0 %v178
  %234 = vmatpush1.bf16.msra.mxu0 %v177
  %235 = vmatprep.subr.bf16.mxu0 %v182
  %236 = vmatpush1.bf16.msra.mxu0 %v181
  %237 = vmatprep.subr.bf16.mxu0 %v186
  %238 = vmatpush1.bf16.msra.mxu0 %v185
  %239 = vmatprep.subr.bf16.mxu0 %v190
  %240 = vmatpush1.bf16.msra.mxu0 %v189
  %241 = vmatprep.subr.bf16.mxu0 0
  %242 = vmatpush1.bf16.msra.mxu0 0
  %243 = vmatprep.subr.bf16.mxu0 0
  %244 = vmatpush1.bf16.msra.mxu0 0
  %245 = vmatprep.subr.bf16.mxu0 0
  %246 = vmatpush1.bf16.msra.mxu0 0
  %247 = vmatprep.subr.bf16.mxu0 0
  %248 = vmatpush1.bf16.msra.mxu0 0
  %249 = vmatprep.subr.bf16.mxu0 0
  %250 = vmatpush1.bf16.msra.mxu0 0
  %251 = vmatprep.subr.bf16.mxu0 0
  %252 = vmatpush1.bf16.msra.mxu0 0
  %253 = vmatprep.subr.bf16.mxu0 0
  %254 = vmatpush1.bf16.msra.mxu0 0
  %255 = vmatprep.subr.bf16.mxu0 0
  %256 = vmatpush1.bf16.msra.mxu0 0
  %257 = vmatprep.mubr.bf16.mxu0 0
  %258 = vmatmul.mubr.bf16.gmra.mrb[0].mxu0 %v32
  %v259 = vpop.f32.mrb[0].mxu0
  %v260 = vadd.f32 0.0, %v259
  %v261 = vpop.f32.mrb[0].mxu0
  %v262 = vadd.f32 0.0, %v261
  %v263 = vpop.f32.mrb[0].mxu0
  %v264 = vadd.f32 0.0, %v263
  %v265 = vpop.f32.mrb[0].mxu0
  %v266 = vadd.f32 0.0, %v265
  %267 = vdwg.mxu0
  %268 = vmatprep.subr.bf16.mxu0 %v164
  %269 = vmatpush1.bf16.msra.mxu0 %v163
  %270 = vmatprep.subr.bf16.mxu0 %v168
  %271 = vmatpush1.bf16.msra.mxu0 %v167
  %272 = vmatprep.subr.bf16.mxu0 %v172
  %273 = vmatpush1.bf16.msra.mxu0 %v171
  %274 = vmatprep.subr.bf16.mxu0 %v176
  %275 = vmatpush1.bf16.msra.mxu0 %v175
  %276 = vmatprep.subr.bf16.mxu0 %v180
  %277 = vmatpush1.bf16.msra.mxu0 %v179
  %278 = vmatprep.subr.bf16.mxu0 %v184
  %279 = vmatpush1.bf16.msra.mxu0 %v183
  %280 = vmatprep.subr.bf16.mxu0 %v188
  %281 = vmatpush1.bf16.msra.mxu0 %v187
  %282 = vmatprep.subr.bf16.mxu0 %v192
  %283 = vmatpush1.bf16.msra.mxu0 %v191
  %284 = vmatprep.subr.bf16.mxu0 0
  %285 = vmatpush1.bf16.msra.mxu0 0
  %286 = vmatprep.subr.bf16.mxu0 0
  %287 = vmatpush1.bf16.msra.mxu0 0
  %288 = vmatprep.subr.bf16.mxu0 0
  %289 = vmatpush1.bf16.msra.mxu0 0
  %290 = vmatprep.subr.bf16.mxu0 0
  %291 = vmatpush1.bf16.msra.mxu0 0
  %292 = vmatprep.subr.bf16.mxu0 0
  %293 = vmatpush1.bf16.msra.mxu0 0
  %294 = vmatprep.subr.bf16.mxu0 0
  %295 = vmatpush1.bf16.msra.mxu0 0
  %296 = vmatprep.subr.bf16.mxu0 0
  %297 = vmatpush1.bf16.msra.mxu0 0
  %298 = vmatprep.subr.bf16.mxu0 0
  %299 = vmatpush1.bf16.msra.mxu0 0
  %300 = vmatprep.mubr.bf16.mxu0 0
  %301 = vmatmul.mubr.bf16.gmra.mrb[0].mxu0 %v32
  %v302 = vpop.f32.mrb[0].mxu0
  %v303 = vadd.f32 0.0, %v302
  %v304 = vpop.f32.mrb[0].mxu0
  %v305 = vadd.f32 0.0, %v304
  %v306 = vpop.f32.mrb[0].mxu0
  %v307 = vadd.f32 0.0, %v306
  %v308 = vpop.f32.mrb[0].mxu0
  %v309 = vadd.f32 0.0, %v308
  %310 = vdwg.mxu0
  %v311 = vadd.f32 %v24, %v260
  %v312 = vadd.f32 %v25, %v262
  %v313 = vadd.f32 %v26, %v303
  %v314 = vadd.f32 %v27, %v305
  %v315 = vadd.f32 %v28, %v264
  %v316 = vadd.f32 %v29, %v266
  %v317 = vadd.f32 %v30, %v307
  %v318 = vadd.f32 %v31, %v309
  %v319 = vxor.u32 %v311, 2147483648
  %v320 = vxor.u32 %v315, 2147483648
  %v321 = vmul.f32 %v319, 1.442695
  %v322 = vpow.pop %v321
  %v323 = vmul.f32 %v320, 1.442695
  %v324 = vpow.pop %v323
  %v325 = vadd.f32 %v322, 1.0
  %v326 = vadd.f32 %v324, 1.0
  %v327 = vrcp.pop %v325
  %v328 = vmul.f32 1.0, %v327
  %v329 = vrcp.pop %v326
  %v330 = vmul.f32 1.0, %v329
  %v331 = vxor.u32 %v312, 2147483648
  %v332 = vxor.u32 %v316, 2147483648
  %v333 = vmul.f32 %v331, 1.442695
  %v334 = vpow.pop %v333
  %v335 = vmul.f32 %v332, 1.442695
  %v336 = vpow.pop %v335
  %v337 = vadd.f32 %v334, 1.0
  %v338 = vadd.f32 %v336, 1.0
  %v339 = vrcp.pop %v337
  %v340 = vmul.f32 1.0, %v339
  %v341 = vrcp.pop %v338
  %v342 = vmul.f32 1.0, %v341
  %v343 = vtanh.pop %v313
  %v344 = vtanh.pop %v317
  %v345 = vxor.u32 %v314, 2147483648
  %v346 = vxor.u32 %v318, 2147483648
  %v347 = vmul.f32 %v345, 1.442695
  %v348 = vpow.pop %v347
  %v349 = vmul.f32 %v346, 1.442695
  %v350 = vpow.pop %v349
  %v351 = vadd.f32 %v348, 1.0
  %v352 = vadd.f32 %v350, 1.0
  %v353 = vrcp.pop %v351
  %v354 = vmul.f32 1.0, %v353
  %v355 = vrcp.pop %v352
  %v356 = vmul.f32 1.0, %v355
  %v357 = vmul.f32 %v340, %v22
  %v358 = vmul.f32 %v342, %v23
  %v359 = vmul.f32 %v328, %v343
  %v360 = vmul.f32 %v330, %v344
  %v361 = vadd.f32 %v357, %v359
  %v362 = vadd.f32 %v358, %v360
  %v363 = vtanh.pop %v361
  %v364 = vtanh.pop %v362
  %v365 = vmul.f32 %v354, %v363
  %v366 = vmul.f32 %v356, %v364
  %v367 = vpack.c.bf16 %v366, %v365
  %v369 = vunpack.c.l.b16 %v367
  %v370 = vunpack.c.h.b16 %v367
  %v371 = vpack.c.b16 %v369, %v369
  %v372 = vpack.c.b16 %v370, %v370
  %375 = vst [vmem:[%s2] sm:$0xf] %v371
  %376 = vst [vmem:[%s2 + $0x4] sm:$0xf] %v372
  %s377 = scalar_lea.vmem %s0, 64
  %v378 = vld [vmem:[%s377] sm:$0xff]
  %v379 = vld [vmem:[%s377 + $0x8] sm:$0xff]
  %v380 = vld [vmem:[%s377 + $0x10] sm:$0xff]
  %v381 = vld [vmem:[%s377 + $0x18] sm:$0xff]
  %v382 = vld [vmem:[%s377 + $0x20] sm:$0xff]
  %v383 = vld [vmem:[%s377 + $0x28] sm:$0xff]
  %v384 = vld [vmem:[%s377 + $0x30] sm:$0xff]
  %v385 = vld [vmem:[%s377 + $0x38] sm:$0xff]
  %v386 = vld [vmem:[%s1] sm:$0xff]
  %v387 = vld [vmem:[%s1 + $0x8] sm:$0xff]
  %v388 = vld [vmem:[%s1 + $0x10] sm:$0xff]
  %v389 = vld [vmem:[%s1 + $0x18] sm:$0xff]
  %v390 = vld [vmem:[%s1 + $0x20] sm:$0xff]
  %v391 = vld [vmem:[%s1 + $0x28] sm:$0xff]
  %v392 = vld [vmem:[%s1 + $0x30] sm:$0xff]
  %v393 = vld [vmem:[%s1 + $0x38] sm:$0xff]
  %v394 = vld [vmem:[%s1 + $0x40] sm:$0xff]
  %v395 = vld [vmem:[%s1 + $0x48] sm:$0xff]
  %v396 = vld [vmem:[%s1 + $0x50] sm:$0xff]
  %v397 = vld [vmem:[%s1 + $0x58] sm:$0xff]
  %v398 = vld [vmem:[%s1 + $0x60] sm:$0xff]
  %v399 = vld [vmem:[%s1 + $0x68] sm:$0xff]
  %v400 = vld [vmem:[%s1 + $0x70] sm:$0xff]
  %v401 = vld [vmem:[%s1 + $0x78] sm:$0xff]
  %v402 = vld [vmem:[%s1 + $0x80] sm:$0xff]
  %v403 = vld [vmem:[%s1 + $0x88] sm:$0xff]
  %v404 = vld [vmem:[%s1 + $0x90] sm:$0xff]
  %v405 = vld [vmem:[%s1 + $0x98] sm:$0xff]
  %v406 = vld [vmem:[%s1 + $0xa0] sm:$0xff]
  %v407 = vld [vmem:[%s1 + $0xa8] sm:$0xff]
  %v408 = vld [vmem:[%s1 + $0xb0] sm:$0xff]
  %v409 = vld [vmem:[%s1 + $0xb8] sm:$0xff]
  %v410 = vld [vmem:[%s1 + $0xc0] sm:$0xff]
  %v411 = vld [vmem:[%s1 + $0xc8] sm:$0xff]
  %v412 = vld [vmem:[%s1 + $0xd0] sm:$0xff]
  %v413 = vld [vmem:[%s1 + $0xd8] sm:$0xff]
  %v414 = vld [vmem:[%s1 + $0xe0] sm:$0xff]
  %v415 = vld [vmem:[%s1 + $0xe8] sm:$0xff]
  %v416 = vld [vmem:[%s1 + $0xf0] sm:$0xff]
  %v417 = vld [vmem:[%s1 + $0xf8] sm:$0xff]
  %v450 = vunpack.c.l.b16 %v386
  %v451 = vunpack.c.h.b16 %v386
  %v452 = vunpack.c.l.b16 %v387
  %v453 = vunpack.c.h.b16 %v387
  %v454 = vunpack.c.l.b16 %v388
  %v455 = vunpack.c.h.b16 %v388
  %v456 = vunpack.c.l.b16 %v389
  %v457 = vunpack.c.h.b16 %v389
  %v458 = vunpack.c.l.b16 %v390
  %v459 = vunpack.c.h.b16 %v390
  %v460 = vunpack.c.l.b16 %v391
  %v461 = vunpack.c.h.b16 %v391
  %v462 = vunpack.c.l.b16 %v392
  %v463 = vunpack.c.h.b16 %v392
  %v464 = vunpack.c.l.b16 %v393
  %v465 = vunpack.c.h.b16 %v393
  %v466 = vunpack.c.l.b16 %v394
  %v467 = vunpack.c.h.b16 %v394
  %v468 = vunpack.c.l.b16 %v395
  %v469 = vunpack.c.h.b16 %v395
  %v470 = vunpack.c.l.b16 %v396
  %v471 = vunpack.c.h.b16 %v396
  %v472 = vunpack.c.l.b16 %v397
  %v473 = vunpack.c.h.b16 %v397
  %v474 = vunpack.c.l.b16 %v398
  %v475 = vunpack.c.h.b16 %v398
  %v476 = vunpack.c.l.b16 %v399
  %v477 = vunpack.c.h.b16 %v399
  %v478 = vunpack.c.l.b16 %v400
  %v479 = vunpack.c.h.b16 %v400
  %v480 = vunpack.c.l.b16 %v401
  %v481 = vunpack.c.h.b16 %v401
  %v482 = vunpack.c.l.b16 %v402
  %v483 = vunpack.c.h.b16 %v402
  %v484 = vunpack.c.l.b16 %v403
  %v485 = vunpack.c.h.b16 %v403
  %v486 = vunpack.c.l.b16 %v404
  %v487 = vunpack.c.h.b16 %v404
  %v488 = vunpack.c.l.b16 %v405
  %v489 = vunpack.c.h.b16 %v405
  %v490 = vunpack.c.l.b16 %v406
  %v491 = vunpack.c.h.b16 %v406
  %v492 = vunpack.c.l.b16 %v407
  %v493 = vunpack.c.h.b16 %v407
  %v494 = vunpack.c.l.b16 %v408
  %v495 = vunpack.c.h.b16 %v408
  %v496 = vunpack.c.l.b16 %v409
  %v497 = vunpack.c.h.b16 %v409
  %v498 = vunpack.c.l.b16 %v410
  %v499 = vunpack.c.h.b16 %v410
  %v500 = vunpack.c.l.b16 %v411
  %v501 = vunpack.c.h.b16 %v411
  %v502 = vunpack.c.l.b16 %v412
  %v503 = vunpack.c.h.b16 %v412
  %v504 = vunpack.c.l.b16 %v413
  %v505 = vunpack.c.h.b16 %v413
  %v506 = vunpack.c.l.b16 %v414
  %v507 = vunpack.c.h.b16 %v414
  %v508 = vunpack.c.l.b16 %v415
  %v509 = vunpack.c.h.b16 %v415
  %v510 = vunpack.c.l.b16 %v416
  %v511 = vunpack.c.h.b16 %v416
  %v512 = vunpack.c.l.b16 %v417
  %v513 = vunpack.c.h.b16 %v417
  %v514 = vpack.c.b16 %v454, %v450
  %v515 = vpack.c.b16 %v455, %v451
  %v516 = vpack.c.b16 %v456, %v452
  %v517 = vpack.c.b16 %v457, %v453
  %v518 = vpack.c.b16 %v462, %v458
  %v519 = vpack.c.b16 %v463, %v459
  %v520 = vpack.c.b16 %v464, %v460
  %v521 = vpack.c.b16 %v465, %v461
  %v522 = vpack.c.b16 %v470, %v466
  %v523 = vpack.c.b16 %v471, %v467
  %v524 = vpack.c.b16 %v472, %v468
  %v525 = vpack.c.b16 %v473, %v469
  %v526 = vpack.c.b16 %v478, %v474
  %v527 = vpack.c.b16 %v479, %v475
  %v528 = vpack.c.b16 %v480, %v476
  %v529 = vpack.c.b16 %v481, %v477
  %v530 = vpack.c.b16 %v486, %v482
  %v531 = vpack.c.b16 %v487, %v483
  %v532 = vpack.c.b16 %v488, %v484
  %v533 = vpack.c.b16 %v489, %v485
  %v534 = vpack.c.b16 %v494, %v490
  %v535 = vpack.c.b16 %v495, %v491
  %v536 = vpack.c.b16 %v496, %v492
  %v537 = vpack.c.b16 %v497, %v493
  %v538 = vpack.c.b16 %v502, %v498
  %v539 = vpack.c.b16 %v503, %v499
  %v540 = vpack.c.b16 %v504, %v500
  %v541 = vpack.c.b16 %v505, %v501
  %v542 = vpack.c.b16 %v510, %v506
  %v543 = vpack.c.b16 %v511, %v507
  %v544 = vpack.c.b16 %v512, %v508
  %v545 = vpack.c.b16 %v513, %v509
  %578 = vmatprep.subr.bf16.mxu0 %v515
  %579 = vmatpush1.bf16.msra.mxu0 %v514
  %580 = vmatprep.subr.bf16.mxu0 %v519
  %581 = vmatpush1.bf16.msra.mxu0 %v518
  %582 = vmatprep.subr.bf16.mxu0 %v523
  %583 = vmatpush1.bf16.msra.mxu0 %v522
  %584 = vmatprep.subr.bf16.mxu0 %v527
  %585 = vmatpush1.bf16.msra.mxu0 %v526
  %586 = vmatprep.subr.bf16.mxu0 %v531
  %587 = vmatpush1.bf16.msra.mxu0 %v530
  %588 = vmatprep.subr.bf16.mxu0 %v535
  %589 = vmatpush1.bf16.msra.mxu0 %v534
  %590 = vmatprep.subr.bf16.mxu0 %v539
  %591 = vmatpush1.bf16.msra.mxu0 %v538
  %592 = vmatprep.subr.bf16.mxu0 %v543
  %593 = vmatpush1.bf16.msra.mxu0 %v542
  %594 = vmatprep.subr.bf16.mxu0 0
  %595 = vmatpush1.bf16.msra.mxu0 0
  %596 = vmatprep.subr.bf16.mxu0 0
  %597 = vmatpush1.bf16.msra.mxu0 0
  %598 = vmatprep.subr.bf16.mxu0 0
  %599 = vmatpush1.bf16.msra.mxu0 0
  %600 = vmatprep.subr.bf16.mxu0 0
  %601 = vmatpush1.bf16.msra.mxu0 0
  %602 = vmatprep.subr.bf16.mxu0 0
  %603 = vmatpush1.bf16.msra.mxu0 0
  %604 = vmatprep.subr.bf16.mxu0 0
  %605 = vmatpush1.bf16.msra.mxu0 0
  %606 = vmatprep.subr.bf16.mxu0 0
  %607 = vmatpush1.bf16.msra.mxu0 0
  %608 = vmatprep.subr.bf16.mxu0 0
  %609 = vmatpush1.bf16.msra.mxu0 0
  %610 = vmatprep.mubr.bf16.mxu0 0
  %611 = vmatmul.mubr.bf16.gmra.mrb[0].mxu0 %v367
  %v612 = vpop.f32.mrb[0].mxu0
  %v613 = vadd.f32 0.0, %v612
  %v614 = vpop.f32.mrb[0].mxu0
  %v615 = vadd.f32 0.0, %v614
  %v616 = vpop.f32.mrb[0].mxu0
  %v617 = vadd.f32 0.0, %v616
  %v618 = vpop.f32.mrb[0].mxu0
  %v619 = vadd.f32 0.0, %v618
  %620 = vdwg.mxu0
  %621 = vmatprep.subr.bf16.mxu0 %v517
  %622 = vmatpush1.bf16.msra.mxu0 %v516
  %623 = vmatprep.subr.bf16.mxu0 %v521
  %624 = vmatpush1.bf16.msra.mxu0 %v520
  %625 = vmatprep.subr.bf16.mxu0 %v525
  %626 = vmatpush1.bf16.msra.mxu0 %v524
  %627 = vmatprep.subr.bf16.mxu0 %v529
  %628 = vmatpush1.bf16.msra.mxu0 %v528
  %629 = vmatprep.subr.bf16.mxu0 %v533
  %630 = vmatpush1.bf16.msra.mxu0 %v532
  %631 = vmatprep.subr.bf16.mxu0 %v537
  %632 = vmatpush1.bf16.msra.mxu0 %v536
  %633 = vmatprep.subr.bf16.mxu0 %v541
  %634 = vmatpush1.bf16.msra.mxu0 %v540
  %635 = vmatprep.subr.bf16.mxu0 %v545
  %636 = vmatpush1.bf16.msra.mxu0 %v544
  %637 = vmatprep.subr.bf16.mxu0 0
  %638 = vmatpush1.bf16.msra.mxu0 0
  %639 = vmatprep.subr.bf16.mxu0 0
  %640 = vmatpush1.bf16.msra.mxu0 0
  %641 = vmatprep.subr.bf16.mxu0 0
  %642 = vmatpush1.bf16.msra.mxu0 0
  %643 = vmatprep.subr.bf16.mxu0 0
  %644 = vmatpush1.bf16.msra.mxu0 0
  %645 = vmatprep.subr.bf16.mxu0 0
  %646 = vmatpush1.bf16.msra.mxu0 0
  %647 = vmatprep.subr.bf16.mxu0 0
  %648 = vmatpush1.bf16.msra.mxu0 0
  %649 = vmatprep.subr.bf16.mxu0 0
  %650 = vmatpush1.bf16.msra.mxu0 0
  %651 = vmatprep.subr.bf16.mxu0 0
  %652 = vmatpush1.bf16.msra.mxu0 0
  %653 = vmatprep.mubr.bf16.mxu0 0
  %654 = vmatmul.mubr.bf16.gmra.mrb[0].mxu0 %v367
  %v655 = vpop.f32.mrb[0].mxu0
  %v656 = vadd.f32 0.0, %v655
  %v657 = vpop.f32.mrb[0].mxu0
  %v658 = vadd.f32 0.0, %v657
  %v659 = vpop.f32.mrb[0].mxu0
  %v660 = vadd.f32 0.0, %v659
  %v661 = vpop.f32.mrb[0].mxu0
  %v662 = vadd.f32 0.0, %v661
  %663 = vdwg.mxu0
  %v664 = vadd.f32 %v378, %v613
  %v665 = vadd.f32 %v379, %v615
  %v666 = vadd.f32 %v380, %v656
  %v667 = vadd.f32 %v381, %v658
  %v668 = vadd.f32 %v382, %v617
  %v669 = vadd.f32 %v383, %v619
  %v670 = vadd.f32 %v384, %v660
  %v671 = vadd.f32 %v385, %v662
  %v672 = vxor.u32 %v664, 2147483648
  %v673 = vxor.u32 %v668, 2147483648
  %v674 = vmul.f32 %v672, 1.442695
  %v675 = vpow.pop %v674
  %v676 = vmul.f32 %v673, 1.442695
  %v677 = vpow.pop %v676
  %v678 = vadd.f32 %v675, 1.0
  %v679 = vadd.f32 %v677, 1.0
  %v680 = vrcp.pop %v678
  %v681 = vmul.f32 1.0, %v680
  %v682 = vrcp.pop %v679
  %v683 = vmul.f32 1.0, %v682
  %v684 = vxor.u32 %v665, 2147483648
  %v685 = vxor.u32 %v669, 2147483648
  %v686 = vmul.f32 %v684, 1.442695
  %v687 = vpow.pop %v686
  %v688 = vmul.f32 %v685, 1.442695
  %v689 = vpow.pop %v688
  %v690 = vadd.f32 %v687, 1.0
  %v691 = vadd.f32 %v689, 1.0
  %v692 = vrcp.pop %v690
  %v693 = vmul.f32 1.0, %v692
  %v694 = vrcp.pop %v691
  %v695 = vmul.f32 1.0, %v694
  %v696 = vtanh.pop %v666
  %v697 = vtanh.pop %v670
  %v698 = vxor.u32 %v667, 2147483648
  %v699 = vxor.u32 %v671, 2147483648
  %v700 = vmul.f32 %v698, 1.442695
  %v701 = vpow.pop %v700
  %v702 = vmul.f32 %v699, 1.442695
  %v703 = vpow.pop %v702
  %v704 = vadd.f32 %v701, 1.0
  %v705 = vadd.f32 %v703, 1.0
  %v706 = vrcp.pop %v704
  %v707 = vmul.f32 1.0, %v706
  %v708 = vrcp.pop %v705
  %v709 = vmul.f32 1.0, %v708
  %v710 = vmul.f32 %v693, %v361
  %v711 = vmul.f32 %v695, %v362
  %v712 = vmul.f32 %v681, %v696
  %v713 = vmul.f32 %v683, %v697
  %v714 = vadd.f32 %v710, %v712
  %v715 = vadd.f32 %v711, %v713
  %v716 = vtanh.pop %v714
  %v717 = vtanh.pop %v715
  %v718 = vmul.f32 %v707, %v716
  %v719 = vmul.f32 %v709, %v717
  %v720 = vpack.c.bf16 %v719, %v718
  %v722 = vunpack.c.l.b16 %v720
  %v723 = vunpack.c.h.b16 %v720
  %v724 = vpack.c.b16 %v722, %v722
  %v725 = vpack.c.b16 %v723, %v723
  %s728 = scalar_lea.vmem %s2, 8
  %729 = vst [vmem:[%s728] sm:$0xf] %v724
  %730 = vst [vmem:[%s728 + $0x4] sm:$0xf] %v725
  %s731 = scalar_lea.vmem %s0, 128
  %v732 = vld [vmem:[%s731] sm:$0xff]
  %v733 = vld [vmem:[%s731 + $0x8] sm:$0xff]
  %v734 = vld [vmem:[%s731 + $0x10] sm:$0xff]
  %v735 = vld [vmem:[%s731 + $0x18] sm:$0xff]
  %v736 = vld [vmem:[%s731 + $0x20] sm:$0xff]
  %v737 = vld [vmem:[%s731 + $0x28] sm:$0xff]
  %v738 = vld [vmem:[%s731 + $0x30] sm:$0xff]
  %v739 = vld [vmem:[%s731 + $0x38] sm:$0xff]
  %v740 = vld [vmem:[%s1] sm:$0xff]
  %v741 = vld [vmem:[%s1 + $0x8] sm:$0xff]
  %v742 = vld [vmem:[%s1 + $0x10] sm:$0xff]
  %v743 = vld [vmem:[%s1 + $0x18] sm:$0xff]
  %v744 = vld [vmem:[%s1 + $0x20] sm:$0xff]
  %v745 = vld [vmem:[%s1 + $0x28] sm:$0xff]
  %v746 = vld [vmem:[%s1 + $0x30] sm:$0xff]
  %v747 = vld [vmem:[%s1 + $0x38] sm:$0xff]
  %v748 = vld [vmem:[%s1 + $0x40] sm:$0xff]
  %v749 = vld [vmem:[%s1 + $0x48] sm:$0xff]
  %v750 = vld [vmem:[%s1 + $0x50] sm:$0xff]
  %v751 = vld [vmem:[%s1 + $0x58] sm:$0xff]
  %v752 = vld [vmem:[%s1 + $0x60] sm:$0xff]
  %v753 = vld [vmem:[%s1 + $0x68] sm:$0xff]
  %v754 = vld [vmem:[%s1 + $0x70] sm:$0xff]
  %v755 = vld [vmem:[%s1 + $0x78] sm:$0xff]
  %v756 = vld [vmem:[%s1 + $0x80] sm:$0xff]
  %v757 = vld [vmem:[%s1 + $0x88] sm:$0xff]
  %v758 = vld [vmem:[%s1 + $0x90] sm:$0xff]
  %v759 = vld [vmem:[%s1 + $0x98] sm:$0xff]
  %v760 = vld [vmem:[%s1 + $0xa0] sm:$0xff]
  %v761 = vld [vmem:[%s1 + $0xa8] sm:$0xff]
  %v762 = vld [vmem:[%s1 + $0xb0] sm:$0xff]
  %v763 = vld [vmem:[%s1 + $0xb8] sm:$0xff]
  %v764 = vld [vmem:[%s1 + $0xc0] sm:$0xff]
  %v765 = vld [vmem:[%s1 + $0xc8] sm:$0xff]
  %v766 = vld [vmem:[%s1 + $0xd0] sm:$0xff]
  %v767 = vld [vmem:[%s1 + $0xd8] sm:$0xff]
  %v768 = vld [vmem:[%s1 + $0xe0] sm:$0xff]
  %v769 = vld [vmem:[%s1 + $0xe8] sm:$0xff]
  %v770 = vld [vmem:[%s1 + $0xf0] sm:$0xff]
  %v771 = vld [vmem:[%s1 + $0xf8] sm:$0xff]
  %v804 = vunpack.c.l.b16 %v740
  %v805 = vunpack.c.h.b16 %v740
  %v806 = vunpack.c.l.b16 %v741
  %v807 = vunpack.c.h.b16 %v741
  %v808 = vunpack.c.l.b16 %v742
  %v809 = vunpack.c.h.b16 %v742
  %v810 = vunpack.c.l.b16 %v743
  %v811 = vunpack.c.h.b16 %v743
  %v812 = vunpack.c.l.b16 %v744
  %v813 = vunpack.c.h.b16 %v744
  %v814 = vunpack.c.l.b16 %v745
  %v815 = vunpack.c.h.b16 %v745
  %v816 = vunpack.c.l.b16 %v746
  %v817 = vunpack.c.h.b16 %v746
  %v818 = vunpack.c.l.b16 %v747
  %v819 = vunpack.c.h.b16 %v747
  %v820 = vunpack.c.l.b16 %v748
  %v821 = vunpack.c.h.b16 %v748
  %v822 = vunpack.c.l.b16 %v749
  %v823 = vunpack.c.h.b16 %v749
  %v824 = vunpack.c.l.b16 %v750
  %v825 = vunpack.c.h.b16 %v750
  %v826 = vunpack.c.l.b16 %v751
  %v827 = vunpack.c.h.b16 %v751
  %v828 = vunpack.c.l.b16 %v752
  %v829 = vunpack.c.h.b16 %v752
  %v830 = vunpack.c.l.b16 %v753
  %v831 = vunpack.c.h.b16 %v753
  %v832 = vunpack.c.l.b16 %v754
  %v833 = vunpack.c.h.b16 %v754
  %v834 = vunpack.c.l.b16 %v755
  %v835 = vunpack.c.h.b16 %v755
  %v836 = vunpack.c.l.b16 %v756
  %v837 = vunpack.c.h.b16 %v756
  %v838 = vunpack.c.l.b16 %v757
  %v839 = vunpack.c.h.b16 %v757
  %v840 = vunpack.c.l.b16 %v758
  %v841 = vunpack.c.h.b16 %v758
  %v842 = vunpack.c.l.b16 %v759
  %v843 = vunpack.c.h.b16 %v759
  %v844 = vunpack.c.l.b16 %v760
  %v845 = vunpack.c.h.b16 %v760
  %v846 = vunpack.c.l.b16 %v761
  %v847 = vunpack.c.h.b16 %v761
  %v848 = vunpack.c.l.b16 %v762
  %v849 = vunpack.c.h.b16 %v762
  %v850 = vunpack.c.l.b16 %v763
  %v851 = vunpack.c.h.b16 %v763
  %v852 = vunpack.c.l.b16 %v764
  %v853 = vunpack.c.h.b16 %v764
  %v854 = vunpack.c.l.b16 %v765
  %v855 = vunpack.c.h.b16 %v765
  %v856 = vunpack.c.l.b16 %v766
  %v857 = vunpack.c.h.b16 %v766
  %v858 = vunpack.c.l.b16 %v767
  %v859 = vunpack.c.h.b16 %v767
  %v860 = vunpack.c.l.b16 %v768
  %v861 = vunpack.c.h.b16 %v768
  %v862 = vunpack.c.l.b16 %v769
  %v863 = vunpack.c.h.b16 %v769
  %v864 = vunpack.c.l.b16 %v770
  %v865 = vunpack.c.h.b16 %v770
  %v866 = vunpack.c.l.b16 %v771
  %v867 = vunpack.c.h.b16 %v771
  %v868 = vpack.c.b16 %v808, %v804
  %v869 = vpack.c.b16 %v809, %v805
  %v870 = vpack.c.b16 %v810, %v806
  %v871 = vpack.c.b16 %v811, %v807
  %v872 = vpack.c.b16 %v816, %v812
  %v873 = vpack.c.b16 %v817, %v813
  %v874 = vpack.c.b16 %v818, %v814
  %v875 = vpack.c.b16 %v819, %v815
  %v876 = vpack.c.b16 %v824, %v820
  %v877 = vpack.c.b16 %v825, %v821
  %v878 = vpack.c.b16 %v826, %v822
  %v879 = vpack.c.b16 %v827, %v823
  %v880 = vpack.c.b16 %v832, %v828
  %v881 = vpack.c.b16 %v833, %v829
  %v882 = vpack.c.b16 %v834, %v830
  %v883 = vpack.c.b16 %v835, %v831
  %v884 = vpack.c.b16 %v840, %v836
  %v885 = vpack.c.b16 %v841, %v837
  %v886 = vpack.c.b16 %v842, %v838
  %v887 = vpack.c.b16 %v843, %v839
  %v888 = vpack.c.b16 %v848, %v844
  %v889 = vpack.c.b16 %v849, %v845
  %v890 = vpack.c.b16 %v850, %v846
  %v891 = vpack.c.b16 %v851, %v847
  %v892 = vpack.c.b16 %v856, %v852
  %v893 = vpack.c.b16 %v857, %v853
  %v894 = vpack.c.b16 %v858, %v854
  %v895 = vpack.c.b16 %v859, %v855
  %v896 = vpack.c.b16 %v864, %v860
  %v897 = vpack.c.b16 %v865, %v861
  %v898 = vpack.c.b16 %v866, %v862
  %v899 = vpack.c.b16 %v867, %v863
  %932 = vmatprep.subr.bf16.mxu0 %v869
  %933 = vmatpush1.bf16.msra.mxu0 %v868
  %934 = vmatprep.subr.bf16.mxu0 %v873
  %935 = vmatpush1.bf16.msra.mxu0 %v872
  %936 = vmatprep.subr.bf16.mxu0 %v877
  %937 = vmatpush1.bf16.msra.mxu0 %v876
  %938 = vmatprep.subr.bf16.mxu0 %v881
  %939 = vmatpush1.bf16.msra.mxu0 %v880
  %940 = vmatprep.subr.bf16.mxu0 %v885
  %941 = vmatpush1.bf16.msra.mxu0 %v884
  %942 = vmatprep.subr.bf16.mxu0 %v889
  %943 = vmatpush1.bf16.msra.mxu0 %v888
  %944 = vmatprep.subr.bf16.mxu0 %v893
  %945 = vmatpush1.bf16.msra.mxu0 %v892
  %946 = vmatprep.subr.bf16.mxu0 %v897
  %947 = vmatpush1.bf16.msra.mxu0 %v896
  %948 = vmatprep.subr.bf16.mxu0 0
  %949 = vmatpush1.bf16.msra.mxu0 0
  %950 = vmatprep.subr.bf16.mxu0 0
  %951 = vmatpush1.bf16.msra.mxu0 0
  %952 = vmatprep.subr.bf16.mxu0 0
  %953 = vmatpush1.bf16.msra.mxu0 0
  %954 = vmatprep.subr.bf16.mxu0 0
  %955 = vmatpush1.bf16.msra.mxu0 0
  %956 = vmatprep.subr.bf16.mxu0 0
  %957 = vmatpush1.bf16.msra.mxu0 0
  %958 = vmatprep.subr.bf16.mxu0 0
  %959 = vmatpush1.bf16.msra.mxu0 0
  %960 = vmatprep.subr.bf16.mxu0 0
  %961 = vmatpush1.bf16.msra.mxu0 0
  %962 = vmatprep.subr.bf16.mxu0 0
  %963 = vmatpush1.bf16.msra.mxu0 0
  %964 = vmatprep.mubr.bf16.mxu0 0
  %965 = vmatmul.mubr.bf16.gmra.mrb[0].mxu0 %v720
  %v966 = vpop.f32.mrb[0].mxu0
  %v967 = vadd.f32 0.0, %v966
  %v968 = vpop.f32.mrb[0].mxu0
  %v969 = vadd.f32 0.0, %v968
  %v970 = vpop.f32.mrb[0].mxu0
  %v971 = vadd.f32 0.0, %v970
  %v972 = vpop.f32.mrb[0].mxu0
  %v973 = vadd.f32 0.0, %v972
  %974 = vdwg.mxu0
  %975 = vmatprep.subr.bf16.mxu0 %v871
  %976 = vmatpush1.bf16.msra.mxu0 %v870
  %977 = vmatprep.subr.bf16.mxu0 %v875
  %978 = vmatpush1.bf16.msra.mxu0 %v874
  %979 = vmatprep.subr.bf16.mxu0 %v879
  %980 = vmatpush1.bf16.msra.mxu0 %v878
  %981 = vmatprep.subr.bf16.mxu0 %v883
  %982 = vmatpush1.bf16.msra.mxu0 %v882
  %983 = vmatprep.subr.bf16.mxu0 %v887
  %984 = vmatpush1.bf16.msra.mxu0 %v886
  %985 = vmatprep.subr.bf16.mxu0 %v891
  %986 = vmatpush1.bf16.msra.mxu0 %v890
  %987 = vmatprep.subr.bf16.mxu0 %v895
  %988 = vmatpush1.bf16.msra.mxu0 %v894
  %989 = vmatprep.subr.bf16.mxu0 %v899
  %990 = vmatpush1.bf16.msra.mxu0 %v898
  %991 = vmatprep.subr.bf16.mxu0 0
  %992 = vmatpush1.bf16.msra.mxu0 0
  %993 = vmatprep.subr.bf16.mxu0 0
  %994 = vmatpush1.bf16.msra.mxu0 0
  %995 = vmatprep.subr.bf16.mxu0 0
  %996 = vmatpush1.bf16.msra.mxu0 0
  %997 = vmatprep.subr.bf16.mxu0 0
  %998 = vmatpush1.bf16.msra.mxu0 0
  %999 = vmatprep.subr.bf16.mxu0 0
  %1000 = vmatpush1.bf16.msra.mxu0 0
  %1001 = vmatprep.subr.bf16.mxu0 0
  %1002 = vmatpush1.bf16.msra.mxu0 0
  %1003 = vmatprep.subr.bf16.mxu0 0
  %1004 = vmatpush1.bf16.msra.mxu0 0
  %1005 = vmatprep.subr.bf16.mxu0 0
  %1006 = vmatpush1.bf16.msra.mxu0 0
  %1007 = vmatprep.mubr.bf16.mxu0 0
  %1008 = vmatmul.mubr.bf16.gmra.mrb[0].mxu0 %v720
  %v1009 = vpop.f32.mrb[0].mxu0
  %v1010 = vadd.f32 0.0, %v1009
  %v1011 = vpop.f32.mrb[0].mxu0
  %v1012 = vadd.f32 0.0, %v1011
  %v1013 = vpop.f32.mrb[0].mxu0
  %v1014 = vadd.f32 0.0, %v1013
  %v1015 = vpop.f32.mrb[0].mxu0
  %v1016 = vadd.f32 0.0, %v1015
  %1017 = vdwg.mxu0
  %v1018 = vadd.f32 %v732, %v967
  %v1019 = vadd.f32 %v733, %v969
  %v1020 = vadd.f32 %v734, %v1010
  %v1021 = vadd.f32 %v735, %v1012
  %v1022 = vadd.f32 %v736, %v971
  %v1023 = vadd.f32 %v737, %v973
  %v1024 = vadd.f32 %v738, %v1014
  %v1025 = vadd.f32 %v739, %v1016
  %v1026 = vxor.u32 %v1018, 2147483648
  %v1027 = vxor.u32 %v1022, 2147483648
  %v1028 = vmul.f32 %v1026, 1.442695
  %v1029 = vpow.pop %v1028
  %v1030 = vmul.f32 %v1027, 1.442695
  %v1031 = vpow.pop %v1030
  %v1032 = vadd.f32 %v1029, 1.0
  %v1033 = vadd.f32 %v1031, 1.0
  %v1034 = vrcp.pop %v1032
  %v1035 = vmul.f32 1.0, %v1034
  %v1036 = vrcp.pop %v1033
  %v1037 = vmul.f32 1.0, %v1036
  %v1038 = vxor.u32 %v1019, 2147483648
  %v1039 = vxor.u32 %v1023, 2147483648
  %v1040 = vmul.f32 %v1038, 1.442695
  %v1041 = vpow.pop %v1040
  %v1042 = vmul.f32 %v1039, 1.442695
  %v1043 = vpow.pop %v1042
  %v1044 = vadd.f32 %v1041, 1.0
  %v1045 = vadd.f32 %v1043, 1.0
  %v1046 = vrcp.pop %v1044
  %v1047 = vmul.f32 1.0, %v1046
  %v1048 = vrcp.pop %v1045
  %v1049 = vmul.f32 1.0, %v1048
  %v1050 = vtanh.pop %v1020
  %v1051 = vtanh.pop %v1024
  %v1052 = vxor.u32 %v1021, 2147483648
  %v1053 = vxor.u32 %v1025, 2147483648
  %v1054 = vmul.f32 %v1052, 1.442695
  %v1055 = vpow.pop %v1054
  %v1056 = vmul.f32 %v1053, 1.442695
  %v1057 = vpow.pop %v1056
  %v1058 = vadd.f32 %v1055, 1.0
  %v1059 = vadd.f32 %v1057, 1.0
  %v1060 = vrcp.pop %v1058
  %v1061 = vmul.f32 1.0, %v1060
  %v1062 = vrcp.pop %v1059
  %v1063 = vmul.f32 1.0, %v1062
  %v1064 = vmul.f32 %v1047, %v714
  %v1065 = vmul.f32 %v1049, %v715
  %v1066 = vmul.f32 %v1035, %v1050
  %v1067 = vmul.f32 %v1037, %v1051
  %v1068 = vadd.f32 %v1064, %v1066
  %v1069 = vadd.f32 %v1065, %v1067
  %v1070 = vtanh.pop %v1068
  %v1071 = vtanh.pop %v1069
  %v1072 = vmul.f32 %v1061, %v1070
  %v1073 = vmul.f32 %v1063, %v1071
  %v1074 = vpack.c.bf16 %v1073, %v1072
  %v1076 = vunpack.c.l.b16 %v1074
  %v1077 = vunpack.c.h.b16 %v1074
  %v1078 = vpack.c.b16 %v1076, %v1076
  %v1079 = vpack.c.b16 %v1077, %v1077
  %s1082 = scalar_lea.vmem %s2, 16
  %1083 = vst [vmem:[%s1082] sm:$0xf] %v1078
  %1084 = vst [vmem:[%s1082 + $0x4] sm:$0xf] %v1079
  %s1085 = scalar_lea.vmem %s0, 192
  %v1086 = vld [vmem:[%s1085] sm:$0xff]
  %v1087 = vld [vmem:[%s1085 + $0x8] sm:$0xff]
  %v1088 = vld [vmem:[%s1085 + $0x10] sm:$0xff]
  %v1089 = vld [vmem:[%s1085 + $0x18] sm:$0xff]
  %v1090 = vld [vmem:[%s1085 + $0x20] sm:$0xff]
  %v1091 = vld [vmem:[%s1085 + $0x28] sm:$0xff]
  %v1092 = vld [vmem:[%s1085 + $0x30] sm:$0xff]
  %v1093 = vld [vmem:[%s1085 + $0x38] sm:$0xff]
  %v1094 = vld [vmem:[%s1] sm:$0xff]
  %v1095 = vld [vmem:[%s1 + $0x8] sm:$0xff]
  %v1096 = vld [vmem:[%s1 + $0x10] sm:$0xff]
  %v1097 = vld [vmem:[%s1 + $0x18] sm:$0xff]
  %v1098 = vld [vmem:[%s1 + $0x20] sm:$0xff]
  %v1099 = vld [vmem:[%s1 + $0x28] sm:$0xff]
  %v1100 = vld [vmem:[%s1 + $0x30] sm:$0xff]
  %v1101 = vld [vmem:[%s1 + $0x38] sm:$0xff]
  %v1102 = vld [vmem:[%s1 + $0x40] sm:$0xff]
  %v1103 = vld [vmem:[%s1 + $0x48] sm:$0xff]
  %v1104 = vld [vmem:[%s1 + $0x50] sm:$0xff]
  %v1105 = vld [vmem:[%s1 + $0x58] sm:$0xff]
  %v1106 = vld [vmem:[%s1 + $0x60] sm:$0xff]
  %v1107 = vld [vmem:[%s1 + $0x68] sm:$0xff]
  %v1108 = vld [vmem:[%s1 + $0x70] sm:$0xff]
  %v1109 = vld [vmem:[%s1 + $0x78] sm:$0xff]
  %v1110 = vld [vmem:[%s1 + $0x80] sm:$0xff]
  %v1111 = vld [vmem:[%s1 + $0x88] sm:$0xff]
  %v1112 = vld [vmem:[%s1 + $0x90] sm:$0xff]
  %v1113 = vld [vmem:[%s1 + $0x98] sm:$0xff]
  %v1114 = vld [vmem:[%s1 + $0xa0] sm:$0xff]
  %v1115 = vld [vmem:[%s1 + $0xa8] sm:$0xff]
  %v1116 = vld [vmem:[%s1 + $0xb0] sm:$0xff]
  %v1117 = vld [vmem:[%s1 + $0xb8] sm:$0xff]
  %v1118 = vld [vmem:[%s1 + $0xc0] sm:$0xff]
  %v1119 = vld [vmem:[%s1 + $0xc8] sm:$0xff]
  %v1120 = vld [vmem:[%s1 + $0xd0] sm:$0xff]
  %v1121 = vld [vmem:[%s1 + $0xd8] sm:$0xff]
  %v1122 = vld [vmem:[%s1 + $0xe0] sm:$0xff]
  %v1123 = vld [vmem:[%s1 + $0xe8] sm:$0xff]
  %v1124 = vld [vmem:[%s1 + $0xf0] sm:$0xff]
  %v1125 = vld [vmem:[%s1 + $0xf8] sm:$0xff]
  %v1158 = vunpack.c.l.b16 %v1094
  %v1159 = vunpack.c.h.b16 %v1094
  %v1160 = vunpack.c.l.b16 %v1095
  %v1161 = vunpack.c.h.b16 %v1095
  %v1162 = vunpack.c.l.b16 %v1096
  %v1163 = vunpack.c.h.b16 %v1096
  %v1164 = vunpack.c.l.b16 %v1097
  %v1165 = vunpack.c.h.b16 %v1097
  %v1166 = vunpack.c.l.b16 %v1098
  %v1167 = vunpack.c.h.b16 %v1098
  %v1168 = vunpack.c.l.b16 %v1099
  %v1169 = vunpack.c.h.b16 %v1099
  %v1170 = vunpack.c.l.b16 %v1100
  %v1171 = vunpack.c.h.b16 %v1100
  %v1172 = vunpack.c.l.b16 %v1101
  %v1173 = vunpack.c.h.b16 %v1101
  %v1174 = vunpack.c.l.b16 %v1102
  %v1175 = vunpack.c.h.b16 %v1102
  %v1176 = vunpack.c.l.b16 %v1103
  %v1177 = vunpack.c.h.b16 %v1103
  %v1178 = vunpack.c.l.b16 %v1104
  %v1179 = vunpack.c.h.b16 %v1104
  %v1180 = vunpack.c.l.b16 %v1105
  %v1181 = vunpack.c.h.b16 %v1105
  %v1182 = vunpack.c.l.b16 %v1106
  %v1183 = vunpack.c.h.b16 %v1106
  %v1184 = vunpack.c.l.b16 %v1107
  %v1185 = vunpack.c.h.b16 %v1107
  %v1186 = vunpack.c.l.b16 %v1108
  %v1187 = vunpack.c.h.b16 %v1108
  %v1188 = vunpack.c.l.b16 %v1109
  %v1189 = vunpack.c.h.b16 %v1109
  %v1190 = vunpack.c.l.b16 %v1110
  %v1191 = vunpack.c.h.b16 %v1110
  %v1192 = vunpack.c.l.b16 %v1111
  %v1193 = vunpack.c.h.b16 %v1111
  %v1194 = vunpack.c.l.b16 %v1112
  %v1195 = vunpack.c.h.b16 %v1112
  %v1196 = vunpack.c.l.b16 %v1113
  %v1197 = vunpack.c.h.b16 %v1113
  %v1198 = vunpack.c.l.b16 %v1114
  %v1199 = vunpack.c.h.b16 %v1114
  %v1200 = vunpack.c.l.b16 %v1115
  %v1201 = vunpack.c.h.b16 %v1115
  %v1202 = vunpack.c.l.b16 %v1116
  %v1203 = vunpack.c.h.b16 %v1116
  %v1204 = vunpack.c.l.b16 %v1117
  %v1205 = vunpack.c.h.b16 %v1117
  %v1206 = vunpack.c.l.b16 %v1118
  %v1207 = vunpack.c.h.b16 %v1118
  %v1208 = vunpack.c.l.b16 %v1119
  %v1209 = vunpack.c.h.b16 %v1119
  %v1210 = vunpack.c.l.b16 %v1120
  %v1211 = vunpack.c.h.b16 %v1120
  %v1212 = vunpack.c.l.b16 %v1121
  %v1213 = vunpack.c.h.b16 %v1121
  %v1214 = vunpack.c.l.b16 %v1122
  %v1215 = vunpack.c.h.b16 %v1122
  %v1216 = vunpack.c.l.b16 %v1123
  %v1217 = vunpack.c.h.b16 %v1123
  %v1218 = vunpack.c.l.b16 %v1124
  %v1219 = vunpack.c.h.b16 %v1124
  %v1220 = vunpack.c.l.b16 %v1125
  %v1221 = vunpack.c.h.b16 %v1125
  %v1222 = vpack.c.b16 %v1162, %v1158
  %v1223 = vpack.c.b16 %v1163, %v1159
  %v1224 = vpack.c.b16 %v1164, %v1160
  %v1225 = vpack.c.b16 %v1165, %v1161
  %v1226 = vpack.c.b16 %v1170, %v1166
  %v1227 = vpack.c.b16 %v1171, %v1167
  %v1228 = vpack.c.b16 %v1172, %v1168
  %v1229 = vpack.c.b16 %v1173, %v1169
  %v1230 = vpack.c.b16 %v1178, %v1174
  %v1231 = vpack.c.b16 %v1179, %v1175
  %v1232 = vpack.c.b16 %v1180, %v1176
  %v1233 = vpack.c.b16 %v1181, %v1177
  %v1234 = vpack.c.b16 %v1186, %v1182
  %v1235 = vpack.c.b16 %v1187, %v1183
  %v1236 = vpack.c.b16 %v1188, %v1184
  %v1237 = vpack.c.b16 %v1189, %v1185
  %v1238 = vpack.c.b16 %v1194, %v1190
  %v1239 = vpack.c.b16 %v1195, %v1191
  %v1240 = vpack.c.b16 %v1196, %v1192
  %v1241 = vpack.c.b16 %v1197, %v1193
  %v1242 = vpack.c.b16 %v1202, %v1198
  %v1243 = vpack.c.b16 %v1203, %v1199
  %v1244 = vpack.c.b16 %v1204, %v1200
  %v1245 = vpack.c.b16 %v1205, %v1201
  %v1246 = vpack.c.b16 %v1210, %v1206
  %v1247 = vpack.c.b16 %v1211, %v1207
  %v1248 = vpack.c.b16 %v1212, %v1208
  %v1249 = vpack.c.b16 %v1213, %v1209
  %v1250 = vpack.c.b16 %v1218, %v1214
  %v1251 = vpack.c.b16 %v1219, %v1215
  %v1252 = vpack.c.b16 %v1220, %v1216
  %v1253 = vpack.c.b16 %v1221, %v1217
  %1286 = vmatprep.subr.bf16.mxu0 %v1223
  %1287 = vmatpush1.bf16.msra.mxu0 %v1222
  %1288 = vmatprep.subr.bf16.mxu0 %v1227
  %1289 = vmatpush1.bf16.msra.mxu0 %v1226
  %1290 = vmatprep.subr.bf16.mxu0 %v1231
  %1291 = vmatpush1.bf16.msra.mxu0 %v1230
  %1292 = vmatprep.subr.bf16.mxu0 %v1235
  %1293 = vmatpush1.bf16.msra.mxu0 %v1234
  %1294 = vmatprep.subr.bf16.mxu0 %v1239
  %1295 = vmatpush1.bf16.msra.mxu0 %v1238
  %1296 = vmatprep.subr.bf16.mxu0 %v1243
  %1297 = vmatpush1.bf16.msra.mxu0 %v1242
  %1298 = vmatprep.subr.bf16.mxu0 %v1247
  %1299 = vmatpush1.bf16.msra.mxu0 %v1246
  %1300 = vmatprep.subr.bf16.mxu0 %v1251
  %1301 = vmatpush1.bf16.msra.mxu0 %v1250
  %1302 = vmatprep.subr.bf16.mxu0 0
  %1303 = vmatpush1.bf16.msra.mxu0 0
  %1304 = vmatprep.subr.bf16.mxu0 0
  %1305 = vmatpush1.bf16.msra.mxu0 0
  %1306 = vmatprep.subr.bf16.mxu0 0
  %1307 = vmatpush1.bf16.msra.mxu0 0
  %1308 = vmatprep.subr.bf16.mxu0 0
  %1309 = vmatpush1.bf16.msra.mxu0 0
  %1310 = vmatprep.subr.bf16.mxu0 0
  %1311 = vmatpush1.bf16.msra.mxu0 0
  %1312 = vmatprep.subr.bf16.mxu0 0
  %1313 = vmatpush1.bf16.msra.mxu0 0
  %1314 = vmatprep.subr.bf16.mxu0 0
  %1315 = vmatpush1.bf16.msra.mxu0 0
  %1316 = vmatprep.subr.bf16.mxu0 0
  %1317 = vmatpush1.bf16.msra.mxu0 0
  %1318 = vmatprep.mubr.bf16.mxu0 0
  %1319 = vmatmul.mubr.bf16.gmra.mrb[0].mxu0 %v1074
  %v1320 = vpop.f32.mrb[0].mxu0
  %v1321 = vadd.f32 0.0, %v1320
  %v1322 = vpop.f32.mrb[0].mxu0
  %v1323 = vadd.f32 0.0, %v1322
  %v1324 = vpop.f32.mrb[0].mxu0
  %v1325 = vadd.f32 0.0, %v1324
  %v1326 = vpop.f32.mrb[0].mxu0
  %v1327 = vadd.f32 0.0, %v1326
  %1328 = vdwg.mxu0
  %1329 = vmatprep.subr.bf16.mxu0 %v1225
  %1330 = vmatpush1.bf16.msra.mxu0 %v1224
  %1331 = vmatprep.subr.bf16.mxu0 %v1229
  %1332 = vmatpush1.bf16.msra.mxu0 %v1228
  %1333 = vmatprep.subr.bf16.mxu0 %v1233
  %1334 = vmatpush1.bf16.msra.mxu0 %v1232
  %1335 = vmatprep.subr.bf16.mxu0 %v1237
  %1336 = vmatpush1.bf16.msra.mxu0 %v1236
  %1337 = vmatprep.subr.bf16.mxu0 %v1241
  %1338 = vmatpush1.bf16.msra.mxu0 %v1240
  %1339 = vmatprep.subr.bf16.mxu0 %v1245
  %1340 = vmatpush1.bf16.msra.mxu0 %v1244
  %1341 = vmatprep.subr.bf16.mxu0 %v1249
  %1342 = vmatpush1.bf16.msra.mxu0 %v1248
  %1343 = vmatprep.subr.bf16.mxu0 %v1253
  %1344 = vmatpush1.bf16.msra.mxu0 %v1252
  %1345 = vmatprep.subr.bf16.mxu0 0
  %1346 = vmatpush1.bf16.msra.mxu0 0
  %1347 = vmatprep.subr.bf16.mxu0 0
  %1348 = vmatpush1.bf16.msra.mxu0 0
  %1349 = vmatprep.subr.bf16.mxu0 0
  %1350 = vmatpush1.bf16.msra.mxu0 0
  %1351 = vmatprep.subr.bf16.mxu0 0
  %1352 = vmatpush1.bf16.msra.mxu0 0
  %1353 = vmatprep.subr.bf16.mxu0 0
  %1354 = vmatpush1.bf16.msra.mxu0 0
  %1355 = vmatprep.subr.bf16.mxu0 0
  %1356 = vmatpush1.bf16.msra.mxu0 0
  %1357 = vmatprep.subr.bf16.mxu0 0
  %1358 = vmatpush1.bf16.msra.mxu0 0
  %1359 = vmatprep.subr.bf16.mxu0 0
  %1360 = vmatpush1.bf16.msra.mxu0 0
  %1361 = vmatprep.mubr.bf16.mxu0 0
  %1362 = vmatmul.mubr.bf16.gmra.mrb[0].mxu0 %v1074
  %v1363 = vpop.f32.mrb[0].mxu0
  %v1364 = vadd.f32 0.0, %v1363
  %v1365 = vpop.f32.mrb[0].mxu0
  %v1366 = vadd.f32 0.0, %v1365
  %v1367 = vpop.f32.mrb[0].mxu0
  %v1368 = vadd.f32 0.0, %v1367
  %v1369 = vpop.f32.mrb[0].mxu0
  %v1370 = vadd.f32 0.0, %v1369
  %1371 = vdwg.mxu0
  %v1372 = vadd.f32 %v1086, %v1321
  %v1373 = vadd.f32 %v1087, %v1323
  %v1374 = vadd.f32 %v1088, %v1364
  %v1375 = vadd.f32 %v1089, %v1366
  %v1376 = vadd.f32 %v1090, %v1325
  %v1377 = vadd.f32 %v1091, %v1327
  %v1378 = vadd.f32 %v1092, %v1368
  %v1379 = vadd.f32 %v1093, %v1370
  %v1380 = vxor.u32 %v1372, 2147483648
  %v1381 = vxor.u32 %v1376, 2147483648
  %v1382 = vmul.f32 %v1380, 1.442695
  %v1383 = vpow.pop %v1382
  %v1384 = vmul.f32 %v1381, 1.442695
  %v1385 = vpow.pop %v1384
  %v1386 = vadd.f32 %v1383, 1.0
  %v1387 = vadd.f32 %v1385, 1.0
  %v1388 = vrcp.pop %v1386
  %v1389 = vmul.f32 1.0, %v1388
  %v1390 = vrcp.pop %v1387
  %v1391 = vmul.f32 1.0, %v1390
  %v1392 = vxor.u32 %v1373, 2147483648
  %v1393 = vxor.u32 %v1377, 2147483648
  %v1394 = vmul.f32 %v1392, 1.442695
  %v1395 = vpow.pop %v1394
  %v1396 = vmul.f32 %v1393, 1.442695
  %v1397 = vpow.pop %v1396
  %v1398 = vadd.f32 %v1395, 1.0
  %v1399 = vadd.f32 %v1397, 1.0
  %v1400 = vrcp.pop %v1398
  %v1401 = vmul.f32 1.0, %v1400
  %v1402 = vrcp.pop %v1399
  %v1403 = vmul.f32 1.0, %v1402
  %v1404 = vtanh.pop %v1374
  %v1405 = vtanh.pop %v1378
  %v1406 = vxor.u32 %v1375, 2147483648
  %v1407 = vxor.u32 %v1379, 2147483648
  %v1408 = vmul.f32 %v1406, 1.442695
  %v1409 = vpow.pop %v1408
  %v1410 = vmul.f32 %v1407, 1.442695
  %v1411 = vpow.pop %v1410
  %v1412 = vadd.f32 %v1409, 1.0
  %v1413 = vadd.f32 %v1411, 1.0
  %v1414 = vrcp.pop %v1412
  %v1415 = vmul.f32 1.0, %v1414
  %v1416 = vrcp.pop %v1413
  %v1417 = vmul.f32 1.0, %v1416
  %v1418 = vmul.f32 %v1401, %v1068
  %v1419 = vmul.f32 %v1403, %v1069
  %v1420 = vmul.f32 %v1389, %v1404
  %v1421 = vmul.f32 %v1391, %v1405
  %v1422 = vadd.f32 %v1418, %v1420
  %v1423 = vadd.f32 %v1419, %v1421
  %v1424 = vtanh.pop %v1422
  %v1425 = vtanh.pop %v1423
  %v1426 = vmul.f32 %v1415, %v1424
  %v1427 = vmul.f32 %v1417, %v1425
  %v1428 = vpack.c.bf16 %v1427, %v1426
  %v1430 = vunpack.c.l.b16 %v1428
  %v1431 = vunpack.c.h.b16 %v1428
  %v1432 = vpack.c.b16 %v1430, %v1430
  %v1433 = vpack.c.b16 %v1431, %v1431
  %s1436 = scalar_lea.vmem %s2, 24
  %1437 = vst [vmem:[%s1436] sm:$0xf] %v1432
  %1438 = vst [vmem:[%s1436 + $0x4] sm:$0xf] %v1433
  %s1439 = scalar_lea.vmem %s0, 256
  %v1440 = vld [vmem:[%s1439] sm:$0xff]
  %v1441 = vld [vmem:[%s1439 + $0x8] sm:$0xff]
  %v1442 = vld [vmem:[%s1439 + $0x10] sm:$0xff]
  %v1443 = vld [vmem:[%s1439 + $0x18] sm:$0xff]
  %v1444 = vld [vmem:[%s1439 + $0x20] sm:$0xff]
  %v1445 = vld [vmem:[%s1439 + $0x28] sm:$0xff]
  %v1446 = vld [vmem:[%s1439 + $0x30] sm:$0xff]
  %v1447 = vld [vmem:[%s1439 + $0x38] sm:$0xff]
  %v1448 = vld [vmem:[%s1] sm:$0xff]
  %v1449 = vld [vmem:[%s1 + $0x8] sm:$0xff]
  %v1450 = vld [vmem:[%s1 + $0x10] sm:$0xff]
  %v1451 = vld [vmem:[%s1 + $0x18] sm:$0xff]
  %v1452 = vld [vmem:[%s1 + $0x20] sm:$0xff]
  %v1453 = vld [vmem:[%s1 + $0x28] sm:$0xff]
  %v1454 = vld [vmem:[%s1 + $0x30] sm:$0xff]
  %v1455 = vld [vmem:[%s1 + $0x38] sm:$0xff]
  %v1456 = vld [vmem:[%s1 + $0x40] sm:$0xff]
  %v1457 = vld [vmem:[%s1 + $0x48] sm:$0xff]
  %v1458 = vld [vmem:[%s1 + $0x50] sm:$0xff]
  %v1459 = vld [vmem:[%s1 + $0x58] sm:$0xff]
  %v1460 = vld [vmem:[%s1 + $0x60] sm:$0xff]
  %v1461 = vld [vmem:[%s1 + $0x68] sm:$0xff]
  %v1462 = vld [vmem:[%s1 + $0x70] sm:$0xff]
  %v1463 = vld [vmem:[%s1 + $0x78] sm:$0xff]
  %v1464 = vld [vmem:[%s1 + $0x80] sm:$0xff]
  %v1465 = vld [vmem:[%s1 + $0x88] sm:$0xff]
  %v1466 = vld [vmem:[%s1 + $0x90] sm:$0xff]
  %v1467 = vld [vmem:[%s1 + $0x98] sm:$0xff]
  %v1468 = vld [vmem:[%s1 + $0xa0] sm:$0xff]
  %v1469 = vld [vmem:[%s1 + $0xa8] sm:$0xff]
  %v1470 = vld [vmem:[%s1 + $0xb0] sm:$0xff]
  %v1471 = vld [vmem:[%s1 + $0xb8] sm:$0xff]
  %v1472 = vld [vmem:[%s1 + $0xc0] sm:$0xff]
  %v1473 = vld [vmem:[%s1 + $0xc8] sm:$0xff]
  %v1474 = vld [vmem:[%s1 + $0xd0] sm:$0xff]
  %v1475 = vld [vmem:[%s1 + $0xd8] sm:$0xff]
  %v1476 = vld [vmem:[%s1 + $0xe0] sm:$0xff]
  %v1477 = vld [vmem:[%s1 + $0xe8] sm:$0xff]
  %v1478 = vld [vmem:[%s1 + $0xf0] sm:$0xff]
  %v1479 = vld [vmem:[%s1 + $0xf8] sm:$0xff]
  %v1512 = vunpack.c.l.b16 %v1448
  %v1513 = vunpack.c.h.b16 %v1448
  %v1514 = vunpack.c.l.b16 %v1449
  %v1515 = vunpack.c.h.b16 %v1449
  %v1516 = vunpack.c.l.b16 %v1450
  %v1517 = vunpack.c.h.b16 %v1450
  %v1518 = vunpack.c.l.b16 %v1451
  %v1519 = vunpack.c.h.b16 %v1451
  %v1520 = vunpack.c.l.b16 %v1452
  %v1521 = vunpack.c.h.b16 %v1452
  %v1522 = vunpack.c.l.b16 %v1453
  %v1523 = vunpack.c.h.b16 %v1453
  %v1524 = vunpack.c.l.b16 %v1454
  %v1525 = vunpack.c.h.b16 %v1454
  %v1526 = vunpack.c.l.b16 %v1455
  %v1527 = vunpack.c.h.b16 %v1455
  %v1528 = vunpack.c.l.b16 %v1456
  %v1529 = vunpack.c.h.b16 %v1456
  %v1530 = vunpack.c.l.b16 %v1457
  %v1531 = vunpack.c.h.b16 %v1457
  %v1532 = vunpack.c.l.b16 %v1458
  %v1533 = vunpack.c.h.b16 %v1458
  %v1534 = vunpack.c.l.b16 %v1459
  %v1535 = vunpack.c.h.b16 %v1459
  %v1536 = vunpack.c.l.b16 %v1460
  %v1537 = vunpack.c.h.b16 %v1460
  %v1538 = vunpack.c.l.b16 %v1461
  %v1539 = vunpack.c.h.b16 %v1461
  %v1540 = vunpack.c.l.b16 %v1462
  %v1541 = vunpack.c.h.b16 %v1462
  %v1542 = vunpack.c.l.b16 %v1463
  %v1543 = vunpack.c.h.b16 %v1463
  %v1544 = vunpack.c.l.b16 %v1464
  %v1545 = vunpack.c.h.b16 %v1464
  %v1546 = vunpack.c.l.b16 %v1465
  %v1547 = vunpack.c.h.b16 %v1465
  %v1548 = vunpack.c.l.b16 %v1466
  %v1549 = vunpack.c.h.b16 %v1466
  %v1550 = vunpack.c.l.b16 %v1467
  %v1551 = vunpack.c.h.b16 %v1467
  %v1552 = vunpack.c.l.b16 %v1468
  %v1553 = vunpack.c.h.b16 %v1468
  %v1554 = vunpack.c.l.b16 %v1469
  %v1555 = vunpack.c.h.b16 %v1469
  %v1556 = vunpack.c.l.b16 %v1470
  %v1557 = vunpack.c.h.b16 %v1470
  %v1558 = vunpack.c.l.b16 %v1471
  %v1559 = vunpack.c.h.b16 %v1471
  %v1560 = vunpack.c.l.b16 %v1472
  %v1561 = vunpack.c.h.b16 %v1472
  %v1562 = vunpack.c.l.b16 %v1473
  %v1563 = vunpack.c.h.b16 %v1473
  %v1564 = vunpack.c.l.b16 %v1474
  %v1565 = vunpack.c.h.b16 %v1474
  %v1566 = vunpack.c.l.b16 %v1475
  %v1567 = vunpack.c.h.b16 %v1475
  %v1568 = vunpack.c.l.b16 %v1476
  %v1569 = vunpack.c.h.b16 %v1476
  %v1570 = vunpack.c.l.b16 %v1477
  %v1571 = vunpack.c.h.b16 %v1477
  %v1572 = vunpack.c.l.b16 %v1478
  %v1573 = vunpack.c.h.b16 %v1478
  %v1574 = vunpack.c.l.b16 %v1479
  %v1575 = vunpack.c.h.b16 %v1479
  %v1576 = vpack.c.b16 %v1516, %v1512
  %v1577 = vpack.c.b16 %v1517, %v1513
  %v1578 = vpack.c.b16 %v1518, %v1514
  %v1579 = vpack.c.b16 %v1519, %v1515
  %v1580 = vpack.c.b16 %v1524, %v1520
  %v1581 = vpack.c.b16 %v1525, %v1521
  %v1582 = vpack.c.b16 %v1526, %v1522
  %v1583 = vpack.c.b16 %v1527, %v1523
  %v1584 = vpack.c.b16 %v1532, %v1528
  %v1585 = vpack.c.b16 %v1533, %v1529
  %v1586 = vpack.c.b16 %v1534, %v1530
  %v1587 = vpack.c.b16 %v1535, %v1531
  %v1588 = vpack.c.b16 %v1540, %v1536
  %v1589 = vpack.c.b16 %v1541, %v1537
  %v1590 = vpack.c.b16 %v1542, %v1538
  %v1591 = vpack.c.b16 %v1543, %v1539
  %v1592 = vpack.c.b16 %v1548, %v1544
  %v1593 = vpack.c.b16 %v1549, %v1545
  %v1594 = vpack.c.b16 %v1550, %v1546
  %v1595 = vpack.c.b16 %v1551, %v1547
  %v1596 = vpack.c.b16 %v1556, %v1552
  %v1597 = vpack.c.b16 %v1557, %v1553
  %v1598 = vpack.c.b16 %v1558, %v1554
  %v1599 = vpack.c.b16 %v1559, %v1555
  %v1600 = vpack.c.b16 %v1564, %v1560
  %v1601 = vpack.c.b16 %v1565, %v1561
  %v1602 = vpack.c.b16 %v1566, %v1562
  %v1603 = vpack.c.b16 %v1567, %v1563
  %v1604 = vpack.c.b16 %v1572, %v1568
  %v1605 = vpack.c.b16 %v1573, %v1569
  %v1606 = vpack.c.b16 %v1574, %v1570
  %v1607 = vpack.c.b16 %v1575, %v1571
  %1640 = vmatprep.subr.bf16.mxu0 %v1577
  %1641 = vmatpush1.bf16.msra.mxu0 %v1576
  %1642 = vmatprep.subr.bf16.mxu0 %v1581
  %1643 = vmatpush1.bf16.msra.mxu0 %v1580
  %1644 = vmatprep.subr.bf16.mxu0 %v1585
  %1645 = vmatpush1.bf16.msra.mxu0 %v1584
  %1646 = vmatprep.subr.bf16.mxu0 %v1589
  %1647 = vmatpush1.bf16.msra.mxu0 %v1588
  %1648 = vmatprep.subr.bf16.mxu0 %v1593
  %1649 = vmatpush1.bf16.msra.mxu0 %v1592
  %1650 = vmatprep.subr.bf16.mxu0 %v1597
  %1651 = vmatpush1.bf16.msra.mxu0 %v1596
  %1652 = vmatprep.subr.bf16.mxu0 %v1601
  %1653 = vmatpush1.bf16.msra.mxu0 %v1600
  %1654 = vmatprep.subr.bf16.mxu0 %v1605
  %1655 = vmatpush1.bf16.msra.mxu0 %v1604
  %1656 = vmatprep.subr.bf16.mxu0 0
  %1657 = vmatpush1.bf16.msra.mxu0 0
  %1658 = vmatprep.subr.bf16.mxu0 0
  %1659 = vmatpush1.bf16.msra.mxu0 0
  %1660 = vmatprep.subr.bf16.mxu0 0
  %1661 = vmatpush1.bf16.msra.mxu0 0
  %1662 = vmatprep.subr.bf16.mxu0 0
  %1663 = vmatpush1.bf16.msra.mxu0 0
  %1664 = vmatprep.subr.bf16.mxu0 0
  %1665 = vmatpush1.bf16.msra.mxu0 0
  %1666 = vmatprep.subr.bf16.mxu0 0
  %1667 = vmatpush1.bf16.msra.mxu0 0
  %1668 = vmatprep.subr.bf16.mxu0 0
  %1669 = vmatpush1.bf16.msra.mxu0 0
  %1670 = vmatprep.subr.bf16.mxu0 0
  %1671 = vmatpush1.bf16.msra.mxu0 0
  %1672 = vmatprep.mubr.bf16.mxu0 0
  %1673 = vmatmul.mubr.bf16.gmra.mrb[0].mxu0 %v1428
  %v1674 = vpop.f32.mrb[0].mxu0
  %v1675 = vadd.f32 0.0, %v1674
  %v1676 = vpop.f32.mrb[0].mxu0
  %v1677 = vadd.f32 0.0, %v1676
  %v1678 = vpop.f32.mrb[0].mxu0
  %v1679 = vadd.f32 0.0, %v1678
  %v1680 = vpop.f32.mrb[0].mxu0
  %v1681 = vadd.f32 0.0, %v1680
  %1682 = vdwg.mxu0
  %1683 = vmatprep.subr.bf16.mxu0 %v1579
  %1684 = vmatpush1.bf16.msra.mxu0 %v1578
  %1685 = vmatprep.subr.bf16.mxu0 %v1583
  %1686 = vmatpush1.bf16.msra.mxu0 %v1582
  %1687 = vmatprep.subr.bf16.mxu0 %v1587
  %1688 = vmatpush1.bf16.msra.mxu0 %v1586
  %1689 = vmatprep.subr.bf16.mxu0 %v1591
  %1690 = vmatpush1.bf16.msra.mxu0 %v1590
  %1691 = vmatprep.subr.bf16.mxu0 %v1595
  %1692 = vmatpush1.bf16.msra.mxu0 %v1594
  %1693 = vmatprep.subr.bf16.mxu0 %v1599
  %1694 = vmatpush1.bf16.msra.mxu0 %v1598
  %1695 = vmatprep.subr.bf16.mxu0 %v1603
  %1696 = vmatpush1.bf16.msra.mxu0 %v1602
  %1697 = vmatprep.subr.bf16.mxu0 %v1607
  %1698 = vmatpush1.bf16.msra.mxu0 %v1606
  %1699 = vmatprep.subr.bf16.mxu0 0
  %1700 = vmatpush1.bf16.msra.mxu0 0
  %1701 = vmatprep.subr.bf16.mxu0 0
  %1702 = vmatpush1.bf16.msra.mxu0 0
  %1703 = vmatprep.subr.bf16.mxu0 0
  %1704 = vmatpush1.bf16.msra.mxu0 0
  %1705 = vmatprep.subr.bf16.mxu0 0
  %1706 = vmatpush1.bf16.msra.mxu0 0
  %1707 = vmatprep.subr.bf16.mxu0 0
  %1708 = vmatpush1.bf16.msra.mxu0 0
  %1709 = vmatprep.subr.bf16.mxu0 0
  %1710 = vmatpush1.bf16.msra.mxu0 0
  %1711 = vmatprep.subr.bf16.mxu0 0
  %1712 = vmatpush1.bf16.msra.mxu0 0
  %1713 = vmatprep.subr.bf16.mxu0 0
  %1714 = vmatpush1.bf16.msra.mxu0 0
  %1715 = vmatprep.mubr.bf16.mxu0 0
  %1716 = vmatmul.mubr.bf16.gmra.mrb[0].mxu0 %v1428
  %v1717 = vpop.f32.mrb[0].mxu0
  %v1718 = vadd.f32 0.0, %v1717
  %v1719 = vpop.f32.mrb[0].mxu0
  %v1720 = vadd.f32 0.0, %v1719
  %v1721 = vpop.f32.mrb[0].mxu0
  %v1722 = vadd.f32 0.0, %v1721
  %v1723 = vpop.f32.mrb[0].mxu0
  %v1724 = vadd.f32 0.0, %v1723
  %1725 = vdwg.mxu0
  %v1726 = vadd.f32 %v1440, %v1675
  %v1727 = vadd.f32 %v1441, %v1677
  %v1728 = vadd.f32 %v1442, %v1718
  %v1729 = vadd.f32 %v1443, %v1720
  %v1730 = vadd.f32 %v1444, %v1679
  %v1731 = vadd.f32 %v1445, %v1681
  %v1732 = vadd.f32 %v1446, %v1722
  %v1733 = vadd.f32 %v1447, %v1724
  %v1734 = vxor.u32 %v1726, 2147483648
  %v1735 = vxor.u32 %v1730, 2147483648
  %v1736 = vmul.f32 %v1734, 1.442695
  %v1737 = vpow.pop %v1736
  %v1738 = vmul.f32 %v1735, 1.442695
  %v1739 = vpow.pop %v1738
  %v1740 = vadd.f32 %v1737, 1.0
  %v1741 = vadd.f32 %v1739, 1.0
  %v1742 = vrcp.pop %v1740
  %v1743 = vmul.f32 1.0, %v1742
  %v1744 = vrcp.pop %v1741
  %v1745 = vmul.f32 1.0, %v1744
  %v1746 = vxor.u32 %v1727, 2147483648
  %v1747 = vxor.u32 %v1731, 2147483648
  %v1748 = vmul.f32 %v1746, 1.442695
  %v1749 = vpow.pop %v1748
  %v1750 = vmul.f32 %v1747, 1.442695
  %v1751 = vpow.pop %v1750
  %v1752 = vadd.f32 %v1749, 1.0
  %v1753 = vadd.f32 %v1751, 1.0
  %v1754 = vrcp.pop %v1752
  %v1755 = vmul.f32 1.0, %v1754
  %v1756 = vrcp.pop %v1753
  %v1757 = vmul.f32 1.0, %v1756
  %v1758 = vtanh.pop %v1728
  %v1759 = vtanh.pop %v1732
  %v1760 = vxor.u32 %v1729, 2147483648
  %v1761 = vxor.u32 %v1733, 2147483648
  %v1762 = vmul.f32 %v1760, 1.442695
  %v1763 = vpow.pop %v1762
  %v1764 = vmul.f32 %v1761, 1.442695
  %v1765 = vpow.pop %v1764
  %v1766 = vadd.f32 %v1763, 1.0
  %v1767 = vadd.f32 %v1765, 1.0
  %v1768 = vrcp.pop %v1766
  %v1769 = vmul.f32 1.0, %v1768
  %v1770 = vrcp.pop %v1767
  %v1771 = vmul.f32 1.0, %v1770
  %v1772 = vmul.f32 %v1755, %v1422
  %v1773 = vmul.f32 %v1757, %v1423
  %v1774 = vmul.f32 %v1743, %v1758
  %v1775 = vmul.f32 %v1745, %v1759
  %v1776 = vadd.f32 %v1772, %v1774
  %v1777 = vadd.f32 %v1773, %v1775
  %v1778 = vtanh.pop %v1776
  %v1779 = vtanh.pop %v1777
  %v1780 = vmul.f32 %v1769, %v1778
  %v1781 = vmul.f32 %v1771, %v1779
  %v1782 = vpack.c.bf16 %v1781, %v1780
  %v1784 = vunpack.c.l.b16 %v1782
  %v1785 = vunpack.c.h.b16 %v1782
  %v1786 = vpack.c.b16 %v1784, %v1784
  %v1787 = vpack.c.b16 %v1785, %v1785
  %s1790 = scalar_lea.vmem %s2, 32
  %1791 = vst [vmem:[%s1790] sm:$0xf] %v1786
  %1792 = vst [vmem:[%s1790 + $0x4] sm:$0xf] %v1787
  %s1793 = scalar_lea.vmem %s0, 320
  %v1794 = vld [vmem:[%s1793] sm:$0xff]
  %v1795 = vld [vmem:[%s1793 + $0x8] sm:$0xff]
  %v1796 = vld [vmem:[%s1793 + $0x10] sm:$0xff]
  %v1797 = vld [vmem:[%s1793 + $0x18] sm:$0xff]
  %v1798 = vld [vmem:[%s1793 + $0x20] sm:$0xff]
  %v1799 = vld [vmem:[%s1793 + $0x28] sm:$0xff]
  %v1800 = vld [vmem:[%s1793 + $0x30] sm:$0xff]
  %v1801 = vld [vmem:[%s1793 + $0x38] sm:$0xff]
  %v1802 = vld [vmem:[%s1] sm:$0xff]
  %v1803 = vld [vmem:[%s1 + $0x8] sm:$0xff]
  %v1804 = vld [vmem:[%s1 + $0x10] sm:$0xff]
  %v1805 = vld [vmem:[%s1 + $0x18] sm:$0xff]
  %v1806 = vld [vmem:[%s1 + $0x20] sm:$0xff]
  %v1807 = vld [vmem:[%s1 + $0x28] sm:$0xff]
  %v1808 = vld [vmem:[%s1 + $0x30] sm:$0xff]
  %v1809 = vld [vmem:[%s1 + $0x38] sm:$0xff]
  %v1810 = vld [vmem:[%s1 + $0x40] sm:$0xff]
  %v1811 = vld [vmem:[%s1 + $0x48] sm:$0xff]
  %v1812 = vld [vmem:[%s1 + $0x50] sm:$0xff]
  %v1813 = vld [vmem:[%s1 + $0x58] sm:$0xff]
  %v1814 = vld [vmem:[%s1 + $0x60] sm:$0xff]
  %v1815 = vld [vmem:[%s1 + $0x68] sm:$0xff]
  %v1816 = vld [vmem:[%s1 + $0x70] sm:$0xff]
  %v1817 = vld [vmem:[%s1 + $0x78] sm:$0xff]
  %v1818 = vld [vmem:[%s1 + $0x80] sm:$0xff]
  %v1819 = vld [vmem:[%s1 + $0x88] sm:$0xff]
  %v1820 = vld [vmem:[%s1 + $0x90] sm:$0xff]
  %v1821 = vld [vmem:[%s1 + $0x98] sm:$0xff]
  %v1822 = vld [vmem:[%s1 + $0xa0] sm:$0xff]
  %v1823 = vld [vmem:[%s1 + $0xa8] sm:$0xff]
  %v1824 = vld [vmem:[%s1 + $0xb0] sm:$0xff]
  %v1825 = vld [vmem:[%s1 + $0xb8] sm:$0xff]
  %v1826 = vld [vmem:[%s1 + $0xc0] sm:$0xff]
  %v1827 = vld [vmem:[%s1 + $0xc8] sm:$0xff]
  %v1828 = vld [vmem:[%s1 + $0xd0] sm:$0xff]
  %v1829 = vld [vmem:[%s1 + $0xd8] sm:$0xff]
  %v1830 = vld [vmem:[%s1 + $0xe0] sm:$0xff]
  %v1831 = vld [vmem:[%s1 + $0xe8] sm:$0xff]
  %v1832 = vld [vmem:[%s1 + $0xf0] sm:$0xff]
  %v1833 = vld [vmem:[%s1 + $0xf8] sm:$0xff]
  %v1866 = vunpack.c.l.b16 %v1802
  %v1867 = vunpack.c.h.b16 %v1802
  %v1868 = vunpack.c.l.b16 %v1803
  %v1869 = vunpack.c.h.b16 %v1803
  %v1870 = vunpack.c.l.b16 %v1804
  %v1871 = vunpack.c.h.b16 %v1804
  %v1872 = vunpack.c.l.b16 %v1805
  %v1873 = vunpack.c.h.b16 %v1805
  %v1874 = vunpack.c.l.b16 %v1806
  %v1875 = vunpack.c.h.b16 %v1806
  %v1876 = vunpack.c.l.b16 %v1807
  %v1877 = vunpack.c.h.b16 %v1807
  %v1878 = vunpack.c.l.b16 %v1808
  %v1879 = vunpack.c.h.b16 %v1808
  %v1880 = vunpack.c.l.b16 %v1809
  %v1881 = vunpack.c.h.b16 %v1809
  %v1882 = vunpack.c.l.b16 %v1810
  %v1883 = vunpack.c.h.b16 %v1810
  %v1884 = vunpack.c.l.b16 %v1811
  %v1885 = vunpack.c.h.b16 %v1811
  %v1886 = vunpack.c.l.b16 %v1812
  %v1887 = vunpack.c.h.b16 %v1812
  %v1888 = vunpack.c.l.b16 %v1813
  %v1889 = vunpack.c.h.b16 %v1813
  %v1890 = vunpack.c.l.b16 %v1814
  %v1891 = vunpack.c.h.b16 %v1814
  %v1892 = vunpack.c.l.b16 %v1815
  %v1893 = vunpack.c.h.b16 %v1815
  %v1894 = vunpack.c.l.b16 %v1816
  %v1895 = vunpack.c.h.b16 %v1816
  %v1896 = vunpack.c.l.b16 %v1817
  %v1897 = vunpack.c.h.b16 %v1817
  %v1898 = vunpack.c.l.b16 %v1818
  %v1899 = vunpack.c.h.b16 %v1818
  %v1900 = vunpack.c.l.b16 %v1819
  %v1901 = vunpack.c.h.b16 %v1819
  %v1902 = vunpack.c.l.b16 %v1820
  %v1903 = vunpack.c.h.b16 %v1820
  %v1904 = vunpack.c.l.b16 %v1821
  %v1905 = vunpack.c.h.b16 %v1821
  %v1906 = vunpack.c.l.b16 %v1822
  %v1907 = vunpack.c.h.b16 %v1822
  %v1908 = vunpack.c.l.b16 %v1823
  %v1909 = vunpack.c.h.b16 %v1823
  %v1910 = vunpack.c.l.b16 %v1824
  %v1911 = vunpack.c.h.b16 %v1824
  %v1912 = vunpack.c.l.b16 %v1825
  %v1913 = vunpack.c.h.b16 %v1825
  %v1914 = vunpack.c.l.b16 %v1826
  %v1915 = vunpack.c.h.b16 %v1826
  %v1916 = vunpack.c.l.b16 %v1827
  %v1917 = vunpack.c.h.b16 %v1827
  %v1918 = vunpack.c.l.b16 %v1828
  %v1919 = vunpack.c.h.b16 %v1828
  %v1920 = vunpack.c.l.b16 %v1829
  %v1921 = vunpack.c.h.b16 %v1829
  %v1922 = vunpack.c.l.b16 %v1830
  %v1923 = vunpack.c.h.b16 %v1830
  %v1924 = vunpack.c.l.b16 %v1831
  %v1925 = vunpack.c.h.b16 %v1831
  %v1926 = vunpack.c.l.b16 %v1832
  %v1927 = vunpack.c.h.b16 %v1832
  %v1928 = vunpack.c.l.b16 %v1833
  %v1929 = vunpack.c.h.b16 %v1833
  %v1930 = vpack.c.b16 %v1870, %v1866
  %v1931 = vpack.c.b16 %v1871, %v1867
  %v1932 = vpack.c.b16 %v1872, %v1868
  %v1933 = vpack.c.b16 %v1873, %v1869
  %v1934 = vpack.c.b16 %v1878, %v1874
  %v1935 = vpack.c.b16 %v1879, %v1875
  %v1936 = vpack.c.b16 %v1880, %v1876
  %v1937 = vpack.c.b16 %v1881, %v1877
  %v1938 = vpack.c.b16 %v1886, %v1882
  %v1939 = vpack.c.b16 %v1887, %v1883
  %v1940 = vpack.c.b16 %v1888, %v1884
  %v1941 = vpack.c.b16 %v1889, %v1885
  %v1942 = vpack.c.b16 %v1894, %v1890
  %v1943 = vpack.c.b16 %v1895, %v1891
  %v1944 = vpack.c.b16 %v1896, %v1892
  %v1945 = vpack.c.b16 %v1897, %v1893
  %v1946 = vpack.c.b16 %v1902, %v1898
  %v1947 = vpack.c.b16 %v1903, %v1899
  %v1948 = vpack.c.b16 %v1904, %v1900
  %v1949 = vpack.c.b16 %v1905, %v1901
  %v1950 = vpack.c.b16 %v1910, %v1906
  %v1951 = vpack.c.b16 %v1911, %v1907
  %v1952 = vpack.c.b16 %v1912, %v1908
  %v1953 = vpack.c.b16 %v1913, %v1909
  %v1954 = vpack.c.b16 %v1918, %v1914
  %v1955 = vpack.c.b16 %v1919, %v1915
  %v1956 = vpack.c.b16 %v1920, %v1916
  %v1957 = vpack.c.b16 %v1921, %v1917
  %v1958 = vpack.c.b16 %v1926, %v1922
  %v1959 = vpack.c.b16 %v1927, %v1923
  %v1960 = vpack.c.b16 %v1928, %v1924
  %v1961 = vpack.c.b16 %v1929, %v1925
  %1994 = vmatprep.subr.bf16.mxu0 %v1931
  %1995 = vmatpush1.bf16.msra.mxu0 %v1930
  %1996 = vmatprep.subr.bf16.mxu0 %v1935
  %1997 = vmatpush1.bf16.msra.mxu0 %v1934
  %1998 = vmatprep.subr.bf16.mxu0 %v1939
  %1999 = vmatpush1.bf16.msra.mxu0 %v1938
  %2000 = vmatprep.subr.bf16.mxu0 %v1943
  %2001 = vmatpush1.bf16.msra.mxu0 %v1942
  %2002 = vmatprep.subr.bf16.mxu0 %v1947
  %2003 = vmatpush1.bf16.msra.mxu0 %v1946
  %2004 = vmatprep.subr.bf16.mxu0 %v1951
  %2005 = vmatpush1.bf16.msra.mxu0 %v1950
  %2006 = vmatprep.subr.bf16.mxu0 %v1955
  %2007 = vmatpush1.bf16.msra.mxu0 %v1954
  %2008 = vmatprep.subr.bf16.mxu0 %v1959
  %2009 = vmatpush1.bf16.msra.mxu0 %v1958
  %2010 = vmatprep.subr.bf16.mxu0 0
  %2011 = vmatpush1.bf16.msra.mxu0 0
  %2012 = vmatprep.subr.bf16.mxu0 0
  %2013 = vmatpush1.bf16.msra.mxu0 0
  %2014 = vmatprep.subr.bf16.mxu0 0
  %2015 = vmatpush1.bf16.msra.mxu0 0
  %2016 = vmatprep.subr.bf16.mxu0 0
  %2017 = vmatpush1.bf16.msra.mxu0 0
  %2018 = vmatprep.subr.bf16.mxu0 0
  %2019 = vmatpush1.bf16.msra.mxu0 0
  %2020 = vmatprep.subr.bf16.mxu0 0
  %2021 = vmatpush1.bf16.msra.mxu0 0
  %2022 = vmatprep.subr.bf16.mxu0 0
  %2023 = vmatpush1.bf16.msra.mxu0 0
  %2024 = vmatprep.subr.bf16.mxu0 0
  %2025 = vmatpush1.bf16.msra.mxu0 0
  %2026 = vmatprep.mubr.bf16.mxu0 0
  %2027 = vmatmul.mubr.bf16.gmra.mrb[0].mxu0 %v1782
  %v2028 = vpop.f32.mrb[0].mxu0
  %v2029 = vadd.f32 0.0, %v2028
  %v2030 = vpop.f32.mrb[0].mxu0
  %v2031 = vadd.f32 0.0, %v2030
  %v2032 = vpop.f32.mrb[0].mxu0
  %v2033 = vadd.f32 0.0, %v2032
  %v2034 = vpop.f32.mrb[0].mxu0
  %v2035 = vadd.f32 0.0, %v2034
  %2036 = vdwg.mxu0
  %2037 = vmatprep.subr.bf16.mxu0 %v1933
  %2038 = vmatpush1.bf16.msra.mxu0 %v1932
  %2039 = vmatprep.subr.bf16.mxu0 %v1937
  %2040 = vmatpush1.bf16.msra.mxu0 %v1936
  %2041 = vmatprep.subr.bf16.mxu0 %v1941
  %2042 = vmatpush1.bf16.msra.mxu0 %v1940
  %2043 = vmatprep.subr.bf16.mxu0 %v1945
  %2044 = vmatpush1.bf16.msra.mxu0 %v1944
  %2045 = vmatprep.subr.bf16.mxu0 %v1949
  %2046 = vmatpush1.bf16.msra.mxu0 %v1948
  %2047 = vmatprep.subr.bf16.mxu0 %v1953
  %2048 = vmatpush1.bf16.msra.mxu0 %v1952
  %2049 = vmatprep.subr.bf16.mxu0 %v1957
  %2050 = vmatpush1.bf16.msra.mxu0 %v1956
  %2051 = vmatprep.subr.bf16.mxu0 %v1961
  %2052 = vmatpush1.bf16.msra.mxu0 %v1960
  %2053 = vmatprep.subr.bf16.mxu0 0
  %2054 = vmatpush1.bf16.msra.mxu0 0
  %2055 = vmatprep.subr.bf16.mxu0 0
  %2056 = vmatpush1.bf16.msra.mxu0 0
  %2057 = vmatprep.subr.bf16.mxu0 0
  %2058 = vmatpush1.bf16.msra.mxu0 0
  %2059 = vmatprep.subr.bf16.mxu0 0
  %2060 = vmatpush1.bf16.msra.mxu0 0
  %2061 = vmatprep.subr.bf16.mxu0 0
  %2062 = vmatpush1.bf16.msra.mxu0 0
  %2063 = vmatprep.subr.bf16.mxu0 0
  %2064 = vmatpush1.bf16.msra.mxu0 0
  %2065 = vmatprep.subr.bf16.mxu0 0
  %2066 = vmatpush1.bf16.msra.mxu0 0
  %2067 = vmatprep.subr.bf16.mxu0 0
  %2068 = vmatpush1.bf16.msra.mxu0 0
  %2069 = vmatprep.mubr.bf16.mxu0 0
  %2070 = vmatmul.mubr.bf16.gmra.mrb[0].mxu0 %v1782
  %v2071 = vpop.f32.mrb[0].mxu0
  %v2072 = vadd.f32 0.0, %v2071
  %v2073 = vpop.f32.mrb[0].mxu0
  %v2074 = vadd.f32 0.0, %v2073
  %v2075 = vpop.f32.mrb[0].mxu0
  %v2076 = vadd.f32 0.0, %v2075
  %v2077 = vpop.f32.mrb[0].mxu0
  %v2078 = vadd.f32 0.0, %v2077
  %2079 = vdwg.mxu0
  %v2080 = vadd.f32 %v1794, %v2029
  %v2081 = vadd.f32 %v1795, %v2031
  %v2082 = vadd.f32 %v1796, %v2072
  %v2083 = vadd.f32 %v1797, %v2074
  %v2084 = vadd.f32 %v1798, %v2033
  %v2085 = vadd.f32 %v1799, %v2035
  %v2086 = vadd.f32 %v1800, %v2076
  %v2087 = vadd.f32 %v1801, %v2078
  %v2088 = vxor.u32 %v2080, 2147483648
  %v2089 = vxor.u32 %v2084, 2147483648
  %v2090 = vmul.f32 %v2088, 1.442695
  %v2091 = vpow.pop %v2090
  %v2092 = vmul.f32 %v2089, 1.442695
  %v2093 = vpow.pop %v2092
  %v2094 = vadd.f32 %v2091, 1.0
  %v2095 = vadd.f32 %v2093, 1.0
  %v2096 = vrcp.pop %v2094
  %v2097 = vmul.f32 1.0, %v2096
  %v2098 = vrcp.pop %v2095
  %v2099 = vmul.f32 1.0, %v2098
  %v2100 = vxor.u32 %v2081, 2147483648
  %v2101 = vxor.u32 %v2085, 2147483648
  %v2102 = vmul.f32 %v2100, 1.442695
  %v2103 = vpow.pop %v2102
  %v2104 = vmul.f32 %v2101, 1.442695
  %v2105 = vpow.pop %v2104
  %v2106 = vadd.f32 %v2103, 1.0
  %v2107 = vadd.f32 %v2105, 1.0
  %v2108 = vrcp.pop %v2106
  %v2109 = vmul.f32 1.0, %v2108
  %v2110 = vrcp.pop %v2107
  %v2111 = vmul.f32 1.0, %v2110
  %v2112 = vtanh.pop %v2082
  %v2113 = vtanh.pop %v2086
  %v2114 = vxor.u32 %v2083, 2147483648
  %v2115 = vxor.u32 %v2087, 2147483648
  %v2116 = vmul.f32 %v2114, 1.442695
  %v2117 = vpow.pop %v2116
  %v2118 = vmul.f32 %v2115, 1.442695
  %v2119 = vpow.pop %v2118
  %v2120 = vadd.f32 %v2117, 1.0
  %v2121 = vadd.f32 %v2119, 1.0
  %v2122 = vrcp.pop %v2120
  %v2123 = vmul.f32 1.0, %v2122
  %v2124 = vrcp.pop %v2121
  %v2125 = vmul.f32 1.0, %v2124
  %v2126 = vmul.f32 %v2109, %v1776
  %v2127 = vmul.f32 %v2111, %v1777
  %v2128 = vmul.f32 %v2097, %v2112
  %v2129 = vmul.f32 %v2099, %v2113
  %v2130 = vadd.f32 %v2126, %v2128
  %v2131 = vadd.f32 %v2127, %v2129
  %v2132 = vtanh.pop %v2130
  %v2133 = vtanh.pop %v2131
  %v2134 = vmul.f32 %v2123, %v2132
  %v2135 = vmul.f32 %v2125, %v2133
  %v2136 = vpack.c.bf16 %v2135, %v2134
  %v2138 = vunpack.c.l.b16 %v2136
  %v2139 = vunpack.c.h.b16 %v2136
  %v2140 = vpack.c.b16 %v2138, %v2138
  %v2141 = vpack.c.b16 %v2139, %v2139
  %s2144 = scalar_lea.vmem %s2, 40
  %2145 = vst [vmem:[%s2144] sm:$0xf] %v2140
  %2146 = vst [vmem:[%s2144 + $0x4] sm:$0xf] %v2141
  %s2147 = scalar_lea.vmem %s0, 384
  %v2148 = vld [vmem:[%s2147] sm:$0xff]
  %v2149 = vld [vmem:[%s2147 + $0x8] sm:$0xff]
  %v2150 = vld [vmem:[%s2147 + $0x10] sm:$0xff]
  %v2151 = vld [vmem:[%s2147 + $0x18] sm:$0xff]
  %v2152 = vld [vmem:[%s2147 + $0x20] sm:$0xff]
  %v2153 = vld [vmem:[%s2147 + $0x28] sm:$0xff]
  %v2154 = vld [vmem:[%s2147 + $0x30] sm:$0xff]
  %v2155 = vld [vmem:[%s2147 + $0x38] sm:$0xff]
  %v2156 = vld [vmem:[%s1] sm:$0xff]
  %v2157 = vld [vmem:[%s1 + $0x8] sm:$0xff]
  %v2158 = vld [vmem:[%s1 + $0x10] sm:$0xff]
  %v2159 = vld [vmem:[%s1 + $0x18] sm:$0xff]
  %v2160 = vld [vmem:[%s1 + $0x20] sm:$0xff]
  %v2161 = vld [vmem:[%s1 + $0x28] sm:$0xff]
  %v2162 = vld [vmem:[%s1 + $0x30] sm:$0xff]
  %v2163 = vld [vmem:[%s1 + $0x38] sm:$0xff]
  %v2164 = vld [vmem:[%s1 + $0x40] sm:$0xff]
  %v2165 = vld [vmem:[%s1 + $0x48] sm:$0xff]
  %v2166 = vld [vmem:[%s1 + $0x50] sm:$0xff]
  %v2167 = vld [vmem:[%s1 + $0x58] sm:$0xff]
  %v2168 = vld [vmem:[%s1 + $0x60] sm:$0xff]
  %v2169 = vld [vmem:[%s1 + $0x68] sm:$0xff]
  %v2170 = vld [vmem:[%s1 + $0x70] sm:$0xff]
  %v2171 = vld [vmem:[%s1 + $0x78] sm:$0xff]
  %v2172 = vld [vmem:[%s1 + $0x80] sm:$0xff]
  %v2173 = vld [vmem:[%s1 + $0x88] sm:$0xff]
  %v2174 = vld [vmem:[%s1 + $0x90] sm:$0xff]
  %v2175 = vld [vmem:[%s1 + $0x98] sm:$0xff]
  %v2176 = vld [vmem:[%s1 + $0xa0] sm:$0xff]
  %v2177 = vld [vmem:[%s1 + $0xa8] sm:$0xff]
  %v2178 = vld [vmem:[%s1 + $0xb0] sm:$0xff]
  %v2179 = vld [vmem:[%s1 + $0xb8] sm:$0xff]
  %v2180 = vld [vmem:[%s1 + $0xc0] sm:$0xff]
  %v2181 = vld [vmem:[%s1 + $0xc8] sm:$0xff]
  %v2182 = vld [vmem:[%s1 + $0xd0] sm:$0xff]
  %v2183 = vld [vmem:[%s1 + $0xd8] sm:$0xff]
  %v2184 = vld [vmem:[%s1 + $0xe0] sm:$0xff]
  %v2185 = vld [vmem:[%s1 + $0xe8] sm:$0xff]
  %v2186 = vld [vmem:[%s1 + $0xf0] sm:$0xff]
  %v2187 = vld [vmem:[%s1 + $0xf8] sm:$0xff]
  %v2220 = vunpack.c.l.b16 %v2156
  %v2221 = vunpack.c.h.b16 %v2156
  %v2222 = vunpack.c.l.b16 %v2157
  %v2223 = vunpack.c.h.b16 %v2157
  %v2224 = vunpack.c.l.b16 %v2158
  %v2225 = vunpack.c.h.b16 %v2158
  %v2226 = vunpack.c.l.b16 %v2159
  %v2227 = vunpack.c.h.b16 %v2159
  %v2228 = vunpack.c.l.b16 %v2160
  %v2229 = vunpack.c.h.b16 %v2160
  %v2230 = vunpack.c.l.b16 %v2161
  %v2231 = vunpack.c.h.b16 %v2161
  %v2232 = vunpack.c.l.b16 %v2162
  %v2233 = vunpack.c.h.b16 %v2162
  %v2234 = vunpack.c.l.b16 %v2163
  %v2235 = vunpack.c.h.b16 %v2163
  %v2236 = vunpack.c.l.b16 %v2164
  %v2237 = vunpack.c.h.b16 %v2164
  %v2238 = vunpack.c.l.b16 %v2165
  %v2239 = vunpack.c.h.b16 %v2165
  %v2240 = vunpack.c.l.b16 %v2166
  %v2241 = vunpack.c.h.b16 %v2166
  %v2242 = vunpack.c.l.b16 %v2167
  %v2243 = vunpack.c.h.b16 %v2167
  %v2244 = vunpack.c.l.b16 %v2168
  %v2245 = vunpack.c.h.b16 %v2168
  %v2246 = vunpack.c.l.b16 %v2169
  %v2247 = vunpack.c.h.b16 %v2169
  %v2248 = vunpack.c.l.b16 %v2170
  %v2249 = vunpack.c.h.b16 %v2170
  %v2250 = vunpack.c.l.b16 %v2171
  %v2251 = vunpack.c.h.b16 %v2171
  %v2252 = vunpack.c.l.b16 %v2172
  %v2253 = vunpack.c.h.b16 %v2172
  %v2254 = vunpack.c.l.b16 %v2173
  %v2255 = vunpack.c.h.b16 %v2173
  %v2256 = vunpack.c.l.b16 %v2174
  %v2257 = vunpack.c.h.b16 %v2174
  %v2258 = vunpack.c.l.b16 %v2175
  %v2259 = vunpack.c.h.b16 %v2175
  %v2260 = vunpack.c.l.b16 %v2176
  %v2261 = vunpack.c.h.b16 %v2176
  %v2262 = vunpack.c.l.b16 %v2177
  %v2263 = vunpack.c.h.b16 %v2177
  %v2264 = vunpack.c.l.b16 %v2178
  %v2265 = vunpack.c.h.b16 %v2178
  %v2266 = vunpack.c.l.b16 %v2179
  %v2267 = vunpack.c.h.b16 %v2179
  %v2268 = vunpack.c.l.b16 %v2180
  %v2269 = vunpack.c.h.b16 %v2180
  %v2270 = vunpack.c.l.b16 %v2181
  %v2271 = vunpack.c.h.b16 %v2181
  %v2272 = vunpack.c.l.b16 %v2182
  %v2273 = vunpack.c.h.b16 %v2182
  %v2274 = vunpack.c.l.b16 %v2183
  %v2275 = vunpack.c.h.b16 %v2183
  %v2276 = vunpack.c.l.b16 %v2184
  %v2277 = vunpack.c.h.b16 %v2184
  %v2278 = vunpack.c.l.b16 %v2185
  %v2279 = vunpack.c.h.b16 %v2185
  %v2280 = vunpack.c.l.b16 %v2186
  %v2281 = vunpack.c.h.b16 %v2186
  %v2282 = vunpack.c.l.b16 %v2187
  %v2283 = vunpack.c.h.b16 %v2187
  %v2284 = vpack.c.b16 %v2224, %v2220
  %v2285 = vpack.c.b16 %v2225, %v2221
  %v2286 = vpack.c.b16 %v2226, %v2222
  %v2287 = vpack.c.b16 %v2227, %v2223
  %v2288 = vpack.c.b16 %v2232, %v2228
  %v2289 = vpack.c.b16 %v2233, %v2229
  %v2290 = vpack.c.b16 %v2234, %v2230
  %v2291 = vpack.c.b16 %v2235, %v2231
  %v2292 = vpack.c.b16 %v2240, %v2236
  %v2293 = vpack.c.b16 %v2241, %v2237
  %v2294 = vpack.c.b16 %v2242, %v2238
  %v2295 = vpack.c.b16 %v2243, %v2239
  %v2296 = vpack.c.b16 %v2248, %v2244
  %v2297 = vpack.c.b16 %v2249, %v2245
  %v2298 = vpack.c.b16 %v2250, %v2246
  %v2299 = vpack.c.b16 %v2251, %v2247
  %v2300 = vpack.c.b16 %v2256, %v2252
  %v2301 = vpack.c.b16 %v2257, %v2253
  %v2302 = vpack.c.b16 %v2258, %v2254
  %v2303 = vpack.c.b16 %v2259, %v2255
  %v2304 = vpack.c.b16 %v2264, %v2260
  %v2305 = vpack.c.b16 %v2265, %v2261
  %v2306 = vpack.c.b16 %v2266, %v2262
  %v2307 = vpack.c.b16 %v2267, %v2263
  %v2308 = vpack.c.b16 %v2272, %v2268
  %v2309 = vpack.c.b16 %v2273, %v2269
  %v2310 = vpack.c.b16 %v2274, %v2270
  %v2311 = vpack.c.b16 %v2275, %v2271
  %v2312 = vpack.c.b16 %v2280, %v2276
  %v2313 = vpack.c.b16 %v2281, %v2277
  %v2314 = vpack.c.b16 %v2282, %v2278
  %v2315 = vpack.c.b16 %v2283, %v2279
  %2348 = vmatprep.subr.bf16.mxu0 %v2285
  %2349 = vmatpush1.bf16.msra.mxu0 %v2284
  %2350 = vmatprep.subr.bf16.mxu0 %v2289
  %2351 = vmatpush1.bf16.msra.mxu0 %v2288
  %2352 = vmatprep.subr.bf16.mxu0 %v2293
  %2353 = vmatpush1.bf16.msra.mxu0 %v2292
  %2354 = vmatprep.subr.bf16.mxu0 %v2297
  %2355 = vmatpush1.bf16.msra.mxu0 %v2296
  %2356 = vmatprep.subr.bf16.mxu0 %v2301
  %2357 = vmatpush1.bf16.msra.mxu0 %v2300
  %2358 = vmatprep.subr.bf16.mxu0 %v2305
  %2359 = vmatpush1.bf16.msra.mxu0 %v2304
  %2360 = vmatprep.subr.bf16.mxu0 %v2309
  %2361 = vmatpush1.bf16.msra.mxu0 %v2308
  %2362 = vmatprep.subr.bf16.mxu0 %v2313
  %2363 = vmatpush1.bf16.msra.mxu0 %v2312
  %2364 = vmatprep.subr.bf16.mxu0 0
  %2365 = vmatpush1.bf16.msra.mxu0 0
  %2366 = vmatprep.subr.bf16.mxu0 0
  %2367 = vmatpush1.bf16.msra.mxu0 0
  %2368 = vmatprep.subr.bf16.mxu0 0
  %2369 = vmatpush1.bf16.msra.mxu0 0
  %2370 = vmatprep.subr.bf16.mxu0 0
  %2371 = vmatpush1.bf16.msra.mxu0 0
  %2372 = vmatprep.subr.bf16.mxu0 0
  %2373 = vmatpush1.bf16.msra.mxu0 0
  %2374 = vmatprep.subr.bf16.mxu0 0
  %2375 = vmatpush1.bf16.msra.mxu0 0
  %2376 = vmatprep.subr.bf16.mxu0 0
  %2377 = vmatpush1.bf16.msra.mxu0 0
  %2378 = vmatprep.subr.bf16.mxu0 0
  %2379 = vmatpush1.bf16.msra.mxu0 0
  %2380 = vmatprep.mubr.bf16.mxu0 0
  %2381 = vmatmul.mubr.bf16.gmra.mrb[0].mxu0 %v2136
  %v2382 = vpop.f32.mrb[0].mxu0
  %v2383 = vadd.f32 0.0, %v2382
  %v2384 = vpop.f32.mrb[0].mxu0
  %v2385 = vadd.f32 0.0, %v2384
  %v2386 = vpop.f32.mrb[0].mxu0
  %v2387 = vadd.f32 0.0, %v2386
  %v2388 = vpop.f32.mrb[0].mxu0
  %v2389 = vadd.f32 0.0, %v2388
  %2390 = vdwg.mxu0
  %2391 = vmatprep.subr.bf16.mxu0 %v2287
  %2392 = vmatpush1.bf16.msra.mxu0 %v2286
  %2393 = vmatprep.subr.bf16.mxu0 %v2291
  %2394 = vmatpush1.bf16.msra.mxu0 %v2290
  %2395 = vmatprep.subr.bf16.mxu0 %v2295
  %2396 = vmatpush1.bf16.msra.mxu0 %v2294
  %2397 = vmatprep.subr.bf16.mxu0 %v2299
  %2398 = vmatpush1.bf16.msra.mxu0 %v2298
  %2399 = vmatprep.subr.bf16.mxu0 %v2303
  %2400 = vmatpush1.bf16.msra.mxu0 %v2302
  %2401 = vmatprep.subr.bf16.mxu0 %v2307
  %2402 = vmatpush1.bf16.msra.mxu0 %v2306
  %2403 = vmatprep.subr.bf16.mxu0 %v2311
  %2404 = vmatpush1.bf16.msra.mxu0 %v2310
  %2405 = vmatprep.subr.bf16.mxu0 %v2315
  %2406 = vmatpush1.bf16.msra.mxu0 %v2314
  %2407 = vmatprep.subr.bf16.mxu0 0
  %2408 = vmatpush1.bf16.msra.mxu0 0
  %2409 = vmatprep.subr.bf16.mxu0 0
  %2410 = vmatpush1.bf16.msra.mxu0 0
  %2411 = vmatprep.subr.bf16.mxu0 0
  %2412 = vmatpush1.bf16.msra.mxu0 0
  %2413 = vmatprep.subr.bf16.mxu0 0
  %2414 = vmatpush1.bf16.msra.mxu0 0
  %2415 = vmatprep.subr.bf16.mxu0 0
  %2416 = vmatpush1.bf16.msra.mxu0 0
  %2417 = vmatprep.subr.bf16.mxu0 0
  %2418 = vmatpush1.bf16.msra.mxu0 0
  %2419 = vmatprep.subr.bf16.mxu0 0
  %2420 = vmatpush1.bf16.msra.mxu0 0
  %2421 = vmatprep.subr.bf16.mxu0 0
  %2422 = vmatpush1.bf16.msra.mxu0 0
  %2423 = vmatprep.mubr.bf16.mxu0 0
  %2424 = vmatmul.mubr.bf16.gmra.mrb[0].mxu0 %v2136
  %v2425 = vpop.f32.mrb[0].mxu0
  %v2426 = vadd.f32 0.0, %v2425
  %v2427 = vpop.f32.mrb[0].mxu0
  %v2428 = vadd.f32 0.0, %v2427
  %v2429 = vpop.f32.mrb[0].mxu0
  %v2430 = vadd.f32 0.0, %v2429
  %v2431 = vpop.f32.mrb[0].mxu0
  %v2432 = vadd.f32 0.0, %v2431
  %2433 = vdwg.mxu0
  %v2434 = vadd.f32 %v2148, %v2383
  %v2435 = vadd.f32 %v2149, %v2385
  %v2436 = vadd.f32 %v2150, %v2426
  %v2437 = vadd.f32 %v2151, %v2428
  %v2438 = vadd.f32 %v2152, %v2387
  %v2439 = vadd.f32 %v2153, %v2389
  %v2440 = vadd.f32 %v2154, %v2430
  %v2441 = vadd.f32 %v2155, %v2432
  %v2442 = vxor.u32 %v2434, 2147483648
  %v2443 = vxor.u32 %v2438, 2147483648
  %v2444 = vmul.f32 %v2442, 1.442695
  %v2445 = vpow.pop %v2444
  %v2446 = vmul.f32 %v2443, 1.442695
  %v2447 = vpow.pop %v2446
  %v2448 = vadd.f32 %v2445, 1.0
  %v2449 = vadd.f32 %v2447, 1.0
  %v2450 = vrcp.pop %v2448
  %v2451 = vmul.f32 1.0, %v2450
  %v2452 = vrcp.pop %v2449
  %v2453 = vmul.f32 1.0, %v2452
  %v2454 = vxor.u32 %v2435, 2147483648
  %v2455 = vxor.u32 %v2439, 2147483648
  %v2456 = vmul.f32 %v2454, 1.442695
  %v2457 = vpow.pop %v2456
  %v2458 = vmul.f32 %v2455, 1.442695
  %v2459 = vpow.pop %v2458
  %v2460 = vadd.f32 %v2457, 1.0
  %v2461 = vadd.f32 %v2459, 1.0
  %v2462 = vrcp.pop %v2460
  %v2463 = vmul.f32 1.0, %v2462
  %v2464 = vrcp.pop %v2461
  %v2465 = vmul.f32 1.0, %v2464
  %v2466 = vtanh.pop %v2436
  %v2467 = vtanh.pop %v2440
  %v2468 = vxor.u32 %v2437, 2147483648
  %v2469 = vxor.u32 %v2441, 2147483648
  %v2470 = vmul.f32 %v2468, 1.442695
  %v2471 = vpow.pop %v2470
  %v2472 = vmul.f32 %v2469, 1.442695
  %v2473 = vpow.pop %v2472
  %v2474 = vadd.f32 %v2471, 1.0
  %v2475 = vadd.f32 %v2473, 1.0
  %v2476 = vrcp.pop %v2474
  %v2477 = vmul.f32 1.0, %v2476
  %v2478 = vrcp.pop %v2475
  %v2479 = vmul.f32 1.0, %v2478
  %v2480 = vmul.f32 %v2463, %v2130
  %v2481 = vmul.f32 %v2465, %v2131
  %v2482 = vmul.f32 %v2451, %v2466
  %v2483 = vmul.f32 %v2453, %v2467
  %v2484 = vadd.f32 %v2480, %v2482
  %v2485 = vadd.f32 %v2481, %v2483
  %v2486 = vtanh.pop %v2484
  %v2487 = vtanh.pop %v2485
  %v2488 = vmul.f32 %v2477, %v2486
  %v2489 = vmul.f32 %v2479, %v2487
  %v2490 = vpack.c.bf16 %v2489, %v2488
  %v2492 = vunpack.c.l.b16 %v2490
  %v2493 = vunpack.c.h.b16 %v2490
  %v2494 = vpack.c.b16 %v2492, %v2492
  %v2495 = vpack.c.b16 %v2493, %v2493
  %s2498 = scalar_lea.vmem %s2, 48
  %2499 = vst [vmem:[%s2498] sm:$0xf] %v2494
  %2500 = vst [vmem:[%s2498 + $0x4] sm:$0xf] %v2495
  %s2501 = scalar_lea.vmem %s0, 448
  %v2502 = vld [vmem:[%s2501] sm:$0xff]
  %v2503 = vld [vmem:[%s2501 + $0x8] sm:$0xff]
  %v2504 = vld [vmem:[%s2501 + $0x10] sm:$0xff]
  %v2505 = vld [vmem:[%s2501 + $0x18] sm:$0xff]
  %v2506 = vld [vmem:[%s2501 + $0x20] sm:$0xff]
  %v2507 = vld [vmem:[%s2501 + $0x28] sm:$0xff]
  %v2508 = vld [vmem:[%s2501 + $0x30] sm:$0xff]
  %v2509 = vld [vmem:[%s2501 + $0x38] sm:$0xff]
  %v2510 = vld [vmem:[%s1] sm:$0xff]
  %v2511 = vld [vmem:[%s1 + $0x8] sm:$0xff]
  %v2512 = vld [vmem:[%s1 + $0x10] sm:$0xff]
  %v2513 = vld [vmem:[%s1 + $0x18] sm:$0xff]
  %v2514 = vld [vmem:[%s1 + $0x20] sm:$0xff]
  %v2515 = vld [vmem:[%s1 + $0x28] sm:$0xff]
  %v2516 = vld [vmem:[%s1 + $0x30] sm:$0xff]
  %v2517 = vld [vmem:[%s1 + $0x38] sm:$0xff]
  %v2518 = vld [vmem:[%s1 + $0x40] sm:$0xff]
  %v2519 = vld [vmem:[%s1 + $0x48] sm:$0xff]
  %v2520 = vld [vmem:[%s1 + $0x50] sm:$0xff]
  %v2521 = vld [vmem:[%s1 + $0x58] sm:$0xff]
  %v2522 = vld [vmem:[%s1 + $0x60] sm:$0xff]
  %v2523 = vld [vmem:[%s1 + $0x68] sm:$0xff]
  %v2524 = vld [vmem:[%s1 + $0x70] sm:$0xff]
  %v2525 = vld [vmem:[%s1 + $0x78] sm:$0xff]
  %v2526 = vld [vmem:[%s1 + $0x80] sm:$0xff]
  %v2527 = vld [vmem:[%s1 + $0x88] sm:$0xff]
  %v2528 = vld [vmem:[%s1 + $0x90] sm:$0xff]
  %v2529 = vld [vmem:[%s1 + $0x98] sm:$0xff]
  %v2530 = vld [vmem:[%s1 + $0xa0] sm:$0xff]
  %v2531 = vld [vmem:[%s1 + $0xa8] sm:$0xff]
  %v2532 = vld [vmem:[%s1 + $0xb0] sm:$0xff]
  %v2533 = vld [vmem:[%s1 + $0xb8] sm:$0xff]
  %v2534 = vld [vmem:[%s1 + $0xc0] sm:$0xff]
  %v2535 = vld [vmem:[%s1 + $0xc8] sm:$0xff]
  %v2536 = vld [vmem:[%s1 + $0xd0] sm:$0xff]
  %v2537 = vld [vmem:[%s1 + $0xd8] sm:$0xff]
  %v2538 = vld [vmem:[%s1 + $0xe0] sm:$0xff]
  %v2539 = vld [vmem:[%s1 + $0xe8] sm:$0xff]
  %v2540 = vld [vmem:[%s1 + $0xf0] sm:$0xff]
  %v2541 = vld [vmem:[%s1 + $0xf8] sm:$0xff]
  %v2574 = vunpack.c.l.b16 %v2510
  %v2575 = vunpack.c.h.b16 %v2510
  %v2576 = vunpack.c.l.b16 %v2511
  %v2577 = vunpack.c.h.b16 %v2511
  %v2578 = vunpack.c.l.b16 %v2512
  %v2579 = vunpack.c.h.b16 %v2512
  %v2580 = vunpack.c.l.b16 %v2513
  %v2581 = vunpack.c.h.b16 %v2513
  %v2582 = vunpack.c.l.b16 %v2514
  %v2583 = vunpack.c.h.b16 %v2514
  %v2584 = vunpack.c.l.b16 %v2515
  %v2585 = vunpack.c.h.b16 %v2515
  %v2586 = vunpack.c.l.b16 %v2516
  %v2587 = vunpack.c.h.b16 %v2516
  %v2588 = vunpack.c.l.b16 %v2517
  %v2589 = vunpack.c.h.b16 %v2517
  %v2590 = vunpack.c.l.b16 %v2518
  %v2591 = vunpack.c.h.b16 %v2518
  %v2592 = vunpack.c.l.b16 %v2519
  %v2593 = vunpack.c.h.b16 %v2519
  %v2594 = vunpack.c.l.b16 %v2520
  %v2595 = vunpack.c.h.b16 %v2520
  %v2596 = vunpack.c.l.b16 %v2521
  %v2597 = vunpack.c.h.b16 %v2521
  %v2598 = vunpack.c.l.b16 %v2522
  %v2599 = vunpack.c.h.b16 %v2522
  %v2600 = vunpack.c.l.b16 %v2523
  %v2601 = vunpack.c.h.b16 %v2523
  %v2602 = vunpack.c.l.b16 %v2524
  %v2603 = vunpack.c.h.b16 %v2524
  %v2604 = vunpack.c.l.b16 %v2525
  %v2605 = vunpack.c.h.b16 %v2525
  %v2606 = vunpack.c.l.b16 %v2526
  %v2607 = vunpack.c.h.b16 %v2526
  %v2608 = vunpack.c.l.b16 %v2527
  %v2609 = vunpack.c.h.b16 %v2527
  %v2610 = vunpack.c.l.b16 %v2528
  %v2611 = vunpack.c.h.b16 %v2528
  %v2612 = vunpack.c.l.b16 %v2529
  %v2613 = vunpack.c.h.b16 %v2529
  %v2614 = vunpack.c.l.b16 %v2530
  %v2615 = vunpack.c.h.b16 %v2530
  %v2616 = vunpack.c.l.b16 %v2531
  %v2617 = vunpack.c.h.b16 %v2531
  %v2618 = vunpack.c.l.b16 %v2532
  %v2619 = vunpack.c.h.b16 %v2532
  %v2620 = vunpack.c.l.b16 %v2533
  %v2621 = vunpack.c.h.b16 %v2533
  %v2622 = vunpack.c.l.b16 %v2534
  %v2623 = vunpack.c.h.b16 %v2534
  %v2624 = vunpack.c.l.b16 %v2535
  %v2625 = vunpack.c.h.b16 %v2535
  %v2626 = vunpack.c.l.b16 %v2536
  %v2627 = vunpack.c.h.b16 %v2536
  %v2628 = vunpack.c.l.b16 %v2537
  %v2629 = vunpack.c.h.b16 %v2537
  %v2630 = vunpack.c.l.b16 %v2538
  %v2631 = vunpack.c.h.b16 %v2538
  %v2632 = vunpack.c.l.b16 %v2539
  %v2633 = vunpack.c.h.b16 %v2539
  %v2634 = vunpack.c.l.b16 %v2540
  %v2635 = vunpack.c.h.b16 %v2540
  %v2636 = vunpack.c.l.b16 %v2541
  %v2637 = vunpack.c.h.b16 %v2541
  %v2638 = vpack.c.b16 %v2578, %v2574
  %v2639 = vpack.c.b16 %v2579, %v2575
  %v2640 = vpack.c.b16 %v2580, %v2576
  %v2641 = vpack.c.b16 %v2581, %v2577
  %v2642 = vpack.c.b16 %v2586, %v2582
  %v2643 = vpack.c.b16 %v2587, %v2583
  %v2644 = vpack.c.b16 %v2588, %v2584
  %v2645 = vpack.c.b16 %v2589, %v2585
  %v2646 = vpack.c.b16 %v2594, %v2590
  %v2647 = vpack.c.b16 %v2595, %v2591
  %v2648 = vpack.c.b16 %v2596, %v2592
  %v2649 = vpack.c.b16 %v2597, %v2593
  %v2650 = vpack.c.b16 %v2602, %v2598
  %v2651 = vpack.c.b16 %v2603, %v2599
  %v2652 = vpack.c.b16 %v2604, %v2600
  %v2653 = vpack.c.b16 %v2605, %v2601
  %v2654 = vpack.c.b16 %v2610, %v2606
  %v2655 = vpack.c.b16 %v2611, %v2607
  %v2656 = vpack.c.b16 %v2612, %v2608
  %v2657 = vpack.c.b16 %v2613, %v2609
  %v2658 = vpack.c.b16 %v2618, %v2614
  %v2659 = vpack.c.b16 %v2619, %v2615
  %v2660 = vpack.c.b16 %v2620, %v2616
  %v2661 = vpack.c.b16 %v2621, %v2617
  %v2662 = vpack.c.b16 %v2626, %v2622
  %v2663 = vpack.c.b16 %v2627, %v2623
  %v2664 = vpack.c.b16 %v2628, %v2624
  %v2665 = vpack.c.b16 %v2629, %v2625
  %v2666 = vpack.c.b16 %v2634, %v2630
  %v2667 = vpack.c.b16 %v2635, %v2631
  %v2668 = vpack.c.b16 %v2636, %v2632
  %v2669 = vpack.c.b16 %v2637, %v2633
  %2702 = vmatprep.subr.bf16.mxu0 %v2639
  %2703 = vmatpush1.bf16.msra.mxu0 %v2638
  %2704 = vmatprep.subr.bf16.mxu0 %v2643
  %2705 = vmatpush1.bf16.msra.mxu0 %v2642
  %2706 = vmatprep.subr.bf16.mxu0 %v2647
  %2707 = vmatpush1.bf16.msra.mxu0 %v2646
  %2708 = vmatprep.subr.bf16.mxu0 %v2651
  %2709 = vmatpush1.bf16.msra.mxu0 %v2650
  %2710 = vmatprep.subr.bf16.mxu0 %v2655
  %2711 = vmatpush1.bf16.msra.mxu0 %v2654
  %2712 = vmatprep.subr.bf16.mxu0 %v2659
  %2713 = vmatpush1.bf16.msra.mxu0 %v2658
  %2714 = vmatprep.subr.bf16.mxu0 %v2663
  %2715 = vmatpush1.bf16.msra.mxu0 %v2662
  %2716 = vmatprep.subr.bf16.mxu0 %v2667
  %2717 = vmatpush1.bf16.msra.mxu0 %v2666
  %2718 = vmatprep.subr.bf16.mxu0 0
  %2719 = vmatpush1.bf16.msra.mxu0 0
  %2720 = vmatprep.subr.bf16.mxu0 0
  %2721 = vmatpush1.bf16.msra.mxu0 0
  %2722 = vmatprep.subr.bf16.mxu0 0
  %2723 = vmatpush1.bf16.msra.mxu0 0
  %2724 = vmatprep.subr.bf16.mxu0 0
  %2725 = vmatpush1.bf16.msra.mxu0 0
  %2726 = vmatprep.subr.bf16.mxu0 0
  %2727 = vmatpush1.bf16.msra.mxu0 0
  %2728 = vmatprep.subr.bf16.mxu0 0
  %2729 = vmatpush1.bf16.msra.mxu0 0
  %2730 = vmatprep.subr.bf16.mxu0 0
  %2731 = vmatpush1.bf16.msra.mxu0 0
  %2732 = vmatprep.subr.bf16.mxu0 0
  %2733 = vmatpush1.bf16.msra.mxu0 0
  %2734 = vmatprep.mubr.bf16.mxu0 0
  %2735 = vmatmul.mubr.bf16.gmra.mrb[0].mxu0 %v2490
  %v2736 = vpop.f32.mrb[0].mxu0
  %v2737 = vadd.f32 0.0, %v2736
  %v2738 = vpop.f32.mrb[0].mxu0
  %v2739 = vadd.f32 0.0, %v2738
  %v2740 = vpop.f32.mrb[0].mxu0
  %v2741 = vadd.f32 0.0, %v2740
  %v2742 = vpop.f32.mrb[0].mxu0
  %v2743 = vadd.f32 0.0, %v2742
  %2744 = vdwg.mxu0
  %2745 = vmatprep.subr.bf16.mxu0 %v2641
  %2746 = vmatpush1.bf16.msra.mxu0 %v2640
  %2747 = vmatprep.subr.bf16.mxu0 %v2645
  %2748 = vmatpush1.bf16.msra.mxu0 %v2644
  %2749 = vmatprep.subr.bf16.mxu0 %v2649
  %2750 = vmatpush1.bf16.msra.mxu0 %v2648
  %2751 = vmatprep.subr.bf16.mxu0 %v2653
  %2752 = vmatpush1.bf16.msra.mxu0 %v2652
  %2753 = vmatprep.subr.bf16.mxu0 %v2657
  %2754 = vmatpush1.bf16.msra.mxu0 %v2656
  %2755 = vmatprep.subr.bf16.mxu0 %v2661
  %2756 = vmatpush1.bf16.msra.mxu0 %v2660
  %2757 = vmatprep.subr.bf16.mxu0 %v2665
  %2758 = vmatpush1.bf16.msra.mxu0 %v2664
  %2759 = vmatprep.subr.bf16.mxu0 %v2669
  %2760 = vmatpush1.bf16.msra.mxu0 %v2668
  %2761 = vmatprep.subr.bf16.mxu0 0
  %2762 = vmatpush1.bf16.msra.mxu0 0
  %2763 = vmatprep.subr.bf16.mxu0 0
  %2764 = vmatpush1.bf16.msra.mxu0 0
  %2765 = vmatprep.subr.bf16.mxu0 0
  %2766 = vmatpush1.bf16.msra.mxu0 0
  %2767 = vmatprep.subr.bf16.mxu0 0
  %2768 = vmatpush1.bf16.msra.mxu0 0
  %2769 = vmatprep.subr.bf16.mxu0 0
  %2770 = vmatpush1.bf16.msra.mxu0 0
  %2771 = vmatprep.subr.bf16.mxu0 0
  %2772 = vmatpush1.bf16.msra.mxu0 0
  %2773 = vmatprep.subr.bf16.mxu0 0
  %2774 = vmatpush1.bf16.msra.mxu0 0
  %2775 = vmatprep.subr.bf16.mxu0 0
  %2776 = vmatpush1.bf16.msra.mxu0 0
  %2777 = vmatprep.mubr.bf16.mxu0 0
  %2778 = vmatmul.mubr.bf16.gmra.mrb[0].mxu0 %v2490
  %v2779 = vpop.f32.mrb[0].mxu0
  %v2780 = vadd.f32 0.0, %v2779
  %v2781 = vpop.f32.mrb[0].mxu0
  %v2782 = vadd.f32 0.0, %v2781
  %v2783 = vpop.f32.mrb[0].mxu0
  %v2784 = vadd.f32 0.0, %v2783
  %v2785 = vpop.f32.mrb[0].mxu0
  %v2786 = vadd.f32 0.0, %v2785
  %2787 = vdwg.mxu0
  %v2788 = vadd.f32 %v2502, %v2737
  %v2789 = vadd.f32 %v2503, %v2739
  %v2790 = vadd.f32 %v2504, %v2780
  %v2791 = vadd.f32 %v2505, %v2782
  %v2792 = vadd.f32 %v2506, %v2741
  %v2793 = vadd.f32 %v2507, %v2743
  %v2794 = vadd.f32 %v2508, %v2784
  %v2795 = vadd.f32 %v2509, %v2786
  %v2796 = vxor.u32 %v2788, 2147483648
  %v2797 = vxor.u32 %v2792, 2147483648
  %v2798 = vmul.f32 %v2796, 1.442695
  %v2799 = vpow.pop %v2798
  %v2800 = vmul.f32 %v2797, 1.442695
  %v2801 = vpow.pop %v2800
  %v2802 = vadd.f32 %v2799, 1.0
  %v2803 = vadd.f32 %v2801, 1.0
  %v2804 = vrcp.pop %v2802
  %v2805 = vmul.f32 1.0, %v2804
  %v2806 = vrcp.pop %v2803
  %v2807 = vmul.f32 1.0, %v2806
  %v2808 = vxor.u32 %v2789, 2147483648
  %v2809 = vxor.u32 %v2793, 2147483648
  %v2810 = vmul.f32 %v2808, 1.442695
  %v2811 = vpow.pop %v2810
  %v2812 = vmul.f32 %v2809, 1.442695
  %v2813 = vpow.pop %v2812
  %v2814 = vadd.f32 %v2811, 1.0
  %v2815 = vadd.f32 %v2813, 1.0
  %v2816 = vrcp.pop %v2814
  %v2817 = vmul.f32 1.0, %v2816
  %v2818 = vrcp.pop %v2815
  %v2819 = vmul.f32 1.0, %v2818
  %v2820 = vtanh.pop %v2790
  %v2821 = vtanh.pop %v2794
  %v2822 = vxor.u32 %v2791, 2147483648
  %v2823 = vxor.u32 %v2795, 2147483648
  %v2824 = vmul.f32 %v2822, 1.442695
  %v2825 = vpow.pop %v2824
  %v2826 = vmul.f32 %v2823, 1.442695
  %v2827 = vpow.pop %v2826
  %v2828 = vadd.f32 %v2825, 1.0
  %v2829 = vadd.f32 %v2827, 1.0
  %v2830 = vrcp.pop %v2828
  %v2831 = vmul.f32 1.0, %v2830
  %v2832 = vrcp.pop %v2829
  %v2833 = vmul.f32 1.0, %v2832
  %v2834 = vmul.f32 %v2817, %v2484
  %v2835 = vmul.f32 %v2819, %v2485
  %v2836 = vmul.f32 %v2805, %v2820
  %v2837 = vmul.f32 %v2807, %v2821
  %v2838 = vadd.f32 %v2834, %v2836
  %v2839 = vadd.f32 %v2835, %v2837
  %v2840 = vtanh.pop %v2838
  %v2841 = vtanh.pop %v2839
  %v2842 = vmul.f32 %v2831, %v2840
  %v2843 = vmul.f32 %v2833, %v2841
  %v2844 = vpack.c.bf16 %v2843, %v2842
  %v2846 = vunpack.c.l.b16 %v2844
  %v2847 = vunpack.c.h.b16 %v2844
  %v2848 = vpack.c.b16 %v2846, %v2846
  %v2849 = vpack.c.b16 %v2847, %v2847
  %s2852 = scalar_lea.vmem %s2, 56
  %2853 = vst [vmem:[%s2852] sm:$0xf] %v2848
  %2854 = vst [vmem:[%s2852 + $0x4] sm:$0xf] %v2849
  %2855 = vst [vmem:[#allocation2] sm:$0xff] %v2842
  %2856 = vst [vmem:[#allocation2 + $0x8] sm:$0xff] %v2843
  %2857 = vst [vmem:[#allocation3] sm:$0xff] %v2838
  %2858 = vst [vmem:[#allocation3 + $0x8] sm:$0xff] %v2839
  // Predicated region
  $region14: #{deep_lstm_forward.5} parent=0 // pred_check
    _
  $region15: #{deep_lstm_forward.5} parent=0 // pred_check_branch
    %2860 = sbr.rel (0) target = $region17
  $region16: #{deep_lstm_forward.5} parent=0 // pred_region
    _
  $region17: #{deep_lstm_forward.5} parent=0 // pred_fallthru
    _
  // Predicated region
  $region18: #{deep_lstm_forward.5} parent=0 // pred_check
    _
  $region19: #{deep_lstm_forward.5} parent=0 // pred_check_branch
    %2862 = sbr.rel (0) target = $region21
  $region20: #{deep_lstm_forward.5} parent=0 // pred_region
    _
  $region21: #{deep_lstm_forward.5} parent=0 // pred_fallthru
    _

</llo_original>
